<compile_context>
chip_gen: v5e
topology: v5e:2x2
jax: 0.10.0
libtpu: 0.0.40
codegen_flags: <defaults>
</compile_context>

<pallas_src>
import functools

import jax
import jax.numpy as jnp
import numpy as np
from jax.experimental import pallas as pl
from jax.experimental.pallas import tpu as pltpu


def mps_kernel(x_ref, c0_ref, dlt_ref, lab_ref, out_ref, rl_ref, *,
               label_site, site_chunk):
    # x_ref:   (TB, size)      batch tile of pixels
    # c0_ref:  (size, D, D)    base_cores[..., 0]
    # dlt_ref: (size, D, D)    base_cores[..., 1] - base_cores[..., 0]
    # lab_ref: (D, D, O)       lab[k, j, o] = label_core[j, k, o]
    # out_ref: (TB, O)
    # rl_ref:  (TB, D, D)      VMEM scratch for right @ left
    tb, size = x_ref.shape
    D = c0_ref.shape[-1]
    O = lab_ref.shape[-1]
    f32 = jnp.float32

    def bmm(a, b):
        # f32 operands, f32 accumulation (D=20 matmuls are latency-bound on the
        # MXU of every generation, so narrower operand dtypes buy nothing).
        return jnp.einsum('bij,bjk->bik', a, b, preferred_element_type=f32)

    def identity_batch():
        eye = (jax.lax.broadcasted_iota(jnp.int32, (D, D), 0)
               == jax.lax.broadcasted_iota(jnp.int32, (D, D), 1)).astype(f32)
        return jnp.broadcast_to(eye[None], (tb, D, D))

    def chunk_mats(s0, n):
        # base_mats for sites [s0, s0+n):  c0[s] + x[b, s] * (c1[s] - c0[s]).
        # Static ref slices only; slab is (tb, n, D, D) with n <= site_chunk.
        xs = x_ref[:, s0:s0 + n]                                   # (tb, n)
        c0 = c0_ref[s0:s0 + n]                                     # (n, D, D)
        dl = dlt_ref[s0:s0 + n]                                    # (n, D, D)
        return c0[None] + xs[:, :, None, None] * dl[None]          # (tb, n, D, D)

    def tree_prod(mats, n):
        # Ordered product mats[:, 0] @ ... @ mats[:, n-1] via a pairwise tree.
        # Odd leftovers are carried in a 'tail' and multiplied in at the end
        # (no per-level concatenate copies).  Reshapes touch leading dims only.
        tail = None
        while n > 1:
            if n % 2:
                lone = mats[:, n - 1]                              # (tb, D, D)
                tail = lone if tail is None else bmm(lone, tail)
                n -= 1
            half = n // 2
            pairs = mats[:, :n].reshape(tb, half, 2, D, D)
            prod = bmm(pairs[:, :, 0].reshape(tb * half, D, D),
                       pairs[:, :, 1].reshape(tb * half, D, D))
            mats = prod.reshape(tb, half, D, D)
            n = half
        res = mats[:, 0]
        return res if tail is None else bmm(res, tail)

    def chain_prod(start, length):
        # Ordered product over sites [start, start+length), built chunk-by-chunk
        # so VMEM stays bounded in `size`; running product carried across chunks.
        if length == 0:
            return identity_batch()
        acc = None
        s0 = start
        while s0 < start + length:
            n = min(site_chunk, start + length - s0)
            p = tree_prod(chunk_mats(s0, n), n)
            acc = p if acc is None else bmm(acc, p)
            s0 += n
        return acc

    left = chain_prod(0, label_site)                               # (tb, D, D)
    right = chain_prod(label_site, size - label_site)              # (tb, D, D)

    # out[b, o] = trace(left @ C_o @ right) = sum_{k,j} (right@left)[k, j] * C_o[j, k]
    # Stage right@left through VMEM scratch, then contract against the permuted
    # label core with D small MXU matmuls (no (tb, O, D, D) blob, no XLU reduce).
    rl_ref[...] = bmm(right, left)                                 # (tb, D, D)
    acc = jnp.zeros((tb, O), f32)
    for k in range(D):
        acc = acc + jnp.dot(rl_ref[:, k, :], lab_ref[k],           # (tb,D)@(D,O)
                            preferred_element_type=f32)
    out_ref[...] = acc


def _round_up(v, m):
    return (v + m - 1) // m * m


def mps_forward(x, base_cores, label_core, label_site, *,
                site_chunk=32, vmem_budget_bytes=24 * 2**20):
    B, size = x.shape
    D = base_cores.shape[1]
    O = label_core.shape[2]
    ch = max(1, min(site_chunk, size))

    # --- VMEM accounting: a padded f32 (D, D) tile is (ceil(D/8)*8) x 128 words ---
    mat_pad = _round_up(D, 8) * _round_up(D, 128) * 4
    lab_pad = D * _round_up(D, 8) * _round_up(O, 128) * 4
    # grid-resident cost (double-buffered cores + label block)
    resident = 2 * (2 * size * mat_pad) + 2 * lab_pad
    # per-batch-row cost: chunk slab + tree intermediates (~1.5x) + (D,D) carries
    # (left/right/acc/rl scratch) + x/out rows (double-buffered)
    per_row = (int(2.5 * ch * mat_pad) + 8 * mat_pad
               + 2 * _round_up(size, 128) * 4 + 2 * _round_up(O, 128) * 4)
    avail = max(vmem_budget_bytes - resident, 8 * per_row)
    tb_cap = max(8, min(512, (avail // per_row) // 8 * 8))

    # --- batch tiling: derived tile, zero-pad B, keep grid >= 2 steps when possible
    b8 = _round_up(B, 8)
    tb = min(tb_cap, b8)
    if b8 // tb < 2 and b8 >= 16:
        tb = max(8, _round_up(-(-b8 // 2), 8))
    b_pad = _round_up(B, tb)
    grid = b_pad // tb

    est_vmem = resident + tb * per_row
    vmem_limit = int(min(max(est_vmem * 3 // 2, 32 * 2**20), 100 * 2**20))

    # Glue below is layout plumbing only (no compute hoisted out of the kernel,
    # except the per-site delta = c1 - c0 which is grid-invariant).
    x_f32 = x.astype(jnp.float32)
    if b_pad != B:
        x_f32 = jnp.concatenate(
            [x_f32, jnp.zeros((b_pad - B, size), jnp.float32)], axis=0)
    c0 = base_cores[..., 0].astype(jnp.float32)                          # (size, D, D)
    delta = (base_cores[..., 1] - base_cores[..., 0]).astype(jnp.float32)
    lab_kjo = jnp.transpose(label_core, (1, 0, 2)).astype(jnp.float32)   # (D, D, O)

    kernel = functools.partial(mps_kernel, label_site=label_site, site_chunk=ch)
    out = pl.pallas_call(
        kernel,
        out_shape=jax.ShapeDtypeStruct((b_pad, O), jnp.float32),
        grid=(grid,),
        in_specs=[
            pl.BlockSpec((tb, size), lambda b: (b, 0)),        # batch-tiled pixels
            pl.BlockSpec((size, D, D), lambda b: (0, 0, 0)),   # cores: constant block
            pl.BlockSpec((size, D, D), lambda b: (0, 0, 0)),   #   index -> resident
            pl.BlockSpec((D, D, O), lambda b: (0, 0, 0)),      # permuted label core
        ],
        out_specs=pl.BlockSpec((tb, O), lambda b: (b, 0)),
        scratch_shapes=[pltpu.VMEM((tb, D, D), jnp.float32)],  # right@left staging
        compiler_params=pltpu.CompilerParams(
            dimension_semantics=("parallel",),
            vmem_limit_bytes=vmem_limit),
    )(x_f32, c0, delta, lab_kjo)
    return out[:B]


def mps_reference(x, base_cores, label_core, label_site):
    # pure-JAX reference of the PyTorch forward (static train_mode)
    B, size = x.shape
    D = base_cores.shape[1]
    e = jnp.stack([1.0 - x, x], axis=-1)                       # (B, size, d)
    base_mats = jnp.einsum('sijk,bsk->sbij', base_cores, e)    # (size, B, D, D)
    left = jnp.broadcast_to(jnp.eye(D, dtype=jnp.float32), (B, D, D))
    for s in range(label_site):
        left = left @ base_mats[s]
    right = jnp.broadcast_to(jnp.eye(D, dtype=jnp.float32), (B, D, D))
    for s in range(label_site, size):
        right = right @ base_mats[s]
    return jnp.einsum('bia,aco,bci->bo', left, label_core, right)


if __name__ == "__main__":
    # module hyperparameters (MPSModule defaults, small demo sizes)
    size, D, O, d = 8, 20, 10, 2
    B = 16
    label_site = size // 2          # default label_site
    init_std = 0.01

    key = jax.random.PRNGKey(0)
    k_cores, k_label, k_x = jax.random.split(key, 3)

    # deterministic 'random_eye' init (as in __init__)
    base_cores = (jnp.broadcast_to(jnp.eye(D, dtype=jnp.float32)[None, :, :, None],
                                   (size, D, D, d))
                  + init_std * jax.random.normal(k_cores, (size, D, D, d), jnp.float32))
    label_core = (jnp.broadcast_to(jnp.eye(D, dtype=jnp.float32)[:, :, None], (D, D, O))
                  + init_std * jax.random.normal(k_label, (D, D, O), jnp.float32))
    # open boundary conditions with 0 < label_site < size
    base_cores = base_cores.at[0, 1:].set(0.0)        # first core: only first row
    base_cores = base_cores.at[-1, :, 1:].set(0.0)    # last core: only first column

    x = jax.random.uniform(k_x, (B, size), dtype=jnp.float32)

    ref = mps_reference(x, base_cores, label_core, label_site)
    out = jax.block_until_ready(mps_forward(x, base_cores, label_core, label_site))
    assert out.shape == (B, O)
    np.testing.assert_allclose(np.asarray(out), np.asarray(ref), rtol=2e-3, atol=2e-3)

    # second config: non-multiple-of-8 batch (padding path), odd chain lengths and
    # a small site_chunk so the tail-carry and multi-chunk code paths are exercised.
    B2, label_site2 = 12, 3
    x2 = jax.random.uniform(jax.random.PRNGKey(1), (B2, size), dtype=jnp.float32)
    ref2 = mps_reference(x2, base_cores, label_core, label_site2)
    out2 = jax.block_until_ready(
        mps_forward(x2, base_cores, label_core, label_site2, site_chunk=3))
    assert out2.shape == (B2, O)
    np.testing.assert_allclose(np.asarray(out2), np.asarray(ref2), rtol=2e-3, atol=2e-3)

    print("KERNEL_OK")
</pallas_src>

<mosaic_0001>
module attributes {stable_mosaic.version = 11 : i64} {
  func.func @mps_kernel(%arg0: i32, %arg1: memref<8x8xf32, #tpu.memory_space<vmem>>, %arg2: memref<8x20x20xf32, #tpu.memory_space<vmem>>, %arg3: memref<8x20x20xf32, #tpu.memory_space<vmem>>, %arg4: memref<20x20x10xf32, #tpu.memory_space<vmem>>, %arg5: memref<8x10xf32, #tpu.memory_space<vmem>>, %arg6: memref<8x20x20xf32, #tpu.memory_space<vmem>>) attributes {dimension_semantics = [#tpu.dimension_semantics<parallel>], iteration_bounds = array<i64: 2>, scalar_prefetch = 0 : i64, scratch_operands = 1 : i64, tpu.core_type = #tpu.core_type<tc>, window_params = [{transform_indices = @transform_0, window_bounds = array<i64: 8, 8>}, {pipeline_mode = #tpu.pipeline_mode<synchronous>, transform_indices = @transform_1, window_bounds = array<i64: 8, 20, 20>}, {pipeline_mode = #tpu.pipeline_mode<synchronous>, transform_indices = @transform_2, window_bounds = array<i64: 8, 20, 20>}, {pipeline_mode = #tpu.pipeline_mode<synchronous>, transform_indices = @transform_3, window_bounds = array<i64: 20, 20, 10>}, {transform_indices = @transform_4, window_bounds = array<i64: 8, 10>}]} {
    %c0 = arith.constant 0 : index
    %c0_0 = arith.constant 0 : index
    %0 = vector.load %arg1[%c0, %c0_0] : memref<8x8xf32, #tpu.memory_space<vmem>>, vector<8x4xf32>
    %c0_1 = arith.constant 0 : index
    %c0_2 = arith.constant 0 : index
    %c0_3 = arith.constant 0 : index
    %1 = vector.load %arg2[%c0_1, %c0_2, %c0_3] : memref<8x20x20xf32, #tpu.memory_space<vmem>>, vector<4x20x20xf32>
    %c0_4 = arith.constant 0 : index
    %c0_5 = arith.constant 0 : index
    %c0_6 = arith.constant 0 : index
    %2 = vector.load %arg3[%c0_4, %c0_5, %c0_6] : memref<8x20x20xf32, #tpu.memory_space<vmem>>, vector<4x20x20xf32>
    %3 = vector.shape_cast %1 : vector<4x20x20xf32> to vector<1x4x20x20xf32>
    %4 = vector.shape_cast %0 : vector<8x4xf32> to vector<8x4x1x1xf32>
    %5 = vector.shape_cast %2 : vector<4x20x20xf32> to vector<1x4x20x20xf32>
    %6 = vector.broadcast %4 : vector<8x4x1x1xf32> to vector<8x4x20x20xf32>
    %7 = vector.broadcast %5 : vector<1x4x20x20xf32> to vector<8x4x20x20xf32>
    %8 = arith.mulf %6, %7 : vector<8x4x20x20xf32>
    %9 = vector.broadcast %3 : vector<1x4x20x20xf32> to vector<8x4x20x20xf32>
    %10 = arith.addf %9, %8 : vector<8x4x20x20xf32>
    %11 = vector.shape_cast %10 : vector<8x4x20x20xf32> to vector<8x2x2x20x20xf32>
    %12 = vector.extract_strided_slice %11 {offsets = [0, 0, 0, 0, 0], sizes = [8, 2, 1, 20, 20], strides = [1, 1, 1, 1, 1]} : vector<8x2x2x20x20xf32> to vector<8x2x1x20x20xf32>
    %13 = vector.shape_cast %12 : vector<8x2x1x20x20xf32> to vector<8x2x20x20xf32>
    %14 = vector.shape_cast %13 : vector<8x2x20x20xf32> to vector<16x20x20xf32>
    %15 = vector.extract_strided_slice %11 {offsets = [0, 0, 1, 0, 0], sizes = [8, 2, 1, 20, 20], strides = [1, 1, 1, 1, 1]} : vector<8x2x2x20x20xf32> to vector<8x2x1x20x20xf32>
    %16 = vector.shape_cast %15 : vector<8x2x1x20x20xf32> to vector<8x2x20x20xf32>
    %17 = vector.shape_cast %16 : vector<8x2x20x20xf32> to vector<16x20x20xf32>
    "tpu.trace_start"() <{level = 10 : i32, message = "bij,bjk->bik"}> : () -> ()
    %cst = arith.constant dense<0.000000e+00> : vector<16x20x20xf32>
    %18 = tpu.matmul %14, %17, %cst {dimension_numbers = #tpu.dot_dimension_numbers<[2], [1], [1], [2], [0, 0, 0, 1, 1, 2], [0], [0]>} : vector<16x20x20xf32>, vector<16x20x20xf32>, vector<16x20x20xf32> -> vector<16x20x20xf32>
    "tpu.trace_stop"() : () -> ()
    %19 = vector.shape_cast %18 : vector<16x20x20xf32> to vector<8x2x20x20xf32>
    %20 = vector.shape_cast %19 : vector<8x2x20x20xf32> to vector<8x1x2x20x20xf32>
    %21 = vector.extract_strided_slice %20 {offsets = [0, 0, 0, 0, 0], sizes = [8, 1, 1, 20, 20], strides = [1, 1, 1, 1, 1]} : vector<8x1x2x20x20xf32> to vector<8x1x1x20x20xf32>
    %22 = vector.shape_cast %21 : vector<8x1x1x20x20xf32> to vector<8x1x20x20xf32>
    %23 = vector.shape_cast %22 : vector<8x1x20x20xf32> to vector<8x20x20xf32>
    %24 = vector.extract_strided_slice %20 {offsets = [0, 0, 1, 0, 0], sizes = [8, 1, 1, 20, 20], strides = [1, 1, 1, 1, 1]} : vector<8x1x2x20x20xf32> to vector<8x1x1x20x20xf32>
    %25 = vector.shape_cast %24 : vector<8x1x1x20x20xf32> to vector<8x1x20x20xf32>
    %26 = vector.shape_cast %25 : vector<8x1x20x20xf32> to vector<8x20x20xf32>
    "tpu.trace_start"() <{level = 10 : i32, message = "bij,bjk->bik"}> : () -> ()
    %cst_7 = arith.constant dense<0.000000e+00> : vector<8x20x20xf32>
    %27 = tpu.matmul %23, %26, %cst_7 {dimension_numbers = #tpu.dot_dimension_numbers<[2], [1], [1], [2], [0, 0, 0, 1, 1, 2], [0], [0]>} : vector<8x20x20xf32>, vector<8x20x20xf32>, vector<8x20x20xf32> -> vector<8x20x20xf32>
    "tpu.trace_stop"() : () -> ()
    %28 = vector.shape_cast %27 : vector<8x20x20xf32> to vector<8x1x20x20xf32>
    %29 = vector.shape_cast %28 : vector<8x1x20x20xf32> to vector<8x20x20xf32>
    %c0_8 = arith.constant 0 : index
    %c4 = arith.constant 4 : index
    %30 = vector.load %arg1[%c0_8, %c4] : memref<8x8xf32, #tpu.memory_space<vmem>>, vector<8x4xf32>
    %c4_9 = arith.constant 4 : index
    %c0_10 = arith.constant 0 : index
    %c0_11 = arith.constant 0 : index
    %31 = vector.load %arg2[%c4_9, %c0_10, %c0_11] : memref<8x20x20xf32, #tpu.memory_space<vmem>>, vector<4x20x20xf32>
    %c4_12 = arith.constant 4 : index
    %c0_13 = arith.constant 0 : index
    %c0_14 = arith.constant 0 : index
    %32 = vector.load %arg3[%c4_12, %c0_13, %c0_14] : memref<8x20x20xf32, #tpu.memory_space<vmem>>, vector<4x20x20xf32>
    %33 = vector.shape_cast %31 : vector<4x20x20xf32> to vector<1x4x20x20xf32>
    %34 = vector.shape_cast %30 : vector<8x4xf32> to vector<8x4x1x1xf32>
    %35 = vector.shape_cast %32 : vector<4x20x20xf32> to vector<1x4x20x20xf32>
    %36 = vector.broadcast %34 : vector<8x4x1x1xf32> to vector<8x4x20x20xf32>
    %37 = vector.broadcast %35 : vector<1x4x20x20xf32> to vector<8x4x20x20xf32>
    %38 = arith.mulf %36, %37 : vector<8x4x20x20xf32>
    %39 = vector.broadcast %33 : vector<1x4x20x20xf32> to vector<8x4x20x20xf32>
    %40 = arith.addf %39, %38 : vector<8x4x20x20xf32>
    %41 = vector.shape_cast %40 : vector<8x4x20x20xf32> to vector<8x2x2x20x20xf32>
    %42 = vector.extract_strided_slice %41 {offsets = [0, 0, 0, 0, 0], sizes = [8, 2, 1, 20, 20], strides = [1, 1, 1, 1, 1]} : vector<8x2x2x20x20xf32> to vector<8x2x1x20x20xf32>
    %43 = vector.shape_cast %42 : vector<8x2x1x20x20xf32> to vector<8x2x20x20xf32>
    %44 = vector.shape_cast %43 : vector<8x2x20x20xf32> to vector<16x20x20xf32>
    %45 = vector.extract_strided_slice %41 {offsets = [0, 0, 1, 0, 0], sizes = [8, 2, 1, 20, 20], strides = [1, 1, 1, 1, 1]} : vector<8x2x2x20x20xf32> to vector<8x2x1x20x20xf32>
    %46 = vector.shape_cast %45 : vector<8x2x1x20x20xf32> to vector<8x2x20x20xf32>
    %47 = vector.shape_cast %46 : vector<8x2x20x20xf32> to vector<16x20x20xf32>
    "tpu.trace_start"() <{level = 10 : i32, message = "bij,bjk->bik"}> : () -> ()
    %cst_15 = arith.constant dense<0.000000e+00> : vector<16x20x20xf32>
    %48 = tpu.matmul %44, %47, %cst_15 {dimension_numbers = #tpu.dot_dimension_numbers<[2], [1], [1], [2], [0, 0, 0, 1, 1, 2], [0], [0]>} : vector<16x20x20xf32>, vector<16x20x20xf32>, vector<16x20x20xf32> -> vector<16x20x20xf32>
    "tpu.trace_stop"() : () -> ()
    %49 = vector.shape_cast %48 : vector<16x20x20xf32> to vector<8x2x20x20xf32>
    %50 = vector.shape_cast %49 : vector<8x2x20x20xf32> to vector<8x1x2x20x20xf32>
    %51 = vector.extract_strided_slice %50 {offsets = [0, 0, 0, 0, 0], sizes = [8, 1, 1, 20, 20], strides = [1, 1, 1, 1, 1]} : vector<8x1x2x20x20xf32> to vector<8x1x1x20x20xf32>
    %52 = vector.shape_cast %51 : vector<8x1x1x20x20xf32> to vector<8x1x20x20xf32>
    %53 = vector.shape_cast %52 : vector<8x1x20x20xf32> to vector<8x20x20xf32>
    %54 = vector.extract_strided_slice %50 {offsets = [0, 0, 1, 0, 0], sizes = [8, 1, 1, 20, 20], strides = [1, 1, 1, 1, 1]} : vector<8x1x2x20x20xf32> to vector<8x1x1x20x20xf32>
    %55 = vector.shape_cast %54 : vector<8x1x1x20x20xf32> to vector<8x1x20x20xf32>
    %56 = vector.shape_cast %55 : vector<8x1x20x20xf32> to vector<8x20x20xf32>
    "tpu.trace_start"() <{level = 10 : i32, message = "bij,bjk->bik"}> : () -> ()
    %cst_16 = arith.constant dense<0.000000e+00> : vector<8x20x20xf32>
    %57 = tpu.matmul %53, %56, %cst_16 {dimension_numbers = #tpu.dot_dimension_numbers<[2], [1], [1], [2], [0, 0, 0, 1, 1, 2], [0], [0]>} : vector<8x20x20xf32>, vector<8x20x20xf32>, vector<8x20x20xf32> -> vector<8x20x20xf32>
    "tpu.trace_stop"() : () -> ()
    %58 = vector.shape_cast %57 : vector<8x20x20xf32> to vector<8x1x20x20xf32>
    %59 = vector.shape_cast %58 : vector<8x1x20x20xf32> to vector<8x20x20xf32>
    "tpu.trace_start"() <{level = 10 : i32, message = "bij,bjk->bik"}> : () -> ()
    %cst_17 = arith.constant dense<0.000000e+00> : vector<8x20x20xf32>
    %60 = tpu.matmul %59, %29, %cst_17 {dimension_numbers = #tpu.dot_dimension_numbers<[2], [1], [1], [2], [0, 0, 0, 1, 1, 2], [0], [0]>} : vector<8x20x20xf32>, vector<8x20x20xf32>, vector<8x20x20xf32> -> vector<8x20x20xf32>
    "tpu.trace_stop"() : () -> ()
    %c0_18 = arith.constant 0 : index
    %c0_19 = arith.constant 0 : index
    %c0_20 = arith.constant 0 : index
    %61 = vector.load %arg6[%c0_18, %c0_19, %c0_20] : memref<8x20x20xf32, #tpu.memory_space<vmem>>, vector<8x20x20xf32>
    tpu.vector_store %arg6[%c0_18, %c0_19, %c0_20], %60 {strides = array<i32>} : memref<8x20x20xf32, #tpu.memory_space<vmem>>, vector<8x20x20xf32>,
    %cst_21 = arith.constant 0.000000e+00 : f32
    %62 = vector.broadcast %cst_21 : f32 to vector<8x10xf32>
    %c0_22 = arith.constant 0 : index
    %c0_23 = arith.constant 0 : index
    %c0_24 = arith.constant 0 : index
    %63 = vector.load %arg6[%c0_22, %c0_23, %c0_24] : memref<8x20x20xf32, #tpu.memory_space<vmem>>, vector<8x1x20xf32>
    %64 = vector.shape_cast %63 : vector<8x1x20xf32> to vector<8x20xf32>
    %c0_25 = arith.constant 0 : index
    %c0_26 = arith.constant 0 : index
    %c0_27 = arith.constant 0 : index
    %65 = vector.load %arg4[%c0_25, %c0_26, %c0_27] : memref<20x20x10xf32, #tpu.memory_space<vmem>>, vector<1x20x10xf32>
    %66 = vector.shape_cast %65 : vector<1x20x10xf32> to vector<20x10xf32>
    %cst_28 = arith.constant dense<0.000000e+00> : vector<8x10xf32>
    %67 = tpu.matmul %64, %66, %cst_28 {dimension_numbers = #tpu.dot_dimension_numbers<[1], [0], [0], [1], [0, 0, 1, 1], [], []>} : vector<8x20xf32>, vector<20x10xf32>, vector<8x10xf32> -> vector<8x10xf32>
    %68 = arith.addf %62, %67 : vector<8x10xf32>
    %c0_29 = arith.constant 0 : index
    %c1 = arith.constant 1 : index
    %c0_30 = arith.constant 0 : index
    %69 = vector.load %arg6[%c0_29, %c1, %c0_30] : memref<8x20x20xf32, #tpu.memory_space<vmem>>, vector<8x1x20xf32>
    %70 = vector.shape_cast %69 : vector<8x1x20xf32> to vector<8x20xf32>
    %c1_31 = arith.constant 1 : index
    %c0_32 = arith.constant 0 : index
    %c0_33 = arith.constant 0 : index
    %71 = vector.load %arg4[%c1_31, %c0_32, %c0_33] : memref<20x20x10xf32, #tpu.memory_space<vmem>>, vector<1x20x10xf32>
    %72 = vector.shape_cast %71 : vector<1x20x10xf32> to vector<20x10xf32>
    %cst_34 = arith.constant dense<0.000000e+00> : vector<8x10xf32>
    %73 = tpu.matmul %70, %72, %cst_34 {dimension_numbers = #tpu.dot_dimension_numbers<[1], [0], [0], [1], [0, 0, 1, 1], [], []>} : vector<8x20xf32>, vector<20x10xf32>, vector<8x10xf32> -> vector<8x10xf32>
    %74 = arith.addf %68, %73 : vector<8x10xf32>
    %c0_35 = arith.constant 0 : index
    %c2 = arith.constant 2 : index
    %c0_36 = arith.constant 0 : index
    %75 = vector.load %arg6[%c0_35, %c2, %c0_36] : memref<8x20x20xf32, #tpu.memory_space<vmem>>, vector<8x1x20xf32>
    %76 = vector.shape_cast %75 : vector<8x1x20xf32> to vector<8x20xf32>
    %c2_37 = arith.constant 2 : index
    %c0_38 = arith.constant 0 : index
    %c0_39 = arith.constant 0 : index
    %77 = vector.load %arg4[%c2_37, %c0_38, %c0_39] : memref<20x20x10xf32, #tpu.memory_space<vmem>>, vector<1x20x10xf32>
    %78 = vector.shape_cast %77 : vector<1x20x10xf32> to vector<20x10xf32>
    %cst_40 = arith.constant dense<0.000000e+00> : vector<8x10xf32>
    %79 = tpu.matmul %76, %78, %cst_40 {dimension_numbers = #tpu.dot_dimension_numbers<[1], [0], [0], [1], [0, 0, 1, 1], [], []>} : vector<8x20xf32>, vector<20x10xf32>, vector<8x10xf32> -> vector<8x10xf32>
    %80 = arith.addf %74, %79 : vector<8x10xf32>
    %c0_41 = arith.constant 0 : index
    %c3 = arith.constant 3 : index
    %c0_42 = arith.constant 0 : index
    %81 = vector.load %arg6[%c0_41, %c3, %c0_42] : memref<8x20x20xf32, #tpu.memory_space<vmem>>, vector<8x1x20xf32>
    %82 = vector.shape_cast %81 : vector<8x1x20xf32> to vector<8x20xf32>
    %c3_43 = arith.constant 3 : index
    %c0_44 = arith.constant 0 : index
    %c0_45 = arith.constant 0 : index
    %83 = vector.load %arg4[%c3_43, %c0_44, %c0_45] : memref<20x20x10xf32, #tpu.memory_space<vmem>>, vector<1x20x10xf32>
    %84 = vector.shape_cast %83 : vector<1x20x10xf32> to vector<20x10xf32>
    %cst_46 = arith.constant dense<0.000000e+00> : vector<8x10xf32>
    %85 = tpu.matmul %82, %84, %cst_46 {dimension_numbers = #tpu.dot_dimension_numbers<[1], [0], [0], [1], [0, 0, 1, 1], [], []>} : vector<8x20xf32>, vector<20x10xf32>, vector<8x10xf32> -> vector<8x10xf32>
    %86 = arith.addf %80, %85 : vector<8x10xf32>
    %c0_47 = arith.constant 0 : index
    %c4_48 = arith.constant 4 : index
    %c0_49 = arith.constant 0 : index
    %87 = vector.load %arg6[%c0_47, %c4_48, %c0_49] : memref<8x20x20xf32, #tpu.memory_space<vmem>>, vector<8x1x20xf32>
    %88 = vector.shape_cast %87 : vector<8x1x20xf32> to vector<8x20xf32>
    %c4_50 = arith.constant 4 : index
    %c0_51 = arith.constant 0 : index
    %c0_52 = arith.constant 0 : index
    %89 = vector.load %arg4[%c4_50, %c0_51, %c0_52] : memref<20x20x10xf32, #tpu.memory_space<vmem>>, vector<1x20x10xf32>
    %90 = vector.shape_cast %89 : vector<1x20x10xf32> to vector<20x10xf32>
    %cst_53 = arith.constant dense<0.000000e+00> : vector<8x10xf32>
    %91 = tpu.matmul %88, %90, %cst_53 {dimension_numbers = #tpu.dot_dimension_numbers<[1], [0], [0], [1], [0, 0, 1, 1], [], []>} : vector<8x20xf32>, vector<20x10xf32>, vector<8x10xf32> -> vector<8x10xf32>
    %92 = arith.addf %86, %91 : vector<8x10xf32>
    %c0_54 = arith.constant 0 : index
    %c5 = arith.constant 5 : index
    %c0_55 = arith.constant 0 : index
    %93 = vector.load %arg6[%c0_54, %c5, %c0_55] : memref<8x20x20xf32, #tpu.memory_space<vmem>>, vector<8x1x20xf32>
    %94 = vector.shape_cast %93 : vector<8x1x20xf32> to vector<8x20xf32>
    %c5_56 = arith.constant 5 : index
    %c0_57 = arith.constant 0 : index
    %c0_58 = arith.constant 0 : index
    %95 = vector.load %arg4[%c5_56, %c0_57, %c0_58] : memref<20x20x10xf32, #tpu.memory_space<vmem>>, vector<1x20x10xf32>
    %96 = vector.shape_cast %95 : vector<1x20x10xf32> to vector<20x10xf32>
    %cst_59 = arith.constant dense<0.000000e+00> : vector<8x10xf32>
    %97 = tpu.matmul %94, %96, %cst_59 {dimension_numbers = #tpu.dot_dimension_numbers<[1], [0], [0], [1], [0, 0, 1, 1], [], []>} : vector<8x20xf32>, vector<20x10xf32>, vector<8x10xf32> -> vector<8x10xf32>
    %98 = arith.addf %92, %97 : vector<8x10xf32>
    %c0_60 = arith.constant 0 : index
    %c6 = arith.constant 6 : index
    %c0_61 = arith.constant 0 : index
    %99 = vector.load %arg6[%c0_60, %c6, %c0_61] : memref<8x20x20xf32, #tpu.memory_space<vmem>>, vector<8x1x20xf32>
    %100 = vector.shape_cast %99 : vector<8x1x20xf32> to vector<8x20xf32>
    %c6_62 = arith.constant 6 : index
    %c0_63 = arith.constant 0 : index
    %c0_64 = arith.constant 0 : index
    %101 = vector.load %arg4[%c6_62, %c0_63, %c0_64] : memref<20x20x10xf32, #tpu.memory_space<vmem>>, vector<1x20x10xf32>
    %102 = vector.shape_cast %101 : vector<1x20x10xf32> to vector<20x10xf32>
    %cst_65 = arith.constant dense<0.000000e+00> : vector<8x10xf32>
    %103 = tpu.matmul %100, %102, %cst_65 {dimension_numbers = #tpu.dot_dimension_numbers<[1], [0], [0], [1], [0, 0, 1, 1], [], []>} : vector<8x20xf32>, vector<20x10xf32>, vector<8x10xf32> -> vector<8x10xf32>
    %104 = arith.addf %98, %103 : vector<8x10xf32>
    %c0_66 = arith.constant 0 : index
    %c7 = arith.constant 7 : index
    %c0_67 = arith.constant 0 : index
    %105 = vector.load %arg6[%c0_66, %c7, %c0_67] : memref<8x20x20xf32, #tpu.memory_space<vmem>>, vector<8x1x20xf32>
    %106 = vector.shape_cast %105 : vector<8x1x20xf32> to vector<8x20xf32>
    %c7_68 = arith.constant 7 : index
    %c0_69 = arith.constant 0 : index
    %c0_70 = arith.constant 0 : index
    %107 = vector.load %arg4[%c7_68, %c0_69, %c0_70] : memref<20x20x10xf32, #tpu.memory_space<vmem>>, vector<1x20x10xf32>
    %108 = vector.shape_cast %107 : vector<1x20x10xf32> to vector<20x10xf32>
    %cst_71 = arith.constant dense<0.000000e+00> : vector<8x10xf32>
    %109 = tpu.matmul %106, %108, %cst_71 {dimension_numbers = #tpu.dot_dimension_numbers<[1], [0], [0], [1], [0, 0, 1, 1], [], []>} : vector<8x20xf32>, vector<20x10xf32>, vector<8x10xf32> -> vector<8x10xf32>
    %110 = arith.addf %104, %109 : vector<8x10xf32>
    %c0_72 = arith.constant 0 : index
    %c8 = arith.constant 8 : index
    %c0_73 = arith.constant 0 : index
    %111 = vector.load %arg6[%c0_72, %c8, %c0_73] : memref<8x20x20xf32, #tpu.memory_space<vmem>>, vector<8x1x20xf32>
    %112 = vector.shape_cast %111 : vector<8x1x20xf32> to vector<8x20xf32>
    %c8_74 = arith.constant 8 : index
    %c0_75 = arith.constant 0 : index
    %c0_76 = arith.constant 0 : index
    %113 = vector.load %arg4[%c8_74, %c0_75, %c0_76] : memref<20x20x10xf32, #tpu.memory_space<vmem>>, vector<1x20x10xf32>
    %114 = vector.shape_cast %113 : vector<1x20x10xf32> to vector<20x10xf32>
    %cst_77 = arith.constant dense<0.000000e+00> : vector<8x10xf32>
    %115 = tpu.matmul %112, %114, %cst_77 {dimension_numbers = #tpu.dot_dimension_numbers<[1], [0], [0], [1], [0, 0, 1, 1], [], []>} : vector<8x20xf32>, vector<20x10xf32>, vector<8x10xf32> -> vector<8x10xf32>
    %116 = arith.addf %110, %115 : vector<8x10xf32>
    %c0_78 = arith.constant 0 : index
    %c9 = arith.constant 9 : index
    %c0_79 = arith.constant 0 : index
    %117 = vector.load %arg6[%c0_78, %c9, %c0_79] : memref<8x20x20xf32, #tpu.memory_space<vmem>>, vector<8x1x20xf32>
    %118 = vector.shape_cast %117 : vector<8x1x20xf32> to vector<8x20xf32>
    %c9_80 = arith.constant 9 : index
    %c0_81 = arith.constant 0 : index
    %c0_82 = arith.constant 0 : index
    %119 = vector.load %arg4[%c9_80, %c0_81, %c0_82] : memref<20x20x10xf32, #tpu.memory_space<vmem>>, vector<1x20x10xf32>
    %120 = vector.shape_cast %119 : vector<1x20x10xf32> to vector<20x10xf32>
    %cst_83 = arith.constant dense<0.000000e+00> : vector<8x10xf32>
    %121 = tpu.matmul %118, %120, %cst_83 {dimension_numbers = #tpu.dot_dimension_numbers<[1], [0], [0], [1], [0, 0, 1, 1], [], []>} : vector<8x20xf32>, vector<20x10xf32>, vector<8x10xf32> -> vector<8x10xf32>
    %122 = arith.addf %116, %121 : vector<8x10xf32>
    %c0_84 = arith.constant 0 : index
    %c10 = arith.constant 10 : index
    %c0_85 = arith.constant 0 : index
    %123 = vector.load %arg6[%c0_84, %c10, %c0_85] : memref<8x20x20xf32, #tpu.memory_space<vmem>>, vector<8x1x20xf32>
    %124 = vector.shape_cast %123 : vector<8x1x20xf32> to vector<8x20xf32>
    %c10_86 = arith.constant 10 : index
    %c0_87 = arith.constant 0 : index
    %c0_88 = arith.constant 0 : index
    %125 = vector.load %arg4[%c10_86, %c0_87, %c0_88] : memref<20x20x10xf32, #tpu.memory_space<vmem>>, vector<1x20x10xf32>
    %126 = vector.shape_cast %125 : vector<1x20x10xf32> to vector<20x10xf32>
    %cst_89 = arith.constant dense<0.000000e+00> : vector<8x10xf32>
    %127 = tpu.matmul %124, %126, %cst_89 {dimension_numbers = #tpu.dot_dimension_numbers<[1], [0], [0], [1], [0, 0, 1, 1], [], []>} : vector<8x20xf32>, vector<20x10xf32>, vector<8x10xf32> -> vector<8x10xf32>
    %128 = arith.addf %122, %127 : vector<8x10xf32>
    %c0_90 = arith.constant 0 : index
    %c11 = arith.constant 11 : index
    %c0_91 = arith.constant 0 : index
    %129 = vector.load %arg6[%c0_90, %c11, %c0_91] : memref<8x20x20xf32, #tpu.memory_space<vmem>>, vector<8x1x20xf32>
    %130 = vector.shape_cast %129 : vector<8x1x20xf32> to vector<8x20xf32>
    %c11_92 = arith.constant 11 : index
    %c0_93 = arith.constant 0 : index
    %c0_94 = arith.constant 0 : index
    %131 = vector.load %arg4[%c11_92, %c0_93, %c0_94] : memref<20x20x10xf32, #tpu.memory_space<vmem>>, vector<1x20x10xf32>
    %132 = vector.shape_cast %131 : vector<1x20x10xf32> to vector<20x10xf32>
    %cst_95 = arith.constant dense<0.000000e+00> : vector<8x10xf32>
    %133 = tpu.matmul %130, %132, %cst_95 {dimension_numbers = #tpu.dot_dimension_numbers<[1], [0], [0], [1], [0, 0, 1, 1], [], []>} : vector<8x20xf32>, vector<20x10xf32>, vector<8x10xf32> -> vector<8x10xf32>
    %134 = arith.addf %128, %133 : vector<8x10xf32>
    %c0_96 = arith.constant 0 : index
    %c12 = arith.constant 12 : index
    %c0_97 = arith.constant 0 : index
    %135 = vector.load %arg6[%c0_96, %c12, %c0_97] : memref<8x20x20xf32, #tpu.memory_space<vmem>>, vector<8x1x20xf32>
    %136 = vector.shape_cast %135 : vector<8x1x20xf32> to vector<8x20xf32>
    %c12_98 = arith.constant 12 : index
    %c0_99 = arith.constant 0 : index
    %c0_100 = arith.constant 0 : index
    %137 = vector.load %arg4[%c12_98, %c0_99, %c0_100] : memref<20x20x10xf32, #tpu.memory_space<vmem>>, vector<1x20x10xf32>
    %138 = vector.shape_cast %137 : vector<1x20x10xf32> to vector<20x10xf32>
    %cst_101 = arith.constant dense<0.000000e+00> : vector<8x10xf32>
    %139 = tpu.matmul %136, %138, %cst_101 {dimension_numbers = #tpu.dot_dimension_numbers<[1], [0], [0], [1], [0, 0, 1, 1], [], []>} : vector<8x20xf32>, vector<20x10xf32>, vector<8x10xf32> -> vector<8x10xf32>
    %140 = arith.addf %134, %139 : vector<8x10xf32>
    %c0_102 = arith.constant 0 : index
    %c13 = arith.constant 13 : index
    %c0_103 = arith.constant 0 : index
    %141 = vector.load %arg6[%c0_102, %c13, %c0_103] : memref<8x20x20xf32, #tpu.memory_space<vmem>>, vector<8x1x20xf32>
    %142 = vector.shape_cast %141 : vector<8x1x20xf32> to vector<8x20xf32>
    %c13_104 = arith.constant 13 : index
    %c0_105 = arith.constant 0 : index
    %c0_106 = arith.constant 0 : index
    %143 = vector.load %arg4[%c13_104, %c0_105, %c0_106] : memref<20x20x10xf32, #tpu.memory_space<vmem>>, vector<1x20x10xf32>
    %144 = vector.shape_cast %143 : vector<1x20x10xf32> to vector<20x10xf32>
    %cst_107 = arith.constant dense<0.000000e+00> : vector<8x10xf32>
    %145 = tpu.matmul %142, %144, %cst_107 {dimension_numbers = #tpu.dot_dimension_numbers<[1], [0], [0], [1], [0, 0, 1, 1], [], []>} : vector<8x20xf32>, vector<20x10xf32>, vector<8x10xf32> -> vector<8x10xf32>
    %146 = arith.addf %140, %145 : vector<8x10xf32>
    %c0_108 = arith.constant 0 : index
    %c14 = arith.constant 14 : index
    %c0_109 = arith.constant 0 : index
    %147 = vector.load %arg6[%c0_108, %c14, %c0_109] : memref<8x20x20xf32, #tpu.memory_space<vmem>>, vector<8x1x20xf32>
    %148 = vector.shape_cast %147 : vector<8x1x20xf32> to vector<8x20xf32>
    %c14_110 = arith.constant 14 : index
    %c0_111 = arith.constant 0 : index
    %c0_112 = arith.constant 0 : index
    %149 = vector.load %arg4[%c14_110, %c0_111, %c0_112] : memref<20x20x10xf32, #tpu.memory_space<vmem>>, vector<1x20x10xf32>
    %150 = vector.shape_cast %149 : vector<1x20x10xf32> to vector<20x10xf32>
    %cst_113 = arith.constant dense<0.000000e+00> : vector<8x10xf32>
    %151 = tpu.matmul %148, %150, %cst_113 {dimension_numbers = #tpu.dot_dimension_numbers<[1], [0], [0], [1], [0, 0, 1, 1], [], []>} : vector<8x20xf32>, vector<20x10xf32>, vector<8x10xf32> -> vector<8x10xf32>
    %152 = arith.addf %146, %151 : vector<8x10xf32>
    %c0_114 = arith.constant 0 : index
    %c15 = arith.constant 15 : index
    %c0_115 = arith.constant 0 : index
    %153 = vector.load %arg6[%c0_114, %c15, %c0_115] : memref<8x20x20xf32, #tpu.memory_space<vmem>>, vector<8x1x20xf32>
    %154 = vector.shape_cast %153 : vector<8x1x20xf32> to vector<8x20xf32>
    %c15_116 = arith.constant 15 : index
    %c0_117 = arith.constant 0 : index
    %c0_118 = arith.constant 0 : index
    %155 = vector.load %arg4[%c15_116, %c0_117, %c0_118] : memref<20x20x10xf32, #tpu.memory_space<vmem>>, vector<1x20x10xf32>
    %156 = vector.shape_cast %155 : vector<1x20x10xf32> to vector<20x10xf32>
    %cst_119 = arith.constant dense<0.000000e+00> : vector<8x10xf32>
    %157 = tpu.matmul %154, %156, %cst_119 {dimension_numbers = #tpu.dot_dimension_numbers<[1], [0], [0], [1], [0, 0, 1, 1], [], []>} : vector<8x20xf32>, vector<20x10xf32>, vector<8x10xf32> -> vector<8x10xf32>
    %158 = arith.addf %152, %157 : vector<8x10xf32>
    %c0_120 = arith.constant 0 : index
    %c16 = arith.constant 16 : index
    %c0_121 = arith.constant 0 : index
    %159 = vector.load %arg6[%c0_120, %c16, %c0_121] : memref<8x20x20xf32, #tpu.memory_space<vmem>>, vector<8x1x20xf32>
    %160 = vector.shape_cast %159 : vector<8x1x20xf32> to vector<8x20xf32>
    %c16_122 = arith.constant 16 : index
    %c0_123 = arith.constant 0 : index
    %c0_124 = arith.constant 0 : index
    %161 = vector.load %arg4[%c16_122, %c0_123, %c0_124] : memref<20x20x10xf32, #tpu.memory_space<vmem>>, vector<1x20x10xf32>
    %162 = vector.shape_cast %161 : vector<1x20x10xf32> to vector<20x10xf32>
    %cst_125 = arith.constant dense<0.000000e+00> : vector<8x10xf32>
    %163 = tpu.matmul %160, %162, %cst_125 {dimension_numbers = #tpu.dot_dimension_numbers<[1], [0], [0], [1], [0, 0, 1, 1], [], []>} : vector<8x20xf32>, vector<20x10xf32>, vector<8x10xf32> -> vector<8x10xf32>
    %164 = arith.addf %158, %163 : vector<8x10xf32>
    %c0_126 = arith.constant 0 : index
    %c17 = arith.constant 17 : index
    %c0_127 = arith.constant 0 : index
    %165 = vector.load %arg6[%c0_126, %c17, %c0_127] : memref<8x20x20xf32, #tpu.memory_space<vmem>>, vector<8x1x20xf32>
    %166 = vector.shape_cast %165 : vector<8x1x20xf32> to vector<8x20xf32>
    %c17_128 = arith.constant 17 : index
    %c0_129 = arith.constant 0 : index
    %c0_130 = arith.constant 0 : index
    %167 = vector.load %arg4[%c17_128, %c0_129, %c0_130] : memref<20x20x10xf32, #tpu.memory_space<vmem>>, vector<1x20x10xf32>
    %168 = vector.shape_cast %167 : vector<1x20x10xf32> to vector<20x10xf32>
    %cst_131 = arith.constant dense<0.000000e+00> : vector<8x10xf32>
    %169 = tpu.matmul %166, %168, %cst_131 {dimension_numbers = #tpu.dot_dimension_numbers<[1], [0], [0], [1], [0, 0, 1, 1], [], []>} : vector<8x20xf32>, vector<20x10xf32>, vector<8x10xf32> -> vector<8x10xf32>
    %170 = arith.addf %164, %169 : vector<8x10xf32>
    %c0_132 = arith.constant 0 : index
    %c18 = arith.constant 18 : index
    %c0_133 = arith.constant 0 : index
    %171 = vector.load %arg6[%c0_132, %c18, %c0_133] : memref<8x20x20xf32, #tpu.memory_space<vmem>>, vector<8x1x20xf32>
    %172 = vector.shape_cast %171 : vector<8x1x20xf32> to vector<8x20xf32>
    %c18_134 = arith.constant 18 : index
    %c0_135 = arith.constant 0 : index
    %c0_136 = arith.constant 0 : index
    %173 = vector.load %arg4[%c18_134, %c0_135, %c0_136] : memref<20x20x10xf32, #tpu.memory_space<vmem>>, vector<1x20x10xf32>
    %174 = vector.shape_cast %173 : vector<1x20x10xf32> to vector<20x10xf32>
    %cst_137 = arith.constant dense<0.000000e+00> : vector<8x10xf32>
    %175 = tpu.matmul %172, %174, %cst_137 {dimension_numbers = #tpu.dot_dimension_numbers<[1], [0], [0], [1], [0, 0, 1, 1], [], []>} : vector<8x20xf32>, vector<20x10xf32>, vector<8x10xf32> -> vector<8x10xf32>
    %176 = arith.addf %170, %175 : vector<8x10xf32>
    %c0_138 = arith.constant 0 : index
    %c19 = arith.constant 19 : index
    %c0_139 = arith.constant 0 : index
    %177 = vector.load %arg6[%c0_138, %c19, %c0_139] : memref<8x20x20xf32, #tpu.memory_space<vmem>>, vector<8x1x20xf32>
    %178 = vector.shape_cast %177 : vector<8x1x20xf32> to vector<8x20xf32>
    %c19_140 = arith.constant 19 : index
    %c0_141 = arith.constant 0 : index
    %c0_142 = arith.constant 0 : index
    %179 = vector.load %arg4[%c19_140, %c0_141, %c0_142] : memref<20x20x10xf32, #tpu.memory_space<vmem>>, vector<1x20x10xf32>
    %180 = vector.shape_cast %179 : vector<1x20x10xf32> to vector<20x10xf32>
    %cst_143 = arith.constant dense<0.000000e+00> : vector<8x10xf32>
    %181 = tpu.matmul %178, %180, %cst_143 {dimension_numbers = #tpu.dot_dimension_numbers<[1], [0], [0], [1], [0, 0, 1, 1], [], []>} : vector<8x20xf32>, vector<20x10xf32>, vector<8x10xf32> -> vector<8x10xf32>
    %182 = arith.addf %176, %181 : vector<8x10xf32>
    %c0_144 = arith.constant 0 : index
    %c0_145 = arith.constant 0 : index
    %183 = vector.load %arg5[%c0_144, %c0_145] : memref<8x10xf32, #tpu.memory_space<vmem>>, vector<8x10xf32>
    tpu.vector_store %arg5[%c0_144, %c0_145], %182 {strides = array<i32>} : memref<8x10xf32, #tpu.memory_space<vmem>>, vector<8x10xf32>,
    return
  }
  func.func @transform_0(%arg0: i32) -> (i32, i32) {
    %c0_i32 = arith.constant 0 : i32
    %c0_i32_0 = arith.constant 0 : i32
    return %arg0, %c0_i32 : i32, i32
  }
  func.func @transform_1(%arg0: i32) -> (i32, i32, i32) {
    %c0_i32 = arith.constant 0 : i32
    %c0_i32_0 = arith.constant 0 : i32
    %c0_i32_1 = arith.constant 0 : i32
    %c0_i32_2 = arith.constant 0 : i32
    return %c0_i32, %c0_i32_0, %c0_i32_1 : i32, i32, i32
  }
  func.func @transform_2(%arg0: i32) -> (i32, i32, i32) {
    %c0_i32 = arith.constant 0 : i32
    %c0_i32_0 = arith.constant 0 : i32
    %c0_i32_1 = arith.constant 0 : i32
    %c0_i32_2 = arith.constant 0 : i32
    return %c0_i32, %c0_i32_0, %c0_i32_1 : i32, i32, i32
  }
  func.func @transform_3(%arg0: i32) -> (i32, i32, i32) {
    %c0_i32 = arith.constant 0 : i32
    %c0_i32_0 = arith.constant 0 : i32
    %c0_i32_1 = arith.constant 0 : i32
    %c0_i32_2 = arith.constant 0 : i32
    return %c0_i32, %c0_i32_0, %c0_i32_1 : i32, i32, i32
  }
  func.func @transform_4(%arg0: i32) -> (i32, i32) {
    %c0_i32 = arith.constant 0 : i32
    %c0_i32_0 = arith.constant 0 : i32
    return %arg0, %c0_i32 : i32, i32
  }
}

</mosaic_0001>

<llo_original>
// kernel: tpu_custom_call.1
$region0: #{tpu_custom_call.1}
  #allocation0 [shape = 'u32[]', space=smem, size = 0x4, offset = 0x4, fixed_abs, tag = 'smem constant byte address 0x4 - core index']
  #allocation1 [shape = 'u32[72,128]{1,0:T(1,128)}', space=vmem, size = 0x9000, scoped, tag = 'internal scratch']
  #allocation2 [shape = 'f32[8,20,20]{2,1,0:T(8,128)}', space=vmem, size = 0x18000, scoped, tag = 'scratch operand']
  %s0 = inlined_call_operand.vmem [shape: f32[16,8], index: 0, kind: input, shape index: {}]
  %s1 = inlined_call_operand.vmem [shape: f32[8,20,20], index: 1, kind: input, shape index: {}]
  %s2 = inlined_call_operand.vmem [shape: f32[8,20,20], index: 2, kind: input, shape index: {}]
  %s3 = inlined_call_operand.vmem [shape: f32[20,20,10], index: 3, kind: input, shape index: {}]
  %s4 = inlined_call_operand.hbm [shape: f32[16,10], index: 4, kind: output, shape index: {}]
  %s5 = sld [smem:[#allocation0]]
  $region49: #{tpu_custom_call.1} parent=0
    _
  %s7 = ssub.s32 1, %s5
  %s8 = scalar_select 0, %s7, %s5
  $region1: #{tpu_custom_call.1} parent=0
    #allocation3 [shape = 'u8[8192]{0}', space=vmem, size = 0x2000, scoped, tag = 'output window, operand 0']
    #allocation4 [shape = 's32[2]{0}', space=sflag, size = 0x8, scoped, tag = 'scoped memory for tpu_custom_call.1']
    %9 = vsyncpa [#allocation4], 0
    %s10 = scalar_lea.sflag [#allocation4], 1
    %11 = vsyncpa %s10, 0
    loop: start=0, step=1, limit=4
    $region2: #{tpu_custom_call.1} parent=1 // loop_pre_header
      _
    $region3: #{tpu_custom_call.1} parent=1 // loop_header
      %s13 = sphi 0, %s17
      %p14 = scmp.ge.s32.totalorder %s13, 4
      %s23 = sphi 0, %s25
      %s26 = sphi 0, %s23
      %s27 = sphi 0, %s26
      %s43 = sphi 0, %s27
      %s47 = sphi 0, %s47
      %s49 = sphi 0, %s47
      %s50 = sphi 0, %s49
      %s64 = sphi 0, %s50
      %s68 = sphi 0, %s68
      %s70 = sphi 0, %s68
      %s71 = sphi 0, %s70
      %s85 = sphi 0, %s71
      %s89 = sphi 0, %s89
      %s91 = sphi 0, %s89
      %s92 = sphi 0, %s91
      %s106 = sphi 0, %s92
      %s112 = sphi 0, %s114
      %s115 = sphi 0, %s112
      %s116 = sphi 0, %s115
      %s132 = sphi 0, %s116
    $region4: #{tpu_custom_call.1} parent=1 // loop_header_branch
      %16 = sbr.rel (%p14) target = $region8
    $region5: #{tpu_custom_call.1} parent=1 // loop_body
      %s18 = ssub.s32 %s13, 1
      %s19 = ssub.s32 %s13, 2
      %s20 = sadd.s32 %s13, 1
      %s21 = ssub.s32 %s13, %s20
      %p22 = scmp.eq.s32.totalorder %s21, 0
      %s24 = sadd.s32 %s23, 1
      %s25 = scalar_select %p22, %s23, %s24
      %p28 = pneg %p22
      %p29 = scmp.eq.s32.totalorder %s13, 1
      %p30 = por %p28, %p29
      %p31 = scmp.ne.s32.totalorder %s23, %s26
      %p32 = scmp.eq.s32.totalorder %s13, 0
      %p33 = por %p31, %p32
      %p34 = scmp.ne.s32.totalorder %s23, %s26
      %p35 = scmp.eq.s32.totalorder %s18, 1
      %p36 = por %p34, %p35
      %p37 = scmp.ne.s32.totalorder %s26, %s27
      %p38 = scmp.eq.s32.totalorder %s18, 0
      %p39 = por %p37, %p38
      %p40 = scmp.ne.s32.totalorder %s26, %s27
      %p41 = scmp.eq.s32.totalorder %s19, 1
      %p42 = por %p40, %p41
      %p44 = scmp.ne.s32.totalorder %s27, %s43
      %p45 = scmp.eq.s32.totalorder %s19, 0
      %p46 = por %p44, %p45
      %s48 = sadd.s32 %s47, 1
      %p51 = scmp.eq.s32.totalorder %s13, 1
      %p52 = scmp.ne.s32.totalorder %s47, %s49
      %p53 = scmp.eq.s32.totalorder %s13, 0
      %p54 = por %p52, %p53
      %p55 = scmp.ne.s32.totalorder %s47, %s49
      %p56 = scmp.eq.s32.totalorder %s18, 1
      %p57 = por %p55, %p56
      %p58 = scmp.ne.s32.totalorder %s49, %s50
      %p59 = scmp.eq.s32.totalorder %s18, 0
      %p60 = por %p58, %p59
      %p61 = scmp.ne.s32.totalorder %s49, %s50
      %p62 = scmp.eq.s32.totalorder %s19, 1
      %p63 = por %p61, %p62
      %p65 = scmp.ne.s32.totalorder %s50, %s64
      %p66 = scmp.eq.s32.totalorder %s19, 0
      %p67 = por %p65, %p66
      %s69 = sadd.s32 %s68, 1
      %p72 = scmp.eq.s32.totalorder %s13, 1
      %p73 = scmp.ne.s32.totalorder %s68, %s70
      %p74 = scmp.eq.s32.totalorder %s13, 0
      %p75 = por %p73, %p74
      %p76 = scmp.ne.s32.totalorder %s68, %s70
      %p77 = scmp.eq.s32.totalorder %s18, 1
      %p78 = por %p76, %p77
      %p79 = scmp.ne.s32.totalorder %s70, %s71
      %p80 = scmp.eq.s32.totalorder %s18, 0
      %p81 = por %p79, %p80
      %p82 = scmp.ne.s32.totalorder %s70, %s71
      %p83 = scmp.eq.s32.totalorder %s19, 1
      %p84 = por %p82, %p83
      %p86 = scmp.ne.s32.totalorder %s71, %s85
      %p87 = scmp.eq.s32.totalorder %s19, 0
      %p88 = por %p86, %p87
      %s90 = sadd.s32 %s89, 1
      %p93 = scmp.eq.s32.totalorder %s13, 1
      %p94 = scmp.ne.s32.totalorder %s89, %s91
      %p95 = scmp.eq.s32.totalorder %s13, 0
      %p96 = por %p94, %p95
      %p97 = scmp.ne.s32.totalorder %s89, %s91
      %p98 = scmp.eq.s32.totalorder %s18, 1
      %p99 = por %p97, %p98
      %p100 = scmp.ne.s32.totalorder %s91, %s92
      %p101 = scmp.eq.s32.totalorder %s18, 0
      %p102 = por %p100, %p101
      %p103 = scmp.ne.s32.totalorder %s91, %s92
      %p104 = scmp.eq.s32.totalorder %s19, 1
      %p105 = por %p103, %p104
      %p107 = scmp.ne.s32.totalorder %s92, %s106
      %p108 = scmp.eq.s32.totalorder %s19, 0
      %p109 = por %p107, %p108
      %s110 = ssub.s32 %s13, %s20
      %p111 = scmp.eq.s32.totalorder %s110, 0
      %s113 = sadd.s32 %s112, 1
      %s114 = scalar_select %p111, %s112, %s113
      %p117 = pneg %p111
      %p118 = scmp.eq.s32.totalorder %s13, 1
      %p119 = por %p117, %p118
      %p120 = scmp.ne.s32.totalorder %s112, %s115
      %p121 = scmp.eq.s32.totalorder %s13, 0
      %p122 = por %p120, %p121
      %p123 = scmp.ne.s32.totalorder %s112, %s115
      %p124 = scmp.eq.s32.totalorder %s18, 1
      %p125 = por %p123, %p124
      %p126 = scmp.ne.s32.totalorder %s115, %s116
      %p127 = scmp.eq.s32.totalorder %s18, 0
      %p128 = por %p126, %p127
      %p129 = scmp.ne.s32.totalorder %s115, %s116
      %p130 = scmp.eq.s32.totalorder %s19, 1
      %p131 = por %p129, %p130
      %p133 = scmp.ne.s32.totalorder %s116, %s132
      %p134 = scmp.eq.s32.totalorder %s19, 0
      %p135 = por %p133, %p134
      %p136 = scmp.le.s32.totalorder 1, %s13
      %p137 = scmp.lt.s32.totalorder %s13, 3
      %p138 = pnand %p136, %p137
      %p139 = pneg %p138
      // Predicated region
      $region9: #{tpu_custom_call.1} parent=5 // pred_check
        _
      $region10: #{tpu_custom_call.1} parent=5 // pred_check_branch
        %141 = sbr.rel (%p138) target = $region12
      $region11: #{tpu_custom_call.1} parent=5 // pred_region
        %s142 = ssub.s32 %s13, 1
        // Predicated region
        $region13: #{tpu_custom_call.1} parent=11 // pred_check
          %p143 = pneg %p60
        $region14: #{tpu_custom_call.1} parent=11 // pred_check_branch
          %145 = sbr.rel (%p143) target = $region16
        $region15: #{tpu_custom_call.1} parent=11 // pred_region
          _
        $region16: #{tpu_custom_call.1} parent=11 // pred_fallthru
          _
        // Predicated region
        $region17: #{tpu_custom_call.1} parent=11 // pred_check
          %p146 = pneg %p81
        $region18: #{tpu_custom_call.1} parent=11 // pred_check_branch
          %148 = sbr.rel (%p146) target = $region20
        $region19: #{tpu_custom_call.1} parent=11 // pred_region
          _
        $region20: #{tpu_custom_call.1} parent=11 // pred_fallthru
          _
        // Predicated region
        $region21: #{tpu_custom_call.1} parent=11 // pred_check
          %p149 = pneg %p102
        $region22: #{tpu_custom_call.1} parent=11 // pred_check_branch
          %151 = sbr.rel (%p149) target = $region24
        $region23: #{tpu_custom_call.1} parent=11 // pred_region
          _
        $region24: #{tpu_custom_call.1} parent=11 // pred_fallthru
          _
      $region12: #{tpu_custom_call.1} parent=5 // pred_fallthru
        _
      %p152 = scmp.lt.s32.totalorder %s13, 2
      // Predicated region
      $region25: #{tpu_custom_call.1} parent=5 // pred_check
        %p153 = pneg %p152
      $region26: #{tpu_custom_call.1} parent=5 // pred_check_branch
        %155 = sbr.rel (%p153) target = $region28
      $region27: #{tpu_custom_call.1} parent=5 // pred_region
        // Predicated region
        $region29: #{tpu_custom_call.1} parent=27 // pred_check
          %p156 = pneg %p33
        $region30: #{tpu_custom_call.1} parent=27 // pred_check_branch
          %158 = sbr.rel (%p156) target = $region32
        $region31: #{tpu_custom_call.1} parent=27 // pred_region
          %p159 = scmp.lt.s32.totalorder %s13, 1
          %s160 = scalar_select %p159, %s13, 1
          %s161 = smul.addr %s160, 8
          %s162 = scalar_lea.vmem %s0, %s161
        $region32: #{tpu_custom_call.1} parent=27 // pred_fallthru
          _
      $region28: #{tpu_custom_call.1} parent=5 // pred_fallthru
        _
      %p163 = scmp.le.s32.totalorder 1, %s13
      %p164 = scmp.lt.s32.totalorder %s13, 3
      %p165 = pnand %p163, %p164
      %p166 = pneg %p165
      // Predicated region
      $region33: #{tpu_custom_call.1} parent=5 // pred_check
        _
      $region34: #{tpu_custom_call.1} parent=5 // pred_check_branch
        %168 = sbr.rel (%p165) target = $region36
      $region35: #{tpu_custom_call.1} parent=5 // pred_region
        %s169 = ssub.s32 %s13, 1
        %p170 = scmp.lt.s32.totalorder %s18, 1
        %s171 = scalar_select %p170, %s18, 1
        %s172 = smul.addr %s171, 8
        %s173 = scalar_lea.vmem %s0, %s172
        %p174 = pneg %p39
        %p175 = pneg %p36
        %p176 = pneg %p60
        %p177 = pneg %p57
        %p178 = pneg %p81
        %p179 = pneg %p78
        %p180 = pneg %p102
        %p181 = pneg %p99
        %p182 = pneg %p128
        %p183 = pneg %p125
        %s184 = sand.u32 %s115, 1
        %s185 = scalar_lea.sflag [#allocation4], %s184
        %s186 = sand.u32 %s115, 1
        %s187 = smul.addr %s186, 8
        %s188 = scalar_lea.vmem [#allocation3], %s187
        %p189 = scmp.lt.s32.totalorder %s18, 1
        %s190 = scalar_select %p189, %s18, 1
        %s191 = smul.addr %s190, 8
        %s192 = scalar_lea.vmem %s0, %s191
        %v193 = vld [vmem:[%s192] sm:$0xff]
        %v194 = vld [vmem:[%s1] sm:$0xff]
        %v195 = vld [vmem:[%s1 + $0x8] sm:$0xff]
        %v196 = vld [vmem:[%s1 + $0x10] sm:$0xf]
        %v197 = vld [vmem:[%s1 + $0x18] sm:$0xff]
        %v198 = vld [vmem:[%s1 + $0x20] sm:$0xff]
        %v199 = vld [vmem:[%s1 + $0x28] sm:$0xf]
        %v200 = vld [vmem:[%s1 + $0x30] sm:$0xff]
        %v201 = vld [vmem:[%s1 + $0x38] sm:$0xff]
        %v202 = vld [vmem:[%s1 + $0x40] sm:$0xf]
        %v203 = vld [vmem:[%s1 + $0x48] sm:$0xff]
        %v204 = vld [vmem:[%s1 + $0x50] sm:$0xff]
        %v205 = vld [vmem:[%s1 + $0x58] sm:$0xf]
        %v206 = vld [vmem:[%s2] sm:$0xff]
        %v207 = vld [vmem:[%s2 + $0x8] sm:$0xff]
        %v208 = vld [vmem:[%s2 + $0x10] sm:$0xf]
        %v209 = vld [vmem:[%s2 + $0x18] sm:$0xff]
        %v210 = vld [vmem:[%s2 + $0x20] sm:$0xff]
        %v211 = vld [vmem:[%s2 + $0x28] sm:$0xf]
        %v212 = vld [vmem:[%s2 + $0x30] sm:$0xff]
        %v213 = vld [vmem:[%s2 + $0x38] sm:$0xff]
        %v214 = vld [vmem:[%s2 + $0x40] sm:$0xf]
        %v215 = vld [vmem:[%s2 + $0x48] sm:$0xff]
        %v216 = vld [vmem:[%s2 + $0x50] sm:$0xff]
        %v217 = vld [vmem:[%s2 + $0x58] sm:$0xf]
        %v218 = vperm.slane %v193, 0
        %v219 = vlaneseq
        %v220 = vshrl.u32 %v219, 7
        %222 = vset.pattern.permute.xlu0 %v220
        %223 = vperm.xlu0 %222, %v218
        %v224 = vpop.permute.xlu0 %223
        %v225 = vperm.slane %v193, 1
        %v226 = vlaneseq
        %v227 = vshrl.u32 %v226, 7
        %229 = vset.pattern.permute.xlu0 %v227
        %230 = vperm.xlu0 %229, %v225
        %v231 = vpop.permute.xlu0 %230
        %v232 = vperm.slane %v193, 2
        %v233 = vlaneseq
        %v234 = vshrl.u32 %v233, 7
        %236 = vset.pattern.permute.xlu0 %v234
        %237 = vperm.xlu0 %236, %v232
        %v238 = vpop.permute.xlu0 %237
        %v239 = vperm.slane %v193, 3
        %v240 = vlaneseq
        %v241 = vshrl.u32 %v240, 7
        %243 = vset.pattern.permute.xlu0 %v241
        %244 = vperm.xlu0 %243, %v239
        %v245 = vpop.permute.xlu0 %244
        %v246 = vperm.slane %v193, 4
        %v247 = vlaneseq
        %v248 = vshrl.u32 %v247, 7
        %250 = vset.pattern.permute.xlu0 %v248
        %251 = vperm.xlu0 %250, %v246
        %v252 = vpop.permute.xlu0 %251
        %v253 = vperm.slane %v193, 5
        %v254 = vlaneseq
        %v255 = vshrl.u32 %v254, 7
        %257 = vset.pattern.permute.xlu0 %v255
        %258 = vperm.xlu0 %257, %v253
        %v259 = vpop.permute.xlu0 %258
        %v260 = vperm.slane %v193, 6
        %v261 = vlaneseq
        %v262 = vshrl.u32 %v261, 7
        %264 = vset.pattern.permute.xlu0 %v262
        %265 = vperm.xlu0 %264, %v260
        %v266 = vpop.permute.xlu0 %265
        %v267 = vperm.slane %v193, 7
        %v268 = vlaneseq
        %v269 = vshrl.u32 %v268, 7
        %271 = vset.pattern.permute.xlu0 %v269
        %272 = vperm.xlu0 %271, %v267
        %v273 = vpop.permute.xlu0 %272
        %v274 = vperm.slane %v224, 0
        %v275 = vperm.slane %v224, 1
        %v276 = vperm.slane %v224, 2
        %v277 = vperm.slane %v224, 3
        %v278 = vperm.slane %v231, 0
        %v279 = vperm.slane %v231, 1
        %v280 = vperm.slane %v231, 2
        %v281 = vperm.slane %v231, 3
        %v282 = vperm.slane %v238, 0
        %v283 = vperm.slane %v238, 1
        %v284 = vperm.slane %v238, 2
        %v285 = vperm.slane %v238, 3
        %v286 = vperm.slane %v245, 0
        %v287 = vperm.slane %v245, 1
        %v288 = vperm.slane %v245, 2
        %v289 = vperm.slane %v245, 3
        %v290 = vperm.slane %v252, 0
        %v291 = vperm.slane %v252, 1
        %v292 = vperm.slane %v252, 2
        %v293 = vperm.slane %v252, 3
        %v294 = vperm.slane %v259, 0
        %v295 = vperm.slane %v259, 1
        %v296 = vperm.slane %v259, 2
        %v297 = vperm.slane %v259, 3
        %v298 = vperm.slane %v266, 0
        %v299 = vperm.slane %v266, 1
        %v300 = vperm.slane %v266, 2
        %v301 = vperm.slane %v266, 3
        %v302 = vperm.slane %v273, 0
        %v303 = vperm.slane %v273, 1
        %v304 = vperm.slane %v273, 2
        %v305 = vperm.slane %v273, 3
        %v306 = vmul.f32 %v274, %v206
        %v307 = vmul.f32 %v274, %v207
        %v308 = vmul.f32 %v274, %v208
        %v309 = vmul.f32 %v275, %v209
        %v310 = vmul.f32 %v275, %v210
        %v311 = vmul.f32 %v275, %v211
        %v312 = vmul.f32 %v276, %v212
        %v313 = vmul.f32 %v276, %v213
        %v314 = vmul.f32 %v276, %v214
        %v315 = vmul.f32 %v277, %v215
        %v316 = vmul.f32 %v277, %v216
        %v317 = vmul.f32 %v277, %v217
        %v318 = vmul.f32 %v278, %v206
        %v319 = vmul.f32 %v278, %v207
        %v320 = vmul.f32 %v278, %v208
        %v321 = vmul.f32 %v279, %v209
        %v322 = vmul.f32 %v279, %v210
        %v323 = vmul.f32 %v279, %v211
        %v324 = vmul.f32 %v280, %v212
        %v325 = vmul.f32 %v280, %v213
        %v326 = vmul.f32 %v280, %v214
        %v327 = vmul.f32 %v281, %v215
        %v328 = vmul.f32 %v281, %v216
        %v329 = vmul.f32 %v281, %v217
        %v330 = vmul.f32 %v282, %v206
        %v331 = vmul.f32 %v282, %v207
        %v332 = vmul.f32 %v282, %v208
        %v333 = vmul.f32 %v283, %v209
        %v334 = vmul.f32 %v283, %v210
        %v335 = vmul.f32 %v283, %v211
        %v336 = vmul.f32 %v284, %v212
        %v337 = vmul.f32 %v284, %v213
        %v338 = vmul.f32 %v284, %v214
        %v339 = vmul.f32 %v285, %v215
        %v340 = vmul.f32 %v285, %v216
        %v341 = vmul.f32 %v285, %v217
        %v342 = vmul.f32 %v286, %v206
        %v343 = vmul.f32 %v286, %v207
        %v344 = vmul.f32 %v286, %v208
        %v345 = vmul.f32 %v287, %v209
        %v346 = vmul.f32 %v287, %v210
        %v347 = vmul.f32 %v287, %v211
        %v348 = vmul.f32 %v288, %v212
        %v349 = vmul.f32 %v288, %v213
        %v350 = vmul.f32 %v288, %v214
        %v351 = vmul.f32 %v289, %v215
        %v352 = vmul.f32 %v289, %v216
        %v353 = vmul.f32 %v289, %v217
        %v354 = vmul.f32 %v290, %v206
        %v355 = vmul.f32 %v290, %v207
        %v356 = vmul.f32 %v290, %v208
        %v357 = vmul.f32 %v291, %v209
        %v358 = vmul.f32 %v291, %v210
        %v359 = vmul.f32 %v291, %v211
        %v360 = vmul.f32 %v292, %v212
        %v361 = vmul.f32 %v292, %v213
        %v362 = vmul.f32 %v292, %v214
        %v363 = vmul.f32 %v293, %v215
        %v364 = vmul.f32 %v293, %v216
        %v365 = vmul.f32 %v293, %v217
        %v366 = vmul.f32 %v294, %v206
        %v367 = vmul.f32 %v294, %v207
        %v368 = vmul.f32 %v294, %v208
        %v369 = vmul.f32 %v295, %v209
        %v370 = vmul.f32 %v295, %v210
        %v371 = vmul.f32 %v295, %v211
        %v372 = vmul.f32 %v296, %v212
        %v373 = vmul.f32 %v296, %v213
        %v374 = vmul.f32 %v296, %v214
        %v375 = vmul.f32 %v297, %v215
        %v376 = vmul.f32 %v297, %v216
        %v377 = vmul.f32 %v297, %v217
        %v378 = vmul.f32 %v298, %v206
        %v379 = vmul.f32 %v298, %v207
        %v380 = vmul.f32 %v298, %v208
        %v381 = vmul.f32 %v299, %v209
        %v382 = vmul.f32 %v299, %v210
        %v383 = vmul.f32 %v299, %v211
        %v384 = vmul.f32 %v300, %v212
        %v385 = vmul.f32 %v300, %v213
        %v386 = vmul.f32 %v300, %v214
        %v387 = vmul.f32 %v301, %v215
        %v388 = vmul.f32 %v301, %v216
        %v389 = vmul.f32 %v301, %v217
        %v390 = vmul.f32 %v302, %v206
        %v391 = vmul.f32 %v302, %v207
        %v392 = vmul.f32 %v302, %v208
        %v393 = vmul.f32 %v303, %v209
        %v394 = vmul.f32 %v303, %v210
        %v395 = vmul.f32 %v303, %v211
        %v396 = vmul.f32 %v304, %v212
        %v397 = vmul.f32 %v304, %v213
        %v398 = vmul.f32 %v304, %v214
        %v399 = vmul.f32 %v305, %v215
        %v400 = vmul.f32 %v305, %v216
        %v401 = vmul.f32 %v305, %v217
        %v402 = vadd.f32 %v194, %v306
        %v403 = vadd.f32 %v195, %v307
        %v404 = vadd.f32 %v196, %v308
        %v405 = vadd.f32 %v197, %v309
        %v406 = vadd.f32 %v198, %v310
        %v407 = vadd.f32 %v199, %v311
        %v408 = vadd.f32 %v200, %v312
        %v409 = vadd.f32 %v201, %v313
        %v410 = vadd.f32 %v202, %v314
        %v411 = vadd.f32 %v203, %v315
        %v412 = vadd.f32 %v204, %v316
        %v413 = vadd.f32 %v205, %v317
        %v414 = vadd.f32 %v194, %v318
        %v415 = vadd.f32 %v195, %v319
        %v416 = vadd.f32 %v196, %v320
        %v417 = vadd.f32 %v197, %v321
        %v418 = vadd.f32 %v198, %v322
        %v419 = vadd.f32 %v199, %v323
        %v420 = vadd.f32 %v200, %v324
        %v421 = vadd.f32 %v201, %v325
        %v422 = vadd.f32 %v202, %v326
        %v423 = vadd.f32 %v203, %v327
        %v424 = vadd.f32 %v204, %v328
        %v425 = vadd.f32 %v205, %v329
        %v426 = vadd.f32 %v194, %v330
        %v427 = vadd.f32 %v195, %v331
        %v428 = vadd.f32 %v196, %v332
        %v429 = vadd.f32 %v197, %v333
        %v430 = vadd.f32 %v198, %v334
        %v431 = vadd.f32 %v199, %v335
        %v432 = vadd.f32 %v200, %v336
        %v433 = vadd.f32 %v201, %v337
        %v434 = vadd.f32 %v202, %v338
        %v435 = vadd.f32 %v203, %v339
        %v436 = vadd.f32 %v204, %v340
        %v437 = vadd.f32 %v205, %v341
        %v438 = vadd.f32 %v194, %v342
        %v439 = vadd.f32 %v195, %v343
        %v440 = vadd.f32 %v196, %v344
        %v441 = vadd.f32 %v197, %v345
        %v442 = vadd.f32 %v198, %v346
        %v443 = vadd.f32 %v199, %v347
        %v444 = vadd.f32 %v200, %v348
        %v445 = vadd.f32 %v201, %v349
        %v446 = vadd.f32 %v202, %v350
        %v447 = vadd.f32 %v203, %v351
        %v448 = vadd.f32 %v204, %v352
        %v449 = vadd.f32 %v205, %v353
        %v450 = vadd.f32 %v194, %v354
        %v451 = vadd.f32 %v195, %v355
        %v452 = vadd.f32 %v196, %v356
        %v453 = vadd.f32 %v197, %v357
        %v454 = vadd.f32 %v198, %v358
        %v455 = vadd.f32 %v199, %v359
        %v456 = vadd.f32 %v200, %v360
        %v457 = vadd.f32 %v201, %v361
        %v458 = vadd.f32 %v202, %v362
        %v459 = vadd.f32 %v203, %v363
        %v460 = vadd.f32 %v204, %v364
        %v461 = vadd.f32 %v205, %v365
        %v462 = vadd.f32 %v194, %v366
        %v463 = vadd.f32 %v195, %v367
        %v464 = vadd.f32 %v196, %v368
        %v465 = vadd.f32 %v197, %v369
        %v466 = vadd.f32 %v198, %v370
        %v467 = vadd.f32 %v199, %v371
        %v468 = vadd.f32 %v200, %v372
        %v469 = vadd.f32 %v201, %v373
        %v470 = vadd.f32 %v202, %v374
        %v471 = vadd.f32 %v203, %v375
        %v472 = vadd.f32 %v204, %v376
        %v473 = vadd.f32 %v205, %v377
        %v474 = vadd.f32 %v194, %v378
        %v475 = vadd.f32 %v195, %v379
        %v476 = vadd.f32 %v196, %v380
        %v477 = vadd.f32 %v197, %v381
        %v478 = vadd.f32 %v198, %v382
        %v479 = vadd.f32 %v199, %v383
        %v480 = vadd.f32 %v200, %v384
        %v481 = vadd.f32 %v201, %v385
        %v482 = vadd.f32 %v202, %v386
        %v483 = vadd.f32 %v203, %v387
        %v484 = vadd.f32 %v204, %v388
        %v485 = vadd.f32 %v205, %v389
        %v486 = vadd.f32 %v194, %v390
        %v487 = vadd.f32 %v195, %v391
        %v488 = vadd.f32 %v196, %v392
        %v489 = vadd.f32 %v197, %v393
        %v490 = vadd.f32 %v198, %v394
        %v491 = vadd.f32 %v199, %v395
        %v492 = vadd.f32 %v200, %v396
        %v493 = vadd.f32 %v201, %v397
        %v494 = vadd.f32 %v202, %v398
        %v495 = vadd.f32 %v203, %v399
        %v496 = vadd.f32 %v204, %v400
        %v497 = vadd.f32 %v205, %v401
        %vm498 = vcmask 162816
        %v500 = vsel %vm498, %v402, 0
        %v503 = vsel %vm498, %v403, 0
        %v506 = vsel %vm498, %v404, 0
        %vm508 = vcmask 1043456
        %v510 = vsel %vm508, %v407, 0
        %512 = vmatpush.msra.mxu0 0.0
        %513 = vmatpush.msra.mxu0 0.0
        %514 = vmatpush.msra.mxu0 0.0
        %515 = vmatpush.msra.mxu0 0.0
        %516 = vmatpush.msra.mxu0 0.0
        %517 = vmatpush.msra.mxu0 0.0
        %518 = vmatpush.msra.mxu0 0.0
        %519 = vmatpush.msra.mxu0 0.0
        %520 = vmatpush.msra.mxu0 0.0
        %521 = vmatpush.msra.mxu0 0.0
        %522 = vmatpush.msra.mxu0 0.0
        %523 = vmatpush.msra.mxu0 0.0
        %524 = vmatpush.msra.mxu0 0.0
        %525 = vmatpush.msra.mxu0 %v510
        %526 = vmatpush.msra.mxu0 %v406
        %527 = vmatpush.msra.mxu0 %v405
        %528 = vmatmul.f32.gmra.mxu0 %v500
        %v529 = vpop.f32.mrf.mxu0
        %v530 = vadd.f32 0.0, %v529
        %531 = vmatmul.f32.gmra.mxu0 %v503
        %v532 = vpop.f32.mrf.mxu0
        %v533 = vadd.f32 0.0, %v532
        %534 = vmatmul.f32.gmra.mxu0 %v506
        %v535 = vpop.f32.mrf.mxu0
        %v536 = vadd.f32 0.0, %v535
        %537 = vdwg.mxu0
        %v539 = vsel %vm498, %v408, 0
        %v542 = vsel %vm498, %v409, 0
        %v545 = vsel %vm498, %v410, 0
        %v548 = vsel %vm508, %v413, 0
        %550 = vmatpush.msra.mxu0 0.0
        %551 = vmatpush.msra.mxu0 0.0
        %552 = vmatpush.msra.mxu0 0.0
        %553 = vmatpush.msra.mxu0 0.0
        %554 = vmatpush.msra.mxu0 0.0
        %555 = vmatpush.msra.mxu0 0.0
        %556 = vmatpush.msra.mxu0 0.0
        %557 = vmatpush.msra.mxu0 0.0
        %558 = vmatpush.msra.mxu0 0.0
        %559 = vmatpush.msra.mxu0 0.0
        %560 = vmatpush.msra.mxu0 0.0
        %561 = vmatpush.msra.mxu0 0.0
        %562 = vmatpush.msra.mxu0 0.0
        %563 = vmatpush.msra.mxu0 %v548
        %564 = vmatpush.msra.mxu0 %v412
        %565 = vmatpush.msra.mxu0 %v411
        %566 = vmatmul.f32.gmra.mxu0 %v539
        %v567 = vpop.f32.mrf.mxu0
        %v568 = vadd.f32 0.0, %v567
        %569 = vmatmul.f32.gmra.mxu0 %v542
        %v570 = vpop.f32.mrf.mxu0
        %v571 = vadd.f32 0.0, %v570
        %572 = vmatmul.f32.gmra.mxu0 %v545
        %v573 = vpop.f32.mrf.mxu0
        %v574 = vadd.f32 0.0, %v573
        %575 = vdwg.mxu0
        %v577 = vsel %vm498, %v414, 0
        %v580 = vsel %vm498, %v415, 0
        %v583 = vsel %vm498, %v416, 0
        %v586 = vsel %vm508, %v419, 0
        %588 = vmatpush.msra.mxu0 0.0
        %589 = vmatpush.msra.mxu0 0.0
        %590 = vmatpush.msra.mxu0 0.0
        %591 = vmatpush.msra.mxu0 0.0
        %592 = vmatpush.msra.mxu0 0.0
        %593 = vmatpush.msra.mxu0 0.0
        %594 = vmatpush.msra.mxu0 0.0
        %595 = vmatpush.msra.mxu0 0.0
        %596 = vmatpush.msra.mxu0 0.0
        %597 = vmatpush.msra.mxu0 0.0
        %598 = vmatpush.msra.mxu0 0.0
        %599 = vmatpush.msra.mxu0 0.0
        %600 = vmatpush.msra.mxu0 0.0
        %601 = vmatpush.msra.mxu0 %v586
        %602 = vmatpush.msra.mxu0 %v418
        %603 = vmatpush.msra.mxu0 %v417
        %604 = vmatmul.f32.gmra.mxu0 %v577
        %v605 = vpop.f32.mrf.mxu0
        %v606 = vadd.f32 0.0, %v605
        %607 = vmatmul.f32.gmra.mxu0 %v580
        %v608 = vpop.f32.mrf.mxu0
        %v609 = vadd.f32 0.0, %v608
        %610 = vmatmul.f32.gmra.mxu0 %v583
        %v611 = vpop.f32.mrf.mxu0
        %v612 = vadd.f32 0.0, %v611
        %613 = vdwg.mxu0
        %v615 = vsel %vm498, %v420, 0
        %v618 = vsel %vm498, %v421, 0
        %v621 = vsel %vm498, %v422, 0
        %v624 = vsel %vm508, %v425, 0
        %626 = vmatpush.msra.mxu0 0.0
        %627 = vmatpush.msra.mxu0 0.0
        %628 = vmatpush.msra.mxu0 0.0
        %629 = vmatpush.msra.mxu0 0.0
        %630 = vmatpush.msra.mxu0 0.0
        %631 = vmatpush.msra.mxu0 0.0
        %632 = vmatpush.msra.mxu0 0.0
        %633 = vmatpush.msra.mxu0 0.0
        %634 = vmatpush.msra.mxu0 0.0
        %635 = vmatpush.msra.mxu0 0.0
        %636 = vmatpush.msra.mxu0 0.0
        %637 = vmatpush.msra.mxu0 0.0
        %638 = vmatpush.msra.mxu0 0.0
        %639 = vmatpush.msra.mxu0 %v624
        %640 = vmatpush.msra.mxu0 %v424
        %641 = vmatpush.msra.mxu0 %v423
        %642 = vmatmul.f32.gmra.mxu0 %v615
        %v643 = vpop.f32.mrf.mxu0
        %v644 = vadd.f32 0.0, %v643
        %645 = vmatmul.f32.gmra.mxu0 %v618
        %v646 = vpop.f32.mrf.mxu0
        %v647 = vadd.f32 0.0, %v646
        %648 = vmatmul.f32.gmra.mxu0 %v621
        %v649 = vpop.f32.mrf.mxu0
        %v650 = vadd.f32 0.0, %v649
        %651 = vdwg.mxu0
        %v653 = vsel %vm498, %v426, 0
        %v656 = vsel %vm498, %v427, 0
        %v659 = vsel %vm498, %v428, 0
        %v662 = vsel %vm508, %v431, 0
        %664 = vmatpush.msra.mxu0 0.0
        %665 = vmatpush.msra.mxu0 0.0
        %666 = vmatpush.msra.mxu0 0.0
        %667 = vmatpush.msra.mxu0 0.0
        %668 = vmatpush.msra.mxu0 0.0
        %669 = vmatpush.msra.mxu0 0.0
        %670 = vmatpush.msra.mxu0 0.0
        %671 = vmatpush.msra.mxu0 0.0
        %672 = vmatpush.msra.mxu0 0.0
        %673 = vmatpush.msra.mxu0 0.0
        %674 = vmatpush.msra.mxu0 0.0
        %675 = vmatpush.msra.mxu0 0.0
        %676 = vmatpush.msra.mxu0 0.0
        %677 = vmatpush.msra.mxu0 %v662
        %678 = vmatpush.msra.mxu0 %v430
        %679 = vmatpush.msra.mxu0 %v429
        %680 = vmatmul.f32.gmra.mxu0 %v653
        %v681 = vpop.f32.mrf.mxu0
        %v682 = vadd.f32 0.0, %v681
        %683 = vmatmul.f32.gmra.mxu0 %v656
        %v684 = vpop.f32.mrf.mxu0
        %v685 = vadd.f32 0.0, %v684
        %686 = vmatmul.f32.gmra.mxu0 %v659
        %v687 = vpop.f32.mrf.mxu0
        %v688 = vadd.f32 0.0, %v687
        %689 = vdwg.mxu0
        %v691 = vsel %vm498, %v432, 0
        %v694 = vsel %vm498, %v433, 0
        %v697 = vsel %vm498, %v434, 0
        %v700 = vsel %vm508, %v437, 0
        %702 = vmatpush.msra.mxu0 0.0
        %703 = vmatpush.msra.mxu0 0.0
        %704 = vmatpush.msra.mxu0 0.0
        %705 = vmatpush.msra.mxu0 0.0
        %706 = vmatpush.msra.mxu0 0.0
        %707 = vmatpush.msra.mxu0 0.0
        %708 = vmatpush.msra.mxu0 0.0
        %709 = vmatpush.msra.mxu0 0.0
        %710 = vmatpush.msra.mxu0 0.0
        %711 = vmatpush.msra.mxu0 0.0
        %712 = vmatpush.msra.mxu0 0.0
        %713 = vmatpush.msra.mxu0 0.0
        %714 = vmatpush.msra.mxu0 0.0
        %715 = vmatpush.msra.mxu0 %v700
        %716 = vmatpush.msra.mxu0 %v436
        %717 = vmatpush.msra.mxu0 %v435
        %718 = vmatmul.f32.gmra.mxu0 %v691
        %v719 = vpop.f32.mrf.mxu0
        %v720 = vadd.f32 0.0, %v719
        %721 = vmatmul.f32.gmra.mxu0 %v694
        %v722 = vpop.f32.mrf.mxu0
        %v723 = vadd.f32 0.0, %v722
        %724 = vmatmul.f32.gmra.mxu0 %v697
        %v725 = vpop.f32.mrf.mxu0
        %v726 = vadd.f32 0.0, %v725
        %727 = vdwg.mxu0
        %v729 = vsel %vm498, %v438, 0
        %v732 = vsel %vm498, %v439, 0
        %v735 = vsel %vm498, %v440, 0
        %v738 = vsel %vm508, %v443, 0
        %740 = vmatpush.msra.mxu0 0.0
        %741 = vmatpush.msra.mxu0 0.0
        %742 = vmatpush.msra.mxu0 0.0
        %743 = vmatpush.msra.mxu0 0.0
        %744 = vmatpush.msra.mxu0 0.0
        %745 = vmatpush.msra.mxu0 0.0
        %746 = vmatpush.msra.mxu0 0.0
        %747 = vmatpush.msra.mxu0 0.0
        %748 = vmatpush.msra.mxu0 0.0
        %749 = vmatpush.msra.mxu0 0.0
        %750 = vmatpush.msra.mxu0 0.0
        %751 = vmatpush.msra.mxu0 0.0
        %752 = vmatpush.msra.mxu0 0.0
        %753 = vmatpush.msra.mxu0 %v738
        %754 = vmatpush.msra.mxu0 %v442
        %755 = vmatpush.msra.mxu0 %v441
        %756 = vmatmul.f32.gmra.mxu0 %v729
        %v757 = vpop.f32.mrf.mxu0
        %v758 = vadd.f32 0.0, %v757
        %759 = vmatmul.f32.gmra.mxu0 %v732
        %v760 = vpop.f32.mrf.mxu0
        %v761 = vadd.f32 0.0, %v760
        %762 = vmatmul.f32.gmra.mxu0 %v735
        %v763 = vpop.f32.mrf.mxu0
        %v764 = vadd.f32 0.0, %v763
        %765 = vdwg.mxu0
        %v767 = vsel %vm498, %v444, 0
        %v770 = vsel %vm498, %v445, 0
        %v773 = vsel %vm498, %v446, 0
        %v776 = vsel %vm508, %v449, 0
        %778 = vmatpush.msra.mxu0 0.0
        %779 = vmatpush.msra.mxu0 0.0
        %780 = vmatpush.msra.mxu0 0.0
        %781 = vmatpush.msra.mxu0 0.0
        %782 = vmatpush.msra.mxu0 0.0
        %783 = vmatpush.msra.mxu0 0.0
        %784 = vmatpush.msra.mxu0 0.0
        %785 = vmatpush.msra.mxu0 0.0
        %786 = vmatpush.msra.mxu0 0.0
        %787 = vmatpush.msra.mxu0 0.0
        %788 = vmatpush.msra.mxu0 0.0
        %789 = vmatpush.msra.mxu0 0.0
        %790 = vmatpush.msra.mxu0 0.0
        %791 = vmatpush.msra.mxu0 %v776
        %792 = vmatpush.msra.mxu0 %v448
        %793 = vmatpush.msra.mxu0 %v447
        %794 = vmatmul.f32.gmra.mxu0 %v767
        %v795 = vpop.f32.mrf.mxu0
        %v796 = vadd.f32 0.0, %v795
        %797 = vmatmul.f32.gmra.mxu0 %v770
        %v798 = vpop.f32.mrf.mxu0
        %v799 = vadd.f32 0.0, %v798
        %800 = vmatmul.f32.gmra.mxu0 %v773
        %v801 = vpop.f32.mrf.mxu0
        %v802 = vadd.f32 0.0, %v801
        %803 = vdwg.mxu0
        %v805 = vsel %vm498, %v450, 0
        %v808 = vsel %vm498, %v451, 0
        %v811 = vsel %vm498, %v452, 0
        %v814 = vsel %vm508, %v455, 0
        %816 = vmatpush.msra.mxu0 0.0
        %817 = vmatpush.msra.mxu0 0.0
        %818 = vmatpush.msra.mxu0 0.0
        %819 = vmatpush.msra.mxu0 0.0
        %820 = vmatpush.msra.mxu0 0.0
        %821 = vmatpush.msra.mxu0 0.0
        %822 = vmatpush.msra.mxu0 0.0
        %823 = vmatpush.msra.mxu0 0.0
        %824 = vmatpush.msra.mxu0 0.0
        %825 = vmatpush.msra.mxu0 0.0
        %826 = vmatpush.msra.mxu0 0.0
        %827 = vmatpush.msra.mxu0 0.0
        %828 = vmatpush.msra.mxu0 0.0
        %829 = vmatpush.msra.mxu0 %v814
        %830 = vmatpush.msra.mxu0 %v454
        %831 = vmatpush.msra.mxu0 %v453
        %832 = vmatmul.f32.gmra.mxu0 %v805
        %v833 = vpop.f32.mrf.mxu0
        %v834 = vadd.f32 0.0, %v833
        %835 = vmatmul.f32.gmra.mxu0 %v808
        %v836 = vpop.f32.mrf.mxu0
        %v837 = vadd.f32 0.0, %v836
        %838 = vmatmul.f32.gmra.mxu0 %v811
        %v839 = vpop.f32.mrf.mxu0
        %v840 = vadd.f32 0.0, %v839
        %841 = vdwg.mxu0
        %v843 = vsel %vm498, %v456, 0
        %v846 = vsel %vm498, %v457, 0
        %v849 = vsel %vm498, %v458, 0
        %v852 = vsel %vm508, %v461, 0
        %854 = vmatpush.msra.mxu0 0.0
        %855 = vmatpush.msra.mxu0 0.0
        %856 = vmatpush.msra.mxu0 0.0
        %857 = vmatpush.msra.mxu0 0.0
        %858 = vmatpush.msra.mxu0 0.0
        %859 = vmatpush.msra.mxu0 0.0
        %860 = vmatpush.msra.mxu0 0.0
        %861 = vmatpush.msra.mxu0 0.0
        %862 = vmatpush.msra.mxu0 0.0
        %863 = vmatpush.msra.mxu0 0.0
        %864 = vmatpush.msra.mxu0 0.0
        %865 = vmatpush.msra.mxu0 0.0
        %866 = vmatpush.msra.mxu0 0.0
        %867 = vmatpush.msra.mxu0 %v852
        %868 = vmatpush.msra.mxu0 %v460
        %869 = vmatpush.msra.mxu0 %v459
        %870 = vmatmul.f32.gmra.mxu0 %v843
        %v871 = vpop.f32.mrf.mxu0
        %v872 = vadd.f32 0.0, %v871
        %873 = vmatmul.f32.gmra.mxu0 %v846
        %v874 = vpop.f32.mrf.mxu0
        %v875 = vadd.f32 0.0, %v874
        %876 = vmatmul.f32.gmra.mxu0 %v849
        %v877 = vpop.f32.mrf.mxu0
        %v878 = vadd.f32 0.0, %v877
        %879 = vdwg.mxu0
        %v881 = vsel %vm498, %v462, 0
        %v884 = vsel %vm498, %v463, 0
        %v887 = vsel %vm498, %v464, 0
        %v890 = vsel %vm508, %v467, 0
        %892 = vmatpush.msra.mxu0 0.0
        %893 = vmatpush.msra.mxu0 0.0
        %894 = vmatpush.msra.mxu0 0.0
        %895 = vmatpush.msra.mxu0 0.0
        %896 = vmatpush.msra.mxu0 0.0
        %897 = vmatpush.msra.mxu0 0.0
        %898 = vmatpush.msra.mxu0 0.0
        %899 = vmatpush.msra.mxu0 0.0
        %900 = vmatpush.msra.mxu0 0.0
        %901 = vmatpush.msra.mxu0 0.0
        %902 = vmatpush.msra.mxu0 0.0
        %903 = vmatpush.msra.mxu0 0.0
        %904 = vmatpush.msra.mxu0 0.0
        %905 = vmatpush.msra.mxu0 %v890
        %906 = vmatpush.msra.mxu0 %v466
        %907 = vmatpush.msra.mxu0 %v465
        %908 = vmatmul.f32.gmra.mxu0 %v881
        %v909 = vpop.f32.mrf.mxu0
        %v910 = vadd.f32 0.0, %v909
        %911 = vmatmul.f32.gmra.mxu0 %v884
        %v912 = vpop.f32.mrf.mxu0
        %v913 = vadd.f32 0.0, %v912
        %914 = vmatmul.f32.gmra.mxu0 %v887
        %v915 = vpop.f32.mrf.mxu0
        %v916 = vadd.f32 0.0, %v915
        %917 = vdwg.mxu0
        %v919 = vsel %vm498, %v468, 0
        %v922 = vsel %vm498, %v469, 0
        %v925 = vsel %vm498, %v470, 0
        %v928 = vsel %vm508, %v473, 0
        %930 = vmatpush.msra.mxu0 0.0
        %931 = vmatpush.msra.mxu0 0.0
        %932 = vmatpush.msra.mxu0 0.0
        %933 = vmatpush.msra.mxu0 0.0
        %934 = vmatpush.msra.mxu0 0.0
        %935 = vmatpush.msra.mxu0 0.0
        %936 = vmatpush.msra.mxu0 0.0
        %937 = vmatpush.msra.mxu0 0.0
        %938 = vmatpush.msra.mxu0 0.0
        %939 = vmatpush.msra.mxu0 0.0
        %940 = vmatpush.msra.mxu0 0.0
        %941 = vmatpush.msra.mxu0 0.0
        %942 = vmatpush.msra.mxu0 0.0
        %943 = vmatpush.msra.mxu0 %v928
        %944 = vmatpush.msra.mxu0 %v472
        %945 = vmatpush.msra.mxu0 %v471
        %946 = vmatmul.f32.gmra.mxu0 %v919
        %v947 = vpop.f32.mrf.mxu0
        %v948 = vadd.f32 0.0, %v947
        %949 = vmatmul.f32.gmra.mxu0 %v922
        %v950 = vpop.f32.mrf.mxu0
        %v951 = vadd.f32 0.0, %v950
        %952 = vmatmul.f32.gmra.mxu0 %v925
        %v953 = vpop.f32.mrf.mxu0
        %v954 = vadd.f32 0.0, %v953
        %955 = vdwg.mxu0
        %v957 = vsel %vm498, %v474, 0
        %v960 = vsel %vm498, %v475, 0
        %v963 = vsel %vm498, %v476, 0
        %v966 = vsel %vm508, %v479, 0
        %968 = vmatpush.msra.mxu0 0.0
        %969 = vmatpush.msra.mxu0 0.0
        %970 = vmatpush.msra.mxu0 0.0
        %971 = vmatpush.msra.mxu0 0.0
        %972 = vmatpush.msra.mxu0 0.0
        %973 = vmatpush.msra.mxu0 0.0
        %974 = vmatpush.msra.mxu0 0.0
        %975 = vmatpush.msra.mxu0 0.0
        %976 = vmatpush.msra.mxu0 0.0
        %977 = vmatpush.msra.mxu0 0.0
        %978 = vmatpush.msra.mxu0 0.0
        %979 = vmatpush.msra.mxu0 0.0
        %980 = vmatpush.msra.mxu0 0.0
        %981 = vmatpush.msra.mxu0 %v966
        %982 = vmatpush.msra.mxu0 %v478
        %983 = vmatpush.msra.mxu0 %v477
        %984 = vmatmul.f32.gmra.mxu0 %v957
        %v985 = vpop.f32.mrf.mxu0
        %v986 = vadd.f32 0.0, %v985
        %987 = vmatmul.f32.gmra.mxu0 %v960
        %v988 = vpop.f32.mrf.mxu0
        %v989 = vadd.f32 0.0, %v988
        %990 = vmatmul.f32.gmra.mxu0 %v963
        %v991 = vpop.f32.mrf.mxu0
        %v992 = vadd.f32 0.0, %v991
        %993 = vdwg.mxu0
        %v995 = vsel %vm498, %v480, 0
        %v998 = vsel %vm498, %v481, 0
        %v1001 = vsel %vm498, %v482, 0
        %v1004 = vsel %vm508, %v485, 0
        %1006 = vmatpush.msra.mxu0 0.0
        %1007 = vmatpush.msra.mxu0 0.0
        %1008 = vmatpush.msra.mxu0 0.0
        %1009 = vmatpush.msra.mxu0 0.0
        %1010 = vmatpush.msra.mxu0 0.0
        %1011 = vmatpush.msra.mxu0 0.0
        %1012 = vmatpush.msra.mxu0 0.0
        %1013 = vmatpush.msra.mxu0 0.0
        %1014 = vmatpush.msra.mxu0 0.0
        %1015 = vmatpush.msra.mxu0 0.0
        %1016 = vmatpush.msra.mxu0 0.0
        %1017 = vmatpush.msra.mxu0 0.0
        %1018 = vmatpush.msra.mxu0 0.0
        %1019 = vmatpush.msra.mxu0 %v1004
        %1020 = vmatpush.msra.mxu0 %v484
        %1021 = vmatpush.msra.mxu0 %v483
        %1022 = vmatmul.f32.gmra.mxu0 %v995
        %v1023 = vpop.f32.mrf.mxu0
        %v1024 = vadd.f32 0.0, %v1023
        %1025 = vmatmul.f32.gmra.mxu0 %v998
        %v1026 = vpop.f32.mrf.mxu0
        %v1027 = vadd.f32 0.0, %v1026
        %1028 = vmatmul.f32.gmra.mxu0 %v1001
        %v1029 = vpop.f32.mrf.mxu0
        %v1030 = vadd.f32 0.0, %v1029
        %1031 = vdwg.mxu0
        %v1033 = vsel %vm498, %v486, 0
        %v1036 = vsel %vm498, %v487, 0
        %v1039 = vsel %vm498, %v488, 0
        %v1042 = vsel %vm508, %v491, 0
        %1044 = vmatpush.msra.mxu0 0.0
        %1045 = vmatpush.msra.mxu0 0.0
        %1046 = vmatpush.msra.mxu0 0.0
        %1047 = vmatpush.msra.mxu0 0.0
        %1048 = vmatpush.msra.mxu0 0.0
        %1049 = vmatpush.msra.mxu0 0.0
        %1050 = vmatpush.msra.mxu0 0.0
        %1051 = vmatpush.msra.mxu0 0.0
        %1052 = vmatpush.msra.mxu0 0.0
        %1053 = vmatpush.msra.mxu0 0.0
        %1054 = vmatpush.msra.mxu0 0.0
        %1055 = vmatpush.msra.mxu0 0.0
        %1056 = vmatpush.msra.mxu0 0.0
        %1057 = vmatpush.msra.mxu0 %v1042
        %1058 = vmatpush.msra.mxu0 %v490
        %1059 = vmatpush.msra.mxu0 %v489
        %1060 = vmatmul.f32.gmra.mxu0 %v1033
        %v1061 = vpop.f32.mrf.mxu0
        %v1062 = vadd.f32 0.0, %v1061
        %1063 = vmatmul.f32.gmra.mxu0 %v1036
        %v1064 = vpop.f32.mrf.mxu0
        %v1065 = vadd.f32 0.0, %v1064
        %1066 = vmatmul.f32.gmra.mxu0 %v1039
        %v1067 = vpop.f32.mrf.mxu0
        %v1068 = vadd.f32 0.0, %v1067
        %1069 = vdwg.mxu0
        %v1071 = vsel %vm498, %v492, 0
        %v1074 = vsel %vm498, %v493, 0
        %v1077 = vsel %vm498, %v494, 0
        %v1080 = vsel %vm508, %v497, 0
        %1082 = vmatpush.msra.mxu0 0.0
        %1083 = vmatpush.msra.mxu0 0.0
        %1084 = vmatpush.msra.mxu0 0.0
        %1085 = vmatpush.msra.mxu0 0.0
        %1086 = vmatpush.msra.mxu0 0.0
        %1087 = vmatpush.msra.mxu0 0.0
        %1088 = vmatpush.msra.mxu0 0.0
        %1089 = vmatpush.msra.mxu0 0.0
        %1090 = vmatpush.msra.mxu0 0.0
        %1091 = vmatpush.msra.mxu0 0.0
        %1092 = vmatpush.msra.mxu0 0.0
        %1093 = vmatpush.msra.mxu0 0.0
        %1094 = vmatpush.msra.mxu0 0.0
        %1095 = vmatpush.msra.mxu0 %v1080
        %1096 = vmatpush.msra.mxu0 %v496
        %1097 = vmatpush.msra.mxu0 %v495
        %1098 = vmatmul.f32.gmra.mxu0 %v1071
        %v1099 = vpop.f32.mrf.mxu0
        %v1100 = vadd.f32 0.0, %v1099
        %1101 = vmatmul.f32.gmra.mxu0 %v1074
        %v1102 = vpop.f32.mrf.mxu0
        %v1103 = vadd.f32 0.0, %v1102
        %1104 = vmatmul.f32.gmra.mxu0 %v1077
        %v1105 = vpop.f32.mrf.mxu0
        %v1106 = vadd.f32 0.0, %v1105
        %1107 = vdwg.mxu0
        %v1109 = vsel %vm498, %v530, 0
        %v1112 = vsel %vm498, %v533, 0
        %v1115 = vsel %vm498, %v536, 0
        %v1118 = vsel %vm508, %v574, 0
        %1120 = vmatpush.msra.mxu0 0.0
        %1121 = vmatpush.msra.mxu0 0.0
        %1122 = vmatpush.msra.mxu0 0.0
        %1123 = vmatpush.msra.mxu0 0.0
        %1124 = vmatpush.msra.mxu0 0.0
        %1125 = vmatpush.msra.mxu0 0.0
        %1126 = vmatpush.msra.mxu0 0.0
        %1127 = vmatpush.msra.mxu0 0.0
        %1128 = vmatpush.msra.mxu0 0.0
        %1129 = vmatpush.msra.mxu0 0.0
        %1130 = vmatpush.msra.mxu0 0.0
        %1131 = vmatpush.msra.mxu0 0.0
        %1132 = vmatpush.msra.mxu0 0.0
        %1133 = vmatpush.msra.mxu0 %v1118
        %1134 = vmatpush.msra.mxu0 %v571
        %1135 = vmatpush.msra.mxu0 %v568
        %1136 = vmatmul.f32.gmra.mxu0 %v1109
        %v1137 = vpop.f32.mrf.mxu0
        %v1138 = vadd.f32 0.0, %v1137
        %1139 = vmatmul.f32.gmra.mxu0 %v1112
        %v1140 = vpop.f32.mrf.mxu0
        %v1141 = vadd.f32 0.0, %v1140
        %1142 = vmatmul.f32.gmra.mxu0 %v1115
        %v1143 = vpop.f32.mrf.mxu0
        %v1144 = vadd.f32 0.0, %v1143
        %1145 = vdwg.mxu0
        %v1147 = vsel %vm498, %v606, 0
        %v1150 = vsel %vm498, %v609, 0
        %v1153 = vsel %vm498, %v612, 0
        %v1156 = vsel %vm508, %v650, 0
        %1158 = vmatpush.msra.mxu0 0.0
        %1159 = vmatpush.msra.mxu0 0.0
        %1160 = vmatpush.msra.mxu0 0.0
        %1161 = vmatpush.msra.mxu0 0.0
        %1162 = vmatpush.msra.mxu0 0.0
        %1163 = vmatpush.msra.mxu0 0.0
        %1164 = vmatpush.msra.mxu0 0.0
        %1165 = vmatpush.msra.mxu0 0.0
        %1166 = vmatpush.msra.mxu0 0.0
        %1167 = vmatpush.msra.mxu0 0.0
        %1168 = vmatpush.msra.mxu0 0.0
        %1169 = vmatpush.msra.mxu0 0.0
        %1170 = vmatpush.msra.mxu0 0.0
        %1171 = vmatpush.msra.mxu0 %v1156
        %1172 = vmatpush.msra.mxu0 %v647
        %1173 = vmatpush.msra.mxu0 %v644
        %1174 = vmatmul.f32.gmra.mxu0 %v1147
        %v1175 = vpop.f32.mrf.mxu0
        %v1176 = vadd.f32 0.0, %v1175
        %1177 = vmatmul.f32.gmra.mxu0 %v1150
        %v1178 = vpop.f32.mrf.mxu0
        %v1179 = vadd.f32 0.0, %v1178
        %1180 = vmatmul.f32.gmra.mxu0 %v1153
        %v1181 = vpop.f32.mrf.mxu0
        %v1182 = vadd.f32 0.0, %v1181
        %1183 = vdwg.mxu0
        %v1185 = vsel %vm498, %v682, 0
        %v1188 = vsel %vm498, %v685, 0
        %v1191 = vsel %vm498, %v688, 0
        %v1194 = vsel %vm508, %v726, 0
        %1196 = vmatpush.msra.mxu0 0.0
        %1197 = vmatpush.msra.mxu0 0.0
        %1198 = vmatpush.msra.mxu0 0.0
        %1199 = vmatpush.msra.mxu0 0.0
        %1200 = vmatpush.msra.mxu0 0.0
        %1201 = vmatpush.msra.mxu0 0.0
        %1202 = vmatpush.msra.mxu0 0.0
        %1203 = vmatpush.msra.mxu0 0.0
        %1204 = vmatpush.msra.mxu0 0.0
        %1205 = vmatpush.msra.mxu0 0.0
        %1206 = vmatpush.msra.mxu0 0.0
        %1207 = vmatpush.msra.mxu0 0.0
        %1208 = vmatpush.msra.mxu0 0.0
        %1209 = vmatpush.msra.mxu0 %v1194
        %1210 = vmatpush.msra.mxu0 %v723
        %1211 = vmatpush.msra.mxu0 %v720
        %1212 = vmatmul.f32.gmra.mxu0 %v1185
        %v1213 = vpop.f32.mrf.mxu0
        %v1214 = vadd.f32 0.0, %v1213
        %1215 = vmatmul.f32.gmra.mxu0 %v1188
        %v1216 = vpop.f32.mrf.mxu0
        %v1217 = vadd.f32 0.0, %v1216
        %1218 = vmatmul.f32.gmra.mxu0 %v1191
        %v1219 = vpop.f32.mrf.mxu0
        %v1220 = vadd.f32 0.0, %v1219
        %1221 = vdwg.mxu0
        %v1223 = vsel %vm498, %v758, 0
        %v1226 = vsel %vm498, %v761, 0
        %v1229 = vsel %vm498, %v764, 0
        %v1232 = vsel %vm508, %v802, 0
        %1234 = vmatpush.msra.mxu0 0.0
        %1235 = vmatpush.msra.mxu0 0.0
        %1236 = vmatpush.msra.mxu0 0.0
        %1237 = vmatpush.msra.mxu0 0.0
        %1238 = vmatpush.msra.mxu0 0.0
        %1239 = vmatpush.msra.mxu0 0.0
        %1240 = vmatpush.msra.mxu0 0.0
        %1241 = vmatpush.msra.mxu0 0.0
        %1242 = vmatpush.msra.mxu0 0.0
        %1243 = vmatpush.msra.mxu0 0.0
        %1244 = vmatpush.msra.mxu0 0.0
        %1245 = vmatpush.msra.mxu0 0.0
        %1246 = vmatpush.msra.mxu0 0.0
        %1247 = vmatpush.msra.mxu0 %v1232
        %1248 = vmatpush.msra.mxu0 %v799
        %1249 = vmatpush.msra.mxu0 %v796
        %1250 = vmatmul.f32.gmra.mxu0 %v1223
        %v1251 = vpop.f32.mrf.mxu0
        %v1252 = vadd.f32 0.0, %v1251
        %1253 = vmatmul.f32.gmra.mxu0 %v1226
        %v1254 = vpop.f32.mrf.mxu0
        %v1255 = vadd.f32 0.0, %v1254
        %1256 = vmatmul.f32.gmra.mxu0 %v1229
        %v1257 = vpop.f32.mrf.mxu0
        %v1258 = vadd.f32 0.0, %v1257
        %1259 = vdwg.mxu0
        %v1261 = vsel %vm498, %v834, 0
        %v1264 = vsel %vm498, %v837, 0
        %v1267 = vsel %vm498, %v840, 0
        %v1270 = vsel %vm508, %v878, 0
        %1272 = vmatpush.msra.mxu0 0.0
        %1273 = vmatpush.msra.mxu0 0.0
        %1274 = vmatpush.msra.mxu0 0.0
        %1275 = vmatpush.msra.mxu0 0.0
        %1276 = vmatpush.msra.mxu0 0.0
        %1277 = vmatpush.msra.mxu0 0.0
        %1278 = vmatpush.msra.mxu0 0.0
        %1279 = vmatpush.msra.mxu0 0.0
        %1280 = vmatpush.msra.mxu0 0.0
        %1281 = vmatpush.msra.mxu0 0.0
        %1282 = vmatpush.msra.mxu0 0.0
        %1283 = vmatpush.msra.mxu0 0.0
        %1284 = vmatpush.msra.mxu0 0.0
        %1285 = vmatpush.msra.mxu0 %v1270
        %1286 = vmatpush.msra.mxu0 %v875
        %1287 = vmatpush.msra.mxu0 %v872
        %1288 = vmatmul.f32.gmra.mxu0 %v1261
        %v1289 = vpop.f32.mrf.mxu0
        %v1290 = vadd.f32 0.0, %v1289
        %1291 = vmatmul.f32.gmra.mxu0 %v1264
        %v1292 = vpop.f32.mrf.mxu0
        %v1293 = vadd.f32 0.0, %v1292
        %1294 = vmatmul.f32.gmra.mxu0 %v1267
        %v1295 = vpop.f32.mrf.mxu0
        %v1296 = vadd.f32 0.0, %v1295
        %1297 = vdwg.mxu0
        %v1299 = vsel %vm498, %v910, 0
        %v1302 = vsel %vm498, %v913, 0
        %v1305 = vsel %vm498, %v916, 0
        %v1308 = vsel %vm508, %v954, 0
        %1310 = vmatpush.msra.mxu0 0.0
        %1311 = vmatpush.msra.mxu0 0.0
        %1312 = vmatpush.msra.mxu0 0.0
        %1313 = vmatpush.msra.mxu0 0.0
        %1314 = vmatpush.msra.mxu0 0.0
        %1315 = vmatpush.msra.mxu0 0.0
        %1316 = vmatpush.msra.mxu0 0.0
        %1317 = vmatpush.msra.mxu0 0.0
        %1318 = vmatpush.msra.mxu0 0.0
        %1319 = vmatpush.msra.mxu0 0.0
        %1320 = vmatpush.msra.mxu0 0.0
        %1321 = vmatpush.msra.mxu0 0.0
        %1322 = vmatpush.msra.mxu0 0.0
        %1323 = vmatpush.msra.mxu0 %v1308
        %1324 = vmatpush.msra.mxu0 %v951
        %1325 = vmatpush.msra.mxu0 %v948
        %1326 = vmatmul.f32.gmra.mxu0 %v1299
        %v1327 = vpop.f32.mrf.mxu0
        %v1328 = vadd.f32 0.0, %v1327
        %1329 = vmatmul.f32.gmra.mxu0 %v1302
        %v1330 = vpop.f32.mrf.mxu0
        %v1331 = vadd.f32 0.0, %v1330
        %1332 = vmatmul.f32.gmra.mxu0 %v1305
        %v1333 = vpop.f32.mrf.mxu0
        %v1334 = vadd.f32 0.0, %v1333
        %1335 = vdwg.mxu0
        %v1337 = vsel %vm498, %v986, 0
        %v1340 = vsel %vm498, %v989, 0
        %v1343 = vsel %vm498, %v992, 0
        %v1346 = vsel %vm508, %v1030, 0
        %1348 = vmatpush.msra.mxu0 0.0
        %1349 = vmatpush.msra.mxu0 0.0
        %1350 = vmatpush.msra.mxu0 0.0
        %1351 = vmatpush.msra.mxu0 0.0
        %1352 = vmatpush.msra.mxu0 0.0
        %1353 = vmatpush.msra.mxu0 0.0
        %1354 = vmatpush.msra.mxu0 0.0
        %1355 = vmatpush.msra.mxu0 0.0
        %1356 = vmatpush.msra.mxu0 0.0
        %1357 = vmatpush.msra.mxu0 0.0
        %1358 = vmatpush.msra.mxu0 0.0
        %1359 = vmatpush.msra.mxu0 0.0
        %1360 = vmatpush.msra.mxu0 0.0
        %1361 = vmatpush.msra.mxu0 %v1346
        %1362 = vmatpush.msra.mxu0 %v1027
        %1363 = vmatpush.msra.mxu0 %v1024
        %1364 = vmatmul.f32.gmra.mxu0 %v1337
        %v1365 = vpop.f32.mrf.mxu0
        %v1366 = vadd.f32 0.0, %v1365
        %1367 = vmatmul.f32.gmra.mxu0 %v1340
        %v1368 = vpop.f32.mrf.mxu0
        %v1369 = vadd.f32 0.0, %v1368
        %1370 = vmatmul.f32.gmra.mxu0 %v1343
        %v1371 = vpop.f32.mrf.mxu0
        %v1372 = vadd.f32 0.0, %v1371
        %1373 = vdwg.mxu0
        %v1375 = vsel %vm498, %v1062, 0
        %v1378 = vsel %vm498, %v1065, 0
        %v1381 = vsel %vm498, %v1068, 0
        %v1384 = vsel %vm508, %v1106, 0
        %1386 = vmatpush.msra.mxu0 0.0
        %1387 = vmatpush.msra.mxu0 0.0
        %1388 = vmatpush.msra.mxu0 0.0
        %1389 = vmatpush.msra.mxu0 0.0
        %1390 = vmatpush.msra.mxu0 0.0
        %1391 = vmatpush.msra.mxu0 0.0
        %1392 = vmatpush.msra.mxu0 0.0
        %1393 = vmatpush.msra.mxu0 0.0
        %1394 = vmatpush.msra.mxu0 0.0
        %1395 = vmatpush.msra.mxu0 0.0
        %1396 = vmatpush.msra.mxu0 0.0
        %1397 = vmatpush.msra.mxu0 0.0
        %1398 = vmatpush.msra.mxu0 0.0
        %1399 = vmatpush.msra.mxu0 %v1384
        %1400 = vmatpush.msra.mxu0 %v1103
        %1401 = vmatpush.msra.mxu0 %v1100
        %1402 = vmatmul.f32.gmra.mxu0 %v1375
        %v1403 = vpop.f32.mrf.mxu0
        %v1404 = vadd.f32 0.0, %v1403
        %1405 = vmatmul.f32.gmra.mxu0 %v1378
        %v1406 = vpop.f32.mrf.mxu0
        %v1407 = vadd.f32 0.0, %v1406
        %1408 = vmatmul.f32.gmra.mxu0 %v1381
        %v1409 = vpop.f32.mrf.mxu0
        %v1410 = vadd.f32 0.0, %v1409
        %1411 = vdwg.mxu0
        %v1412 = vld [vmem:[%s192] sm:$0xff]
        %s1413 = scalar_lea.vmem %s1, 96
        %v1414 = vld [vmem:[%s1413] sm:$0xff]
        %v1415 = vld [vmem:[%s1413 + $0x8] sm:$0xff]
        %v1416 = vld [vmem:[%s1413 + $0x10] sm:$0xf]
        %v1417 = vld [vmem:[%s1413 + $0x18] sm:$0xff]
        %v1418 = vld [vmem:[%s1413 + $0x20] sm:$0xff]
        %v1419 = vld [vmem:[%s1413 + $0x28] sm:$0xf]
        %v1420 = vld [vmem:[%s1413 + $0x30] sm:$0xff]
        %v1421 = vld [vmem:[%s1413 + $0x38] sm:$0xff]
        %v1422 = vld [vmem:[%s1413 + $0x40] sm:$0xf]
        %v1423 = vld [vmem:[%s1413 + $0x48] sm:$0xff]
        %v1424 = vld [vmem:[%s1413 + $0x50] sm:$0xff]
        %v1425 = vld [vmem:[%s1413 + $0x58] sm:$0xf]
        %s1426 = scalar_lea.vmem %s2, 96
        %v1427 = vld [vmem:[%s1426] sm:$0xff]
        %v1428 = vld [vmem:[%s1426 + $0x8] sm:$0xff]
        %v1429 = vld [vmem:[%s1426 + $0x10] sm:$0xf]
        %v1430 = vld [vmem:[%s1426 + $0x18] sm:$0xff]
        %v1431 = vld [vmem:[%s1426 + $0x20] sm:$0xff]
        %v1432 = vld [vmem:[%s1426 + $0x28] sm:$0xf]
        %v1433 = vld [vmem:[%s1426 + $0x30] sm:$0xff]
        %v1434 = vld [vmem:[%s1426 + $0x38] sm:$0xff]
        %v1435 = vld [vmem:[%s1426 + $0x40] sm:$0xf]
        %v1436 = vld [vmem:[%s1426 + $0x48] sm:$0xff]
        %v1437 = vld [vmem:[%s1426 + $0x50] sm:$0xff]
        %v1438 = vld [vmem:[%s1426 + $0x58] sm:$0xf]
        %v1439 = vperm.slane %v1412, 0
        %v1440 = vlaneseq
        %v1441 = vshrl.u32 %v1440, 7
        %1443 = vset.pattern.permute.xlu0 %v1441
        %1444 = vperm.xlu0 %1443, %v1439
        %v1445 = vpop.permute.xlu0 %1444
        %v1446 = vperm.slane %v1412, 1
        %v1447 = vlaneseq
        %v1448 = vshrl.u32 %v1447, 7
        %1450 = vset.pattern.permute.xlu0 %v1448
        %1451 = vperm.xlu0 %1450, %v1446
        %v1452 = vpop.permute.xlu0 %1451
        %v1453 = vperm.slane %v1412, 2
        %v1454 = vlaneseq
        %v1455 = vshrl.u32 %v1454, 7
        %1457 = vset.pattern.permute.xlu0 %v1455
        %1458 = vperm.xlu0 %1457, %v1453
        %v1459 = vpop.permute.xlu0 %1458
        %v1460 = vperm.slane %v1412, 3
        %v1461 = vlaneseq
        %v1462 = vshrl.u32 %v1461, 7
        %1464 = vset.pattern.permute.xlu0 %v1462
        %1465 = vperm.xlu0 %1464, %v1460
        %v1466 = vpop.permute.xlu0 %1465
        %v1467 = vperm.slane %v1412, 4
        %v1468 = vlaneseq
        %v1469 = vshrl.u32 %v1468, 7
        %1471 = vset.pattern.permute.xlu0 %v1469
        %1472 = vperm.xlu0 %1471, %v1467
        %v1473 = vpop.permute.xlu0 %1472
        %v1474 = vperm.slane %v1412, 5
        %v1475 = vlaneseq
        %v1476 = vshrl.u32 %v1475, 7
        %1478 = vset.pattern.permute.xlu0 %v1476
        %1479 = vperm.xlu0 %1478, %v1474
        %v1480 = vpop.permute.xlu0 %1479
        %v1481 = vperm.slane %v1412, 6
        %v1482 = vlaneseq
        %v1483 = vshrl.u32 %v1482, 7
        %1485 = vset.pattern.permute.xlu0 %v1483
        %1486 = vperm.xlu0 %1485, %v1481
        %v1487 = vpop.permute.xlu0 %1486
        %v1488 = vperm.slane %v1412, 7
        %v1489 = vlaneseq
        %v1490 = vshrl.u32 %v1489, 7
        %1492 = vset.pattern.permute.xlu0 %v1490
        %1493 = vperm.xlu0 %1492, %v1488
        %v1494 = vpop.permute.xlu0 %1493
        %v1495 = vperm.slane %v1445, 4
        %v1496 = vperm.slane %v1445, 5
        %v1497 = vperm.slane %v1445, 6
        %v1498 = vperm.slane %v1445, 7
        %v1499 = vperm.slane %v1452, 4
        %v1500 = vperm.slane %v1452, 5
        %v1501 = vperm.slane %v1452, 6
        %v1502 = vperm.slane %v1452, 7
        %v1503 = vperm.slane %v1459, 4
        %v1504 = vperm.slane %v1459, 5
        %v1505 = vperm.slane %v1459, 6
        %v1506 = vperm.slane %v1459, 7
        %v1507 = vperm.slane %v1466, 4
        %v1508 = vperm.slane %v1466, 5
        %v1509 = vperm.slane %v1466, 6
        %v1510 = vperm.slane %v1466, 7
        %v1511 = vperm.slane %v1473, 4
        %v1512 = vperm.slane %v1473, 5
        %v1513 = vperm.slane %v1473, 6
        %v1514 = vperm.slane %v1473, 7
        %v1515 = vperm.slane %v1480, 4
        %v1516 = vperm.slane %v1480, 5
        %v1517 = vperm.slane %v1480, 6
        %v1518 = vperm.slane %v1480, 7
        %v1519 = vperm.slane %v1487, 4
        %v1520 = vperm.slane %v1487, 5
        %v1521 = vperm.slane %v1487, 6
        %v1522 = vperm.slane %v1487, 7
        %v1523 = vperm.slane %v1494, 4
        %v1524 = vperm.slane %v1494, 5
        %v1525 = vperm.slane %v1494, 6
        %v1526 = vperm.slane %v1494, 7
        %v1527 = vmul.f32 %v1495, %v1427
        %v1528 = vmul.f32 %v1495, %v1428
        %v1529 = vmul.f32 %v1495, %v1429
        %v1530 = vmul.f32 %v1496, %v1430
        %v1531 = vmul.f32 %v1496, %v1431
        %v1532 = vmul.f32 %v1496, %v1432
        %v1533 = vmul.f32 %v1497, %v1433
        %v1534 = vmul.f32 %v1497, %v1434
        %v1535 = vmul.f32 %v1497, %v1435
        %v1536 = vmul.f32 %v1498, %v1436
        %v1537 = vmul.f32 %v1498, %v1437
        %v1538 = vmul.f32 %v1498, %v1438
        %v1539 = vmul.f32 %v1499, %v1427
        %v1540 = vmul.f32 %v1499, %v1428
        %v1541 = vmul.f32 %v1499, %v1429
        %v1542 = vmul.f32 %v1500, %v1430
        %v1543 = vmul.f32 %v1500, %v1431
        %v1544 = vmul.f32 %v1500, %v1432
        %v1545 = vmul.f32 %v1501, %v1433
        %v1546 = vmul.f32 %v1501, %v1434
        %v1547 = vmul.f32 %v1501, %v1435
        %v1548 = vmul.f32 %v1502, %v1436
        %v1549 = vmul.f32 %v1502, %v1437
        %v1550 = vmul.f32 %v1502, %v1438
        %v1551 = vmul.f32 %v1503, %v1427
        %v1552 = vmul.f32 %v1503, %v1428
        %v1553 = vmul.f32 %v1503, %v1429
        %v1554 = vmul.f32 %v1504, %v1430
        %v1555 = vmul.f32 %v1504, %v1431
        %v1556 = vmul.f32 %v1504, %v1432
        %v1557 = vmul.f32 %v1505, %v1433
        %v1558 = vmul.f32 %v1505, %v1434
        %v1559 = vmul.f32 %v1505, %v1435
        %v1560 = vmul.f32 %v1506, %v1436
        %v1561 = vmul.f32 %v1506, %v1437
        %v1562 = vmul.f32 %v1506, %v1438
        %v1563 = vmul.f32 %v1507, %v1427
        %v1564 = vmul.f32 %v1507, %v1428
        %v1565 = vmul.f32 %v1507, %v1429
        %v1566 = vmul.f32 %v1508, %v1430
        %v1567 = vmul.f32 %v1508, %v1431
        %v1568 = vmul.f32 %v1508, %v1432
        %v1569 = vmul.f32 %v1509, %v1433
        %v1570 = vmul.f32 %v1509, %v1434
        %v1571 = vmul.f32 %v1509, %v1435
        %v1572 = vmul.f32 %v1510, %v1436
        %v1573 = vmul.f32 %v1510, %v1437
        %v1574 = vmul.f32 %v1510, %v1438
        %v1575 = vmul.f32 %v1511, %v1427
        %v1576 = vmul.f32 %v1511, %v1428
        %v1577 = vmul.f32 %v1511, %v1429
        %v1578 = vmul.f32 %v1512, %v1430
        %v1579 = vmul.f32 %v1512, %v1431
        %v1580 = vmul.f32 %v1512, %v1432
        %v1581 = vmul.f32 %v1513, %v1433
        %v1582 = vmul.f32 %v1513, %v1434
        %v1583 = vmul.f32 %v1513, %v1435
        %v1584 = vmul.f32 %v1514, %v1436
        %v1585 = vmul.f32 %v1514, %v1437
        %v1586 = vmul.f32 %v1514, %v1438
        %v1587 = vmul.f32 %v1515, %v1427
        %v1588 = vmul.f32 %v1515, %v1428
        %v1589 = vmul.f32 %v1515, %v1429
        %v1590 = vmul.f32 %v1516, %v1430
        %v1591 = vmul.f32 %v1516, %v1431
        %v1592 = vmul.f32 %v1516, %v1432
        %v1593 = vmul.f32 %v1517, %v1433
        %v1594 = vmul.f32 %v1517, %v1434
        %v1595 = vmul.f32 %v1517, %v1435
        %v1596 = vmul.f32 %v1518, %v1436
        %v1597 = vmul.f32 %v1518, %v1437
        %v1598 = vmul.f32 %v1518, %v1438
        %v1599 = vmul.f32 %v1519, %v1427
        %v1600 = vmul.f32 %v1519, %v1428
        %v1601 = vmul.f32 %v1519, %v1429
        %v1602 = vmul.f32 %v1520, %v1430
        %v1603 = vmul.f32 %v1520, %v1431
        %v1604 = vmul.f32 %v1520, %v1432
        %v1605 = vmul.f32 %v1521, %v1433
        %v1606 = vmul.f32 %v1521, %v1434
        %v1607 = vmul.f32 %v1521, %v1435
        %v1608 = vmul.f32 %v1522, %v1436
        %v1609 = vmul.f32 %v1522, %v1437
        %v1610 = vmul.f32 %v1522, %v1438
        %v1611 = vmul.f32 %v1523, %v1427
        %v1612 = vmul.f32 %v1523, %v1428
        %v1613 = vmul.f32 %v1523, %v1429
        %v1614 = vmul.f32 %v1524, %v1430
        %v1615 = vmul.f32 %v1524, %v1431
        %v1616 = vmul.f32 %v1524, %v1432
        %v1617 = vmul.f32 %v1525, %v1433
        %v1618 = vmul.f32 %v1525, %v1434
        %v1619 = vmul.f32 %v1525, %v1435
        %v1620 = vmul.f32 %v1526, %v1436
        %v1621 = vmul.f32 %v1526, %v1437
        %v1622 = vmul.f32 %v1526, %v1438
        %v1623 = vadd.f32 %v1414, %v1527
        %v1624 = vadd.f32 %v1415, %v1528
        %v1625 = vadd.f32 %v1416, %v1529
        %v1626 = vadd.f32 %v1417, %v1530
        %v1627 = vadd.f32 %v1418, %v1531
        %v1628 = vadd.f32 %v1419, %v1532
        %v1629 = vadd.f32 %v1420, %v1533
        %v1630 = vadd.f32 %v1421, %v1534
        %v1631 = vadd.f32 %v1422, %v1535
        %v1632 = vadd.f32 %v1423, %v1536
        %v1633 = vadd.f32 %v1424, %v1537
        %v1634 = vadd.f32 %v1425, %v1538
        %v1635 = vadd.f32 %v1414, %v1539
        %v1636 = vadd.f32 %v1415, %v1540
        %v1637 = vadd.f32 %v1416, %v1541
        %v1638 = vadd.f32 %v1417, %v1542
        %v1639 = vadd.f32 %v1418, %v1543
        %v1640 = vadd.f32 %v1419, %v1544
        %v1641 = vadd.f32 %v1420, %v1545
        %v1642 = vadd.f32 %v1421, %v1546
        %v1643 = vadd.f32 %v1422, %v1547
        %v1644 = vadd.f32 %v1423, %v1548
        %v1645 = vadd.f32 %v1424, %v1549
        %v1646 = vadd.f32 %v1425, %v1550
        %v1647 = vadd.f32 %v1414, %v1551
        %v1648 = vadd.f32 %v1415, %v1552
        %v1649 = vadd.f32 %v1416, %v1553
        %v1650 = vadd.f32 %v1417, %v1554
        %v1651 = vadd.f32 %v1418, %v1555
        %v1652 = vadd.f32 %v1419, %v1556
        %v1653 = vadd.f32 %v1420, %v1557
        %v1654 = vadd.f32 %v1421, %v1558
        %v1655 = vadd.f32 %v1422, %v1559
        %v1656 = vadd.f32 %v1423, %v1560
        %v1657 = vadd.f32 %v1424, %v1561
        %v1658 = vadd.f32 %v1425, %v1562
        %v1659 = vadd.f32 %v1414, %v1563
        %v1660 = vadd.f32 %v1415, %v1564
        %v1661 = vadd.f32 %v1416, %v1565
        %v1662 = vadd.f32 %v1417, %v1566
        %v1663 = vadd.f32 %v1418, %v1567
        %v1664 = vadd.f32 %v1419, %v1568
        %v1665 = vadd.f32 %v1420, %v1569
        %v1666 = vadd.f32 %v1421, %v1570
        %v1667 = vadd.f32 %v1422, %v1571
        %v1668 = vadd.f32 %v1423, %v1572
        %v1669 = vadd.f32 %v1424, %v1573
        %v1670 = vadd.f32 %v1425, %v1574
        %v1671 = vadd.f32 %v1414, %v1575
        %v1672 = vadd.f32 %v1415, %v1576
        %v1673 = vadd.f32 %v1416, %v1577
        %v1674 = vadd.f32 %v1417, %v1578
        %v1675 = vadd.f32 %v1418, %v1579
        %v1676 = vadd.f32 %v1419, %v1580
        %v1677 = vadd.f32 %v1420, %v1581
        %v1678 = vadd.f32 %v1421, %v1582
        %v1679 = vadd.f32 %v1422, %v1583
        %v1680 = vadd.f32 %v1423, %v1584
        %v1681 = vadd.f32 %v1424, %v1585
        %v1682 = vadd.f32 %v1425, %v1586
        %v1683 = vadd.f32 %v1414, %v1587
        %v1684 = vadd.f32 %v1415, %v1588
        %v1685 = vadd.f32 %v1416, %v1589
        %v1686 = vadd.f32 %v1417, %v1590
        %v1687 = vadd.f32 %v1418, %v1591
        %v1688 = vadd.f32 %v1419, %v1592
        %v1689 = vadd.f32 %v1420, %v1593
        %v1690 = vadd.f32 %v1421, %v1594
        %v1691 = vadd.f32 %v1422, %v1595
        %v1692 = vadd.f32 %v1423, %v1596
        %v1693 = vadd.f32 %v1424, %v1597
        %v1694 = vadd.f32 %v1425, %v1598
        %v1695 = vadd.f32 %v1414, %v1599
        %v1696 = vadd.f32 %v1415, %v1600
        %v1697 = vadd.f32 %v1416, %v1601
        %v1698 = vadd.f32 %v1417, %v1602
        %v1699 = vadd.f32 %v1418, %v1603
        %v1700 = vadd.f32 %v1419, %v1604
        %v1701 = vadd.f32 %v1420, %v1605
        %v1702 = vadd.f32 %v1421, %v1606
        %v1703 = vadd.f32 %v1422, %v1607
        %v1704 = vadd.f32 %v1423, %v1608
        %v1705 = vadd.f32 %v1424, %v1609
        %v1706 = vadd.f32 %v1425, %v1610
        %v1707 = vadd.f32 %v1414, %v1611
        %v1708 = vadd.f32 %v1415, %v1612
        %v1709 = vadd.f32 %v1416, %v1613
        %v1710 = vadd.f32 %v1417, %v1614
        %v1711 = vadd.f32 %v1418, %v1615
        %v1712 = vadd.f32 %v1419, %v1616
        %v1713 = vadd.f32 %v1420, %v1617
        %v1714 = vadd.f32 %v1421, %v1618
        %v1715 = vadd.f32 %v1422, %v1619
        %v1716 = vadd.f32 %v1423, %v1620
        %v1717 = vadd.f32 %v1424, %v1621
        %v1718 = vadd.f32 %v1425, %v1622
        %v1720 = vsel %vm498, %v1623, 0
        %v1723 = vsel %vm498, %v1624, 0
        %v1726 = vsel %vm498, %v1625, 0
        %v1729 = vsel %vm508, %v1628, 0
        %1731 = vmatpush.msra.mxu0 0.0
        %1732 = vmatpush.msra.mxu0 0.0
        %1733 = vmatpush.msra.mxu0 0.0
        %1734 = vmatpush.msra.mxu0 0.0
        %1735 = vmatpush.msra.mxu0 0.0
        %1736 = vmatpush.msra.mxu0 0.0
        %1737 = vmatpush.msra.mxu0 0.0
        %1738 = vmatpush.msra.mxu0 0.0
        %1739 = vmatpush.msra.mxu0 0.0
        %1740 = vmatpush.msra.mxu0 0.0
        %1741 = vmatpush.msra.mxu0 0.0
        %1742 = vmatpush.msra.mxu0 0.0
        %1743 = vmatpush.msra.mxu0 0.0
        %1744 = vmatpush.msra.mxu0 %v1729
        %1745 = vmatpush.msra.mxu0 %v1627
        %1746 = vmatpush.msra.mxu0 %v1626
        %1747 = vmatmul.f32.gmra.mxu0 %v1720
        %v1748 = vpop.f32.mrf.mxu0
        %v1749 = vadd.f32 0.0, %v1748
        %1750 = vmatmul.f32.gmra.mxu0 %v1723
        %v1751 = vpop.f32.mrf.mxu0
        %v1752 = vadd.f32 0.0, %v1751
        %1753 = vmatmul.f32.gmra.mxu0 %v1726
        %v1754 = vpop.f32.mrf.mxu0
        %v1755 = vadd.f32 0.0, %v1754
        %1756 = vdwg.mxu0
        %v1758 = vsel %vm498, %v1629, 0
        %v1761 = vsel %vm498, %v1630, 0
        %v1764 = vsel %vm498, %v1631, 0
        %v1767 = vsel %vm508, %v1634, 0
        %1769 = vmatpush.msra.mxu0 0.0
        %1770 = vmatpush.msra.mxu0 0.0
        %1771 = vmatpush.msra.mxu0 0.0
        %1772 = vmatpush.msra.mxu0 0.0
        %1773 = vmatpush.msra.mxu0 0.0
        %1774 = vmatpush.msra.mxu0 0.0
        %1775 = vmatpush.msra.mxu0 0.0
        %1776 = vmatpush.msra.mxu0 0.0
        %1777 = vmatpush.msra.mxu0 0.0
        %1778 = vmatpush.msra.mxu0 0.0
        %1779 = vmatpush.msra.mxu0 0.0
        %1780 = vmatpush.msra.mxu0 0.0
        %1781 = vmatpush.msra.mxu0 0.0
        %1782 = vmatpush.msra.mxu0 %v1767
        %1783 = vmatpush.msra.mxu0 %v1633
        %1784 = vmatpush.msra.mxu0 %v1632
        %1785 = vmatmul.f32.gmra.mxu0 %v1758
        %v1786 = vpop.f32.mrf.mxu0
        %v1787 = vadd.f32 0.0, %v1786
        %1788 = vmatmul.f32.gmra.mxu0 %v1761
        %v1789 = vpop.f32.mrf.mxu0
        %v1790 = vadd.f32 0.0, %v1789
        %1791 = vmatmul.f32.gmra.mxu0 %v1764
        %v1792 = vpop.f32.mrf.mxu0
        %v1793 = vadd.f32 0.0, %v1792
        %1794 = vdwg.mxu0
        %v1796 = vsel %vm498, %v1635, 0
        %v1799 = vsel %vm498, %v1636, 0
        %v1802 = vsel %vm498, %v1637, 0
        %v1805 = vsel %vm508, %v1640, 0
        %1807 = vmatpush.msra.mxu0 0.0
        %1808 = vmatpush.msra.mxu0 0.0
        %1809 = vmatpush.msra.mxu0 0.0
        %1810 = vmatpush.msra.mxu0 0.0
        %1811 = vmatpush.msra.mxu0 0.0
        %1812 = vmatpush.msra.mxu0 0.0
        %1813 = vmatpush.msra.mxu0 0.0
        %1814 = vmatpush.msra.mxu0 0.0
        %1815 = vmatpush.msra.mxu0 0.0
        %1816 = vmatpush.msra.mxu0 0.0
        %1817 = vmatpush.msra.mxu0 0.0
        %1818 = vmatpush.msra.mxu0 0.0
        %1819 = vmatpush.msra.mxu0 0.0
        %1820 = vmatpush.msra.mxu0 %v1805
        %1821 = vmatpush.msra.mxu0 %v1639
        %1822 = vmatpush.msra.mxu0 %v1638
        %1823 = vmatmul.f32.gmra.mxu0 %v1796
        %v1824 = vpop.f32.mrf.mxu0
        %v1825 = vadd.f32 0.0, %v1824
        %1826 = vmatmul.f32.gmra.mxu0 %v1799
        %v1827 = vpop.f32.mrf.mxu0
        %v1828 = vadd.f32 0.0, %v1827
        %1829 = vmatmul.f32.gmra.mxu0 %v1802
        %v1830 = vpop.f32.mrf.mxu0
        %v1831 = vadd.f32 0.0, %v1830
        %1832 = vdwg.mxu0
        %v1834 = vsel %vm498, %v1641, 0
        %v1837 = vsel %vm498, %v1642, 0
        %v1840 = vsel %vm498, %v1643, 0
        %v1843 = vsel %vm508, %v1646, 0
        %1845 = vmatpush.msra.mxu0 0.0
        %1846 = vmatpush.msra.mxu0 0.0
        %1847 = vmatpush.msra.mxu0 0.0
        %1848 = vmatpush.msra.mxu0 0.0
        %1849 = vmatpush.msra.mxu0 0.0
        %1850 = vmatpush.msra.mxu0 0.0
        %1851 = vmatpush.msra.mxu0 0.0
        %1852 = vmatpush.msra.mxu0 0.0
        %1853 = vmatpush.msra.mxu0 0.0
        %1854 = vmatpush.msra.mxu0 0.0
        %1855 = vmatpush.msra.mxu0 0.0
        %1856 = vmatpush.msra.mxu0 0.0
        %1857 = vmatpush.msra.mxu0 0.0
        %1858 = vmatpush.msra.mxu0 %v1843
        %1859 = vmatpush.msra.mxu0 %v1645
        %1860 = vmatpush.msra.mxu0 %v1644
        %1861 = vmatmul.f32.gmra.mxu0 %v1834
        %v1862 = vpop.f32.mrf.mxu0
        %v1863 = vadd.f32 0.0, %v1862
        %1864 = vmatmul.f32.gmra.mxu0 %v1837
        %v1865 = vpop.f32.mrf.mxu0
        %v1866 = vadd.f32 0.0, %v1865
        %1867 = vmatmul.f32.gmra.mxu0 %v1840
        %v1868 = vpop.f32.mrf.mxu0
        %v1869 = vadd.f32 0.0, %v1868
        %1870 = vdwg.mxu0
        %v1872 = vsel %vm498, %v1647, 0
        %v1875 = vsel %vm498, %v1648, 0
        %v1878 = vsel %vm498, %v1649, 0
        %v1881 = vsel %vm508, %v1652, 0
        %1883 = vmatpush.msra.mxu0 0.0
        %1884 = vmatpush.msra.mxu0 0.0
        %1885 = vmatpush.msra.mxu0 0.0
        %1886 = vmatpush.msra.mxu0 0.0
        %1887 = vmatpush.msra.mxu0 0.0
        %1888 = vmatpush.msra.mxu0 0.0
        %1889 = vmatpush.msra.mxu0 0.0
        %1890 = vmatpush.msra.mxu0 0.0
        %1891 = vmatpush.msra.mxu0 0.0
        %1892 = vmatpush.msra.mxu0 0.0
        %1893 = vmatpush.msra.mxu0 0.0
        %1894 = vmatpush.msra.mxu0 0.0
        %1895 = vmatpush.msra.mxu0 0.0
        %1896 = vmatpush.msra.mxu0 %v1881
        %1897 = vmatpush.msra.mxu0 %v1651
        %1898 = vmatpush.msra.mxu0 %v1650
        %1899 = vmatmul.f32.gmra.mxu0 %v1872
        %v1900 = vpop.f32.mrf.mxu0
        %v1901 = vadd.f32 0.0, %v1900
        %1902 = vmatmul.f32.gmra.mxu0 %v1875
        %v1903 = vpop.f32.mrf.mxu0
        %v1904 = vadd.f32 0.0, %v1903
        %1905 = vmatmul.f32.gmra.mxu0 %v1878
        %v1906 = vpop.f32.mrf.mxu0
        %v1907 = vadd.f32 0.0, %v1906
        %1908 = vdwg.mxu0
        %v1910 = vsel %vm498, %v1653, 0
        %v1913 = vsel %vm498, %v1654, 0
        %v1916 = vsel %vm498, %v1655, 0
        %v1919 = vsel %vm508, %v1658, 0
        %1921 = vmatpush.msra.mxu0 0.0
        %1922 = vmatpush.msra.mxu0 0.0
        %1923 = vmatpush.msra.mxu0 0.0
        %1924 = vmatpush.msra.mxu0 0.0
        %1925 = vmatpush.msra.mxu0 0.0
        %1926 = vmatpush.msra.mxu0 0.0
        %1927 = vmatpush.msra.mxu0 0.0
        %1928 = vmatpush.msra.mxu0 0.0
        %1929 = vmatpush.msra.mxu0 0.0
        %1930 = vmatpush.msra.mxu0 0.0
        %1931 = vmatpush.msra.mxu0 0.0
        %1932 = vmatpush.msra.mxu0 0.0
        %1933 = vmatpush.msra.mxu0 0.0
        %1934 = vmatpush.msra.mxu0 %v1919
        %1935 = vmatpush.msra.mxu0 %v1657
        %1936 = vmatpush.msra.mxu0 %v1656
        %1937 = vmatmul.f32.gmra.mxu0 %v1910
        %v1938 = vpop.f32.mrf.mxu0
        %v1939 = vadd.f32 0.0, %v1938
        %1940 = vmatmul.f32.gmra.mxu0 %v1913
        %v1941 = vpop.f32.mrf.mxu0
        %v1942 = vadd.f32 0.0, %v1941
        %1943 = vmatmul.f32.gmra.mxu0 %v1916
        %v1944 = vpop.f32.mrf.mxu0
        %v1945 = vadd.f32 0.0, %v1944
        %1946 = vdwg.mxu0
        %v1948 = vsel %vm498, %v1659, 0
        %v1951 = vsel %vm498, %v1660, 0
        %v1954 = vsel %vm498, %v1661, 0
        %v1957 = vsel %vm508, %v1664, 0
        %1959 = vmatpush.msra.mxu0 0.0
        %1960 = vmatpush.msra.mxu0 0.0
        %1961 = vmatpush.msra.mxu0 0.0
        %1962 = vmatpush.msra.mxu0 0.0
        %1963 = vmatpush.msra.mxu0 0.0
        %1964 = vmatpush.msra.mxu0 0.0
        %1965 = vmatpush.msra.mxu0 0.0
        %1966 = vmatpush.msra.mxu0 0.0
        %1967 = vmatpush.msra.mxu0 0.0
        %1968 = vmatpush.msra.mxu0 0.0
        %1969 = vmatpush.msra.mxu0 0.0
        %1970 = vmatpush.msra.mxu0 0.0
        %1971 = vmatpush.msra.mxu0 0.0
        %1972 = vmatpush.msra.mxu0 %v1957
        %1973 = vmatpush.msra.mxu0 %v1663
        %1974 = vmatpush.msra.mxu0 %v1662
        %1975 = vmatmul.f32.gmra.mxu0 %v1948
        %v1976 = vpop.f32.mrf.mxu0
        %v1977 = vadd.f32 0.0, %v1976
        %1978 = vmatmul.f32.gmra.mxu0 %v1951
        %v1979 = vpop.f32.mrf.mxu0
        %v1980 = vadd.f32 0.0, %v1979
        %1981 = vmatmul.f32.gmra.mxu0 %v1954
        %v1982 = vpop.f32.mrf.mxu0
        %v1983 = vadd.f32 0.0, %v1982
        %1984 = vdwg.mxu0
        %v1986 = vsel %vm498, %v1665, 0
        %v1989 = vsel %vm498, %v1666, 0
        %v1992 = vsel %vm498, %v1667, 0
        %v1995 = vsel %vm508, %v1670, 0
        %1997 = vmatpush.msra.mxu0 0.0
        %1998 = vmatpush.msra.mxu0 0.0
        %1999 = vmatpush.msra.mxu0 0.0
        %2000 = vmatpush.msra.mxu0 0.0
        %2001 = vmatpush.msra.mxu0 0.0
        %2002 = vmatpush.msra.mxu0 0.0
        %2003 = vmatpush.msra.mxu0 0.0
        %2004 = vmatpush.msra.mxu0 0.0
        %2005 = vmatpush.msra.mxu0 0.0
        %2006 = vmatpush.msra.mxu0 0.0
        %2007 = vmatpush.msra.mxu0 0.0
        %2008 = vmatpush.msra.mxu0 0.0
        %2009 = vmatpush.msra.mxu0 0.0
        %2010 = vmatpush.msra.mxu0 %v1995
        %2011 = vmatpush.msra.mxu0 %v1669
        %2012 = vmatpush.msra.mxu0 %v1668
        %2013 = vmatmul.f32.gmra.mxu0 %v1986
        %v2014 = vpop.f32.mrf.mxu0
        %v2015 = vadd.f32 0.0, %v2014
        %2016 = vmatmul.f32.gmra.mxu0 %v1989
        %v2017 = vpop.f32.mrf.mxu0
        %v2018 = vadd.f32 0.0, %v2017
        %2019 = vmatmul.f32.gmra.mxu0 %v1992
        %v2020 = vpop.f32.mrf.mxu0
        %v2021 = vadd.f32 0.0, %v2020
        %2022 = vdwg.mxu0
        %v2024 = vsel %vm498, %v1671, 0
        %v2027 = vsel %vm498, %v1672, 0
        %v2030 = vsel %vm498, %v1673, 0
        %v2033 = vsel %vm508, %v1676, 0
        %2035 = vmatpush.msra.mxu0 0.0
        %2036 = vmatpush.msra.mxu0 0.0
        %2037 = vmatpush.msra.mxu0 0.0
        %2038 = vmatpush.msra.mxu0 0.0
        %2039 = vmatpush.msra.mxu0 0.0
        %2040 = vmatpush.msra.mxu0 0.0
        %2041 = vmatpush.msra.mxu0 0.0
        %2042 = vmatpush.msra.mxu0 0.0
        %2043 = vmatpush.msra.mxu0 0.0
        %2044 = vmatpush.msra.mxu0 0.0
        %2045 = vmatpush.msra.mxu0 0.0
        %2046 = vmatpush.msra.mxu0 0.0
        %2047 = vmatpush.msra.mxu0 0.0
        %2048 = vmatpush.msra.mxu0 %v2033
        %2049 = vmatpush.msra.mxu0 %v1675
        %2050 = vmatpush.msra.mxu0 %v1674
        %2051 = vmatmul.f32.gmra.mxu0 %v2024
        %v2052 = vpop.f32.mrf.mxu0
        %v2053 = vadd.f32 0.0, %v2052
        %2054 = vmatmul.f32.gmra.mxu0 %v2027
        %v2055 = vpop.f32.mrf.mxu0
        %v2056 = vadd.f32 0.0, %v2055
        %2057 = vmatmul.f32.gmra.mxu0 %v2030
        %v2058 = vpop.f32.mrf.mxu0
        %v2059 = vadd.f32 0.0, %v2058
        %2060 = vdwg.mxu0
        %v2062 = vsel %vm498, %v1677, 0
        %v2065 = vsel %vm498, %v1678, 0
        %v2068 = vsel %vm498, %v1679, 0
        %v2071 = vsel %vm508, %v1682, 0
        %2073 = vmatpush.msra.mxu0 0.0
        %2074 = vmatpush.msra.mxu0 0.0
        %2075 = vmatpush.msra.mxu0 0.0
        %2076 = vmatpush.msra.mxu0 0.0
        %2077 = vmatpush.msra.mxu0 0.0
        %2078 = vmatpush.msra.mxu0 0.0
        %2079 = vmatpush.msra.mxu0 0.0
        %2080 = vmatpush.msra.mxu0 0.0
        %2081 = vmatpush.msra.mxu0 0.0
        %2082 = vmatpush.msra.mxu0 0.0
        %2083 = vmatpush.msra.mxu0 0.0
        %2084 = vmatpush.msra.mxu0 0.0
        %2085 = vmatpush.msra.mxu0 0.0
        %2086 = vmatpush.msra.mxu0 %v2071
        %2087 = vmatpush.msra.mxu0 %v1681
        %2088 = vmatpush.msra.mxu0 %v1680
        %2089 = vmatmul.f32.gmra.mxu0 %v2062
        %v2090 = vpop.f32.mrf.mxu0
        %v2091 = vadd.f32 0.0, %v2090
        %2092 = vmatmul.f32.gmra.mxu0 %v2065
        %v2093 = vpop.f32.mrf.mxu0
        %v2094 = vadd.f32 0.0, %v2093
        %2095 = vmatmul.f32.gmra.mxu0 %v2068
        %v2096 = vpop.f32.mrf.mxu0
        %v2097 = vadd.f32 0.0, %v2096
        %2098 = vdwg.mxu0
        %v2100 = vsel %vm498, %v1683, 0
        %v2103 = vsel %vm498, %v1684, 0
        %v2106 = vsel %vm498, %v1685, 0
        %v2109 = vsel %vm508, %v1688, 0
        %2111 = vmatpush.msra.mxu0 0.0
        %2112 = vmatpush.msra.mxu0 0.0
        %2113 = vmatpush.msra.mxu0 0.0
        %2114 = vmatpush.msra.mxu0 0.0
        %2115 = vmatpush.msra.mxu0 0.0
        %2116 = vmatpush.msra.mxu0 0.0
        %2117 = vmatpush.msra.mxu0 0.0
        %2118 = vmatpush.msra.mxu0 0.0
        %2119 = vmatpush.msra.mxu0 0.0
        %2120 = vmatpush.msra.mxu0 0.0
        %2121 = vmatpush.msra.mxu0 0.0
        %2122 = vmatpush.msra.mxu0 0.0
        %2123 = vmatpush.msra.mxu0 0.0
        %2124 = vmatpush.msra.mxu0 %v2109
        %2125 = vmatpush.msra.mxu0 %v1687
        %2126 = vmatpush.msra.mxu0 %v1686
        %2127 = vmatmul.f32.gmra.mxu0 %v2100
        %v2128 = vpop.f32.mrf.mxu0
        %v2129 = vadd.f32 0.0, %v2128
        %2130 = vmatmul.f32.gmra.mxu0 %v2103
        %v2131 = vpop.f32.mrf.mxu0
        %v2132 = vadd.f32 0.0, %v2131
        %2133 = vmatmul.f32.gmra.mxu0 %v2106
        %v2134 = vpop.f32.mrf.mxu0
        %v2135 = vadd.f32 0.0, %v2134
        %2136 = vdwg.mxu0
        %v2138 = vsel %vm498, %v1689, 0
        %v2141 = vsel %vm498, %v1690, 0
        %v2144 = vsel %vm498, %v1691, 0
        %v2147 = vsel %vm508, %v1694, 0
        %2149 = vmatpush.msra.mxu0 0.0
        %2150 = vmatpush.msra.mxu0 0.0
        %2151 = vmatpush.msra.mxu0 0.0
        %2152 = vmatpush.msra.mxu0 0.0
        %2153 = vmatpush.msra.mxu0 0.0
        %2154 = vmatpush.msra.mxu0 0.0
        %2155 = vmatpush.msra.mxu0 0.0
        %2156 = vmatpush.msra.mxu0 0.0
        %2157 = vmatpush.msra.mxu0 0.0
        %2158 = vmatpush.msra.mxu0 0.0
        %2159 = vmatpush.msra.mxu0 0.0
        %2160 = vmatpush.msra.mxu0 0.0
        %2161 = vmatpush.msra.mxu0 0.0
        %2162 = vmatpush.msra.mxu0 %v2147
        %2163 = vmatpush.msra.mxu0 %v1693
        %2164 = vmatpush.msra.mxu0 %v1692
        %2165 = vmatmul.f32.gmra.mxu0 %v2138
        %v2166 = vpop.f32.mrf.mxu0
        %v2167 = vadd.f32 0.0, %v2166
        %2168 = vmatmul.f32.gmra.mxu0 %v2141
        %v2169 = vpop.f32.mrf.mxu0
        %v2170 = vadd.f32 0.0, %v2169
        %2171 = vmatmul.f32.gmra.mxu0 %v2144
        %v2172 = vpop.f32.mrf.mxu0
        %v2173 = vadd.f32 0.0, %v2172
        %2174 = vdwg.mxu0
        %v2176 = vsel %vm498, %v1695, 0
        %v2179 = vsel %vm498, %v1696, 0
        %v2182 = vsel %vm498, %v1697, 0
        %v2185 = vsel %vm508, %v1700, 0
        %2187 = vmatpush.msra.mxu0 0.0
        %2188 = vmatpush.msra.mxu0 0.0
        %2189 = vmatpush.msra.mxu0 0.0
        %2190 = vmatpush.msra.mxu0 0.0
        %2191 = vmatpush.msra.mxu0 0.0
        %2192 = vmatpush.msra.mxu0 0.0
        %2193 = vmatpush.msra.mxu0 0.0
        %2194 = vmatpush.msra.mxu0 0.0
        %2195 = vmatpush.msra.mxu0 0.0
        %2196 = vmatpush.msra.mxu0 0.0
        %2197 = vmatpush.msra.mxu0 0.0
        %2198 = vmatpush.msra.mxu0 0.0
        %2199 = vmatpush.msra.mxu0 0.0
        %2200 = vmatpush.msra.mxu0 %v2185
        %2201 = vmatpush.msra.mxu0 %v1699
        %2202 = vmatpush.msra.mxu0 %v1698
        %2203 = vmatmul.f32.gmra.mxu0 %v2176
        %v2204 = vpop.f32.mrf.mxu0
        %v2205 = vadd.f32 0.0, %v2204
        %2206 = vmatmul.f32.gmra.mxu0 %v2179
        %v2207 = vpop.f32.mrf.mxu0
        %v2208 = vadd.f32 0.0, %v2207
        %2209 = vmatmul.f32.gmra.mxu0 %v2182
        %v2210 = vpop.f32.mrf.mxu0
        %v2211 = vadd.f32 0.0, %v2210
        %2212 = vdwg.mxu0
        %v2214 = vsel %vm498, %v1701, 0
        %v2217 = vsel %vm498, %v1702, 0
        %v2220 = vsel %vm498, %v1703, 0
        %v2223 = vsel %vm508, %v1706, 0
        %2225 = vmatpush.msra.mxu0 0.0
        %2226 = vmatpush.msra.mxu0 0.0
        %2227 = vmatpush.msra.mxu0 0.0
        %2228 = vmatpush.msra.mxu0 0.0
        %2229 = vmatpush.msra.mxu0 0.0
        %2230 = vmatpush.msra.mxu0 0.0
        %2231 = vmatpush.msra.mxu0 0.0
        %2232 = vmatpush.msra.mxu0 0.0
        %2233 = vmatpush.msra.mxu0 0.0
        %2234 = vmatpush.msra.mxu0 0.0
        %2235 = vmatpush.msra.mxu0 0.0
        %2236 = vmatpush.msra.mxu0 0.0
        %2237 = vmatpush.msra.mxu0 0.0
        %2238 = vmatpush.msra.mxu0 %v2223
        %2239 = vmatpush.msra.mxu0 %v1705
        %2240 = vmatpush.msra.mxu0 %v1704
        %2241 = vmatmul.f32.gmra.mxu0 %v2214
        %v2242 = vpop.f32.mrf.mxu0
        %v2243 = vadd.f32 0.0, %v2242
        %2244 = vmatmul.f32.gmra.mxu0 %v2217
        %v2245 = vpop.f32.mrf.mxu0
        %v2246 = vadd.f32 0.0, %v2245
        %2247 = vmatmul.f32.gmra.mxu0 %v2220
        %v2248 = vpop.f32.mrf.mxu0
        %v2249 = vadd.f32 0.0, %v2248
        %2250 = vdwg.mxu0
        %v2252 = vsel %vm498, %v1707, 0
        %v2255 = vsel %vm498, %v1708, 0
        %v2258 = vsel %vm498, %v1709, 0
        %v2261 = vsel %vm508, %v1712, 0
        %2263 = vmatpush.msra.mxu0 0.0
        %2264 = vmatpush.msra.mxu0 0.0
        %2265 = vmatpush.msra.mxu0 0.0
        %2266 = vmatpush.msra.mxu0 0.0
        %2267 = vmatpush.msra.mxu0 0.0
        %2268 = vmatpush.msra.mxu0 0.0
        %2269 = vmatpush.msra.mxu0 0.0
        %2270 = vmatpush.msra.mxu0 0.0
        %2271 = vmatpush.msra.mxu0 0.0
        %2272 = vmatpush.msra.mxu0 0.0
        %2273 = vmatpush.msra.mxu0 0.0
        %2274 = vmatpush.msra.mxu0 0.0
        %2275 = vmatpush.msra.mxu0 0.0
        %2276 = vmatpush.msra.mxu0 %v2261
        %2277 = vmatpush.msra.mxu0 %v1711
        %2278 = vmatpush.msra.mxu0 %v1710
        %2279 = vmatmul.f32.gmra.mxu0 %v2252
        %v2280 = vpop.f32.mrf.mxu0
        %v2281 = vadd.f32 0.0, %v2280
        %2282 = vmatmul.f32.gmra.mxu0 %v2255
        %v2283 = vpop.f32.mrf.mxu0
        %v2284 = vadd.f32 0.0, %v2283
        %2285 = vmatmul.f32.gmra.mxu0 %v2258
        %v2286 = vpop.f32.mrf.mxu0
        %v2287 = vadd.f32 0.0, %v2286
        %2288 = vdwg.mxu0
        %v2290 = vsel %vm498, %v1713, 0
        %v2293 = vsel %vm498, %v1714, 0
        %v2296 = vsel %vm498, %v1715, 0
        %v2299 = vsel %vm508, %v1718, 0
        %2301 = vmatpush.msra.mxu0 0.0
        %2302 = vmatpush.msra.mxu0 0.0
        %2303 = vmatpush.msra.mxu0 0.0
        %2304 = vmatpush.msra.mxu0 0.0
        %2305 = vmatpush.msra.mxu0 0.0
        %2306 = vmatpush.msra.mxu0 0.0
        %2307 = vmatpush.msra.mxu0 0.0
        %2308 = vmatpush.msra.mxu0 0.0
        %2309 = vmatpush.msra.mxu0 0.0
        %2310 = vmatpush.msra.mxu0 0.0
        %2311 = vmatpush.msra.mxu0 0.0
        %2312 = vmatpush.msra.mxu0 0.0
        %2313 = vmatpush.msra.mxu0 0.0
        %2314 = vmatpush.msra.mxu0 %v2299
        %2315 = vmatpush.msra.mxu0 %v1717
        %2316 = vmatpush.msra.mxu0 %v1716
        %2317 = vmatmul.f32.gmra.mxu0 %v2290
        %v2318 = vpop.f32.mrf.mxu0
        %v2319 = vadd.f32 0.0, %v2318
        %2320 = vmatmul.f32.gmra.mxu0 %v2293
        %v2321 = vpop.f32.mrf.mxu0
        %v2322 = vadd.f32 0.0, %v2321
        %2323 = vmatmul.f32.gmra.mxu0 %v2296
        %v2324 = vpop.f32.mrf.mxu0
        %v2325 = vadd.f32 0.0, %v2324
        %2326 = vdwg.mxu0
        %v2328 = vsel %vm498, %v1749, 0
        %v2331 = vsel %vm498, %v1752, 0
        %v2334 = vsel %vm498, %v1755, 0
        %v2337 = vsel %vm508, %v1793, 0
        %2339 = vmatpush.msra.mxu0 0.0
        %2340 = vmatpush.msra.mxu0 0.0
        %2341 = vmatpush.msra.mxu0 0.0
        %2342 = vmatpush.msra.mxu0 0.0
        %2343 = vmatpush.msra.mxu0 0.0
        %2344 = vmatpush.msra.mxu0 0.0
        %2345 = vmatpush.msra.mxu0 0.0
        %2346 = vmatpush.msra.mxu0 0.0
        %2347 = vmatpush.msra.mxu0 0.0
        %2348 = vmatpush.msra.mxu0 0.0
        %2349 = vmatpush.msra.mxu0 0.0
        %2350 = vmatpush.msra.mxu0 0.0
        %2351 = vmatpush.msra.mxu0 0.0
        %2352 = vmatpush.msra.mxu0 %v2337
        %2353 = vmatpush.msra.mxu0 %v1790
        %2354 = vmatpush.msra.mxu0 %v1787
        %2355 = vmatmul.f32.gmra.mxu0 %v2328
        %v2356 = vpop.f32.mrf.mxu0
        %v2357 = vadd.f32 0.0, %v2356
        %2358 = vmatmul.f32.gmra.mxu0 %v2331
        %v2359 = vpop.f32.mrf.mxu0
        %v2360 = vadd.f32 0.0, %v2359
        %2361 = vmatmul.f32.gmra.mxu0 %v2334
        %v2362 = vpop.f32.mrf.mxu0
        %v2363 = vadd.f32 0.0, %v2362
        %2364 = vdwg.mxu0
        %v2366 = vsel %vm498, %v1825, 0
        %v2369 = vsel %vm498, %v1828, 0
        %v2372 = vsel %vm498, %v1831, 0
        %v2375 = vsel %vm508, %v1869, 0
        %2377 = vmatpush.msra.mxu0 0.0
        %2378 = vmatpush.msra.mxu0 0.0
        %2379 = vmatpush.msra.mxu0 0.0
        %2380 = vmatpush.msra.mxu0 0.0
        %2381 = vmatpush.msra.mxu0 0.0
        %2382 = vmatpush.msra.mxu0 0.0
        %2383 = vmatpush.msra.mxu0 0.0
        %2384 = vmatpush.msra.mxu0 0.0
        %2385 = vmatpush.msra.mxu0 0.0
        %2386 = vmatpush.msra.mxu0 0.0
        %2387 = vmatpush.msra.mxu0 0.0
        %2388 = vmatpush.msra.mxu0 0.0
        %2389 = vmatpush.msra.mxu0 0.0
        %2390 = vmatpush.msra.mxu0 %v2375
        %2391 = vmatpush.msra.mxu0 %v1866
        %2392 = vmatpush.msra.mxu0 %v1863
        %2393 = vmatmul.f32.gmra.mxu0 %v2366
        %v2394 = vpop.f32.mrf.mxu0
        %v2395 = vadd.f32 0.0, %v2394
        %2396 = vmatmul.f32.gmra.mxu0 %v2369
        %v2397 = vpop.f32.mrf.mxu0
        %v2398 = vadd.f32 0.0, %v2397
        %2399 = vmatmul.f32.gmra.mxu0 %v2372
        %v2400 = vpop.f32.mrf.mxu0
        %v2401 = vadd.f32 0.0, %v2400
        %2402 = vdwg.mxu0
        %v2404 = vsel %vm498, %v1901, 0
        %v2407 = vsel %vm498, %v1904, 0
        %v2410 = vsel %vm498, %v1907, 0
        %v2413 = vsel %vm508, %v1945, 0
        %2415 = vmatpush.msra.mxu0 0.0
        %2416 = vmatpush.msra.mxu0 0.0
        %2417 = vmatpush.msra.mxu0 0.0
        %2418 = vmatpush.msra.mxu0 0.0
        %2419 = vmatpush.msra.mxu0 0.0
        %2420 = vmatpush.msra.mxu0 0.0
        %2421 = vmatpush.msra.mxu0 0.0
        %2422 = vmatpush.msra.mxu0 0.0
        %2423 = vmatpush.msra.mxu0 0.0
        %2424 = vmatpush.msra.mxu0 0.0
        %2425 = vmatpush.msra.mxu0 0.0
        %2426 = vmatpush.msra.mxu0 0.0
        %2427 = vmatpush.msra.mxu0 0.0
        %2428 = vmatpush.msra.mxu0 %v2413
        %2429 = vmatpush.msra.mxu0 %v1942
        %2430 = vmatpush.msra.mxu0 %v1939
        %2431 = vmatmul.f32.gmra.mxu0 %v2404
        %v2432 = vpop.f32.mrf.mxu0
        %v2433 = vadd.f32 0.0, %v2432
        %2434 = vmatmul.f32.gmra.mxu0 %v2407
        %v2435 = vpop.f32.mrf.mxu0
        %v2436 = vadd.f32 0.0, %v2435
        %2437 = vmatmul.f32.gmra.mxu0 %v2410
        %v2438 = vpop.f32.mrf.mxu0
        %v2439 = vadd.f32 0.0, %v2438
        %2440 = vdwg.mxu0
        %v2442 = vsel %vm498, %v1977, 0
        %v2445 = vsel %vm498, %v1980, 0
        %v2448 = vsel %vm498, %v1983, 0
        %v2451 = vsel %vm508, %v2021, 0
        %2453 = vmatpush.msra.mxu0 0.0
        %2454 = vmatpush.msra.mxu0 0.0
        %2455 = vmatpush.msra.mxu0 0.0
        %2456 = vmatpush.msra.mxu0 0.0
        %2457 = vmatpush.msra.mxu0 0.0
        %2458 = vmatpush.msra.mxu0 0.0
        %2459 = vmatpush.msra.mxu0 0.0
        %2460 = vmatpush.msra.mxu0 0.0
        %2461 = vmatpush.msra.mxu0 0.0
        %2462 = vmatpush.msra.mxu0 0.0
        %2463 = vmatpush.msra.mxu0 0.0
        %2464 = vmatpush.msra.mxu0 0.0
        %2465 = vmatpush.msra.mxu0 0.0
        %2466 = vmatpush.msra.mxu0 %v2451
        %2467 = vmatpush.msra.mxu0 %v2018
        %2468 = vmatpush.msra.mxu0 %v2015
        %2469 = vmatmul.f32.gmra.mxu0 %v2442
        %v2470 = vpop.f32.mrf.mxu0
        %v2471 = vadd.f32 0.0, %v2470
        %2472 = vmatmul.f32.gmra.mxu0 %v2445
        %v2473 = vpop.f32.mrf.mxu0
        %v2474 = vadd.f32 0.0, %v2473
        %2475 = vmatmul.f32.gmra.mxu0 %v2448
        %v2476 = vpop.f32.mrf.mxu0
        %v2477 = vadd.f32 0.0, %v2476
        %2478 = vdwg.mxu0
        %v2480 = vsel %vm498, %v2053, 0
        %v2483 = vsel %vm498, %v2056, 0
        %v2486 = vsel %vm498, %v2059, 0
        %v2489 = vsel %vm508, %v2097, 0
        %2491 = vmatpush.msra.mxu0 0.0
        %2492 = vmatpush.msra.mxu0 0.0
        %2493 = vmatpush.msra.mxu0 0.0
        %2494 = vmatpush.msra.mxu0 0.0
        %2495 = vmatpush.msra.mxu0 0.0
        %2496 = vmatpush.msra.mxu0 0.0
        %2497 = vmatpush.msra.mxu0 0.0
        %2498 = vmatpush.msra.mxu0 0.0
        %2499 = vmatpush.msra.mxu0 0.0
        %2500 = vmatpush.msra.mxu0 0.0
        %2501 = vmatpush.msra.mxu0 0.0
        %2502 = vmatpush.msra.mxu0 0.0
        %2503 = vmatpush.msra.mxu0 0.0
        %2504 = vmatpush.msra.mxu0 %v2489
        %2505 = vmatpush.msra.mxu0 %v2094
        %2506 = vmatpush.msra.mxu0 %v2091
        %2507 = vmatmul.f32.gmra.mxu0 %v2480
        %v2508 = vpop.f32.mrf.mxu0
        %v2509 = vadd.f32 0.0, %v2508
        %2510 = vmatmul.f32.gmra.mxu0 %v2483
        %v2511 = vpop.f32.mrf.mxu0
        %v2512 = vadd.f32 0.0, %v2511
        %2513 = vmatmul.f32.gmra.mxu0 %v2486
        %v2514 = vpop.f32.mrf.mxu0
        %v2515 = vadd.f32 0.0, %v2514
        %2516 = vdwg.mxu0
        %v2518 = vsel %vm498, %v2129, 0
        %v2521 = vsel %vm498, %v2132, 0
        %v2524 = vsel %vm498, %v2135, 0
        %v2527 = vsel %vm508, %v2173, 0
        %2529 = vmatpush.msra.mxu0 0.0
        %2530 = vmatpush.msra.mxu0 0.0
        %2531 = vmatpush.msra.mxu0 0.0
        %2532 = vmatpush.msra.mxu0 0.0
        %2533 = vmatpush.msra.mxu0 0.0
        %2534 = vmatpush.msra.mxu0 0.0
        %2535 = vmatpush.msra.mxu0 0.0
        %2536 = vmatpush.msra.mxu0 0.0
        %2537 = vmatpush.msra.mxu0 0.0
        %2538 = vmatpush.msra.mxu0 0.0
        %2539 = vmatpush.msra.mxu0 0.0
        %2540 = vmatpush.msra.mxu0 0.0
        %2541 = vmatpush.msra.mxu0 0.0
        %2542 = vmatpush.msra.mxu0 %v2527
        %2543 = vmatpush.msra.mxu0 %v2170
        %2544 = vmatpush.msra.mxu0 %v2167
        %2545 = vmatmul.f32.gmra.mxu0 %v2518
        %v2546 = vpop.f32.mrf.mxu0
        %v2547 = vadd.f32 0.0, %v2546
        %2548 = vmatmul.f32.gmra.mxu0 %v2521
        %v2549 = vpop.f32.mrf.mxu0
        %v2550 = vadd.f32 0.0, %v2549
        %2551 = vmatmul.f32.gmra.mxu0 %v2524
        %v2552 = vpop.f32.mrf.mxu0
        %v2553 = vadd.f32 0.0, %v2552
        %2554 = vdwg.mxu0
        %v2556 = vsel %vm498, %v2205, 0
        %v2559 = vsel %vm498, %v2208, 0
        %v2562 = vsel %vm498, %v2211, 0
        %v2565 = vsel %vm508, %v2249, 0
        %2567 = vmatpush.msra.mxu0 0.0
        %2568 = vmatpush.msra.mxu0 0.0
        %2569 = vmatpush.msra.mxu0 0.0
        %2570 = vmatpush.msra.mxu0 0.0
        %2571 = vmatpush.msra.mxu0 0.0
        %2572 = vmatpush.msra.mxu0 0.0
        %2573 = vmatpush.msra.mxu0 0.0
        %2574 = vmatpush.msra.mxu0 0.0
        %2575 = vmatpush.msra.mxu0 0.0
        %2576 = vmatpush.msra.mxu0 0.0
        %2577 = vmatpush.msra.mxu0 0.0
        %2578 = vmatpush.msra.mxu0 0.0
        %2579 = vmatpush.msra.mxu0 0.0
        %2580 = vmatpush.msra.mxu0 %v2565
        %2581 = vmatpush.msra.mxu0 %v2246
        %2582 = vmatpush.msra.mxu0 %v2243
        %2583 = vmatmul.f32.gmra.mxu0 %v2556
        %v2584 = vpop.f32.mrf.mxu0
        %v2585 = vadd.f32 0.0, %v2584
        %2586 = vmatmul.f32.gmra.mxu0 %v2559
        %v2587 = vpop.f32.mrf.mxu0
        %v2588 = vadd.f32 0.0, %v2587
        %2589 = vmatmul.f32.gmra.mxu0 %v2562
        %v2590 = vpop.f32.mrf.mxu0
        %v2591 = vadd.f32 0.0, %v2590
        %2592 = vdwg.mxu0
        %v2594 = vsel %vm498, %v2281, 0
        %v2597 = vsel %vm498, %v2284, 0
        %v2600 = vsel %vm498, %v2287, 0
        %v2603 = vsel %vm508, %v2325, 0
        %2605 = vmatpush.msra.mxu0 0.0
        %2606 = vmatpush.msra.mxu0 0.0
        %2607 = vmatpush.msra.mxu0 0.0
        %2608 = vmatpush.msra.mxu0 0.0
        %2609 = vmatpush.msra.mxu0 0.0
        %2610 = vmatpush.msra.mxu0 0.0
        %2611 = vmatpush.msra.mxu0 0.0
        %2612 = vmatpush.msra.mxu0 0.0
        %2613 = vmatpush.msra.mxu0 0.0
        %2614 = vmatpush.msra.mxu0 0.0
        %2615 = vmatpush.msra.mxu0 0.0
        %2616 = vmatpush.msra.mxu0 0.0
        %2617 = vmatpush.msra.mxu0 0.0
        %2618 = vmatpush.msra.mxu0 %v2603
        %2619 = vmatpush.msra.mxu0 %v2322
        %2620 = vmatpush.msra.mxu0 %v2319
        %2621 = vmatmul.f32.gmra.mxu0 %v2594
        %v2622 = vpop.f32.mrf.mxu0
        %v2623 = vadd.f32 0.0, %v2622
        %2624 = vmatmul.f32.gmra.mxu0 %v2597
        %v2625 = vpop.f32.mrf.mxu0
        %v2626 = vadd.f32 0.0, %v2625
        %2627 = vmatmul.f32.gmra.mxu0 %v2600
        %v2628 = vpop.f32.mrf.mxu0
        %v2629 = vadd.f32 0.0, %v2628
        %2630 = vdwg.mxu0
        %v2632 = vsel %vm498, %v2357, 0
        %v2635 = vsel %vm498, %v2360, 0
        %v2638 = vsel %vm498, %v2363, 0
        %v2641 = vsel %vm508, %v1144, 0
        %2643 = vmatpush.msra.mxu0 0.0
        %2644 = vmatpush.msra.mxu0 0.0
        %2645 = vmatpush.msra.mxu0 0.0
        %2646 = vmatpush.msra.mxu0 0.0
        %2647 = vmatpush.msra.mxu0 0.0
        %2648 = vmatpush.msra.mxu0 0.0
        %2649 = vmatpush.msra.mxu0 0.0
        %2650 = vmatpush.msra.mxu0 0.0
        %2651 = vmatpush.msra.mxu0 0.0
        %2652 = vmatpush.msra.mxu0 0.0
        %2653 = vmatpush.msra.mxu0 0.0
        %2654 = vmatpush.msra.mxu0 0.0
        %2655 = vmatpush.msra.mxu0 0.0
        %2656 = vmatpush.msra.mxu0 %v2641
        %2657 = vmatpush.msra.mxu0 %v1141
        %2658 = vmatpush.msra.mxu0 %v1138
        %2659 = vmatmul.f32.gmra.mxu0 %v2632
        %v2660 = vpop.f32.mrf.mxu0
        %v2661 = vadd.f32 0.0, %v2660
        %2662 = vmatmul.f32.gmra.mxu0 %v2635
        %v2663 = vpop.f32.mrf.mxu0
        %v2664 = vadd.f32 0.0, %v2663
        %2665 = vmatmul.f32.gmra.mxu0 %v2638
        %v2666 = vpop.f32.mrf.mxu0
        %v2667 = vadd.f32 0.0, %v2666
        %2668 = vdwg.mxu0
        %v2670 = vsel %vm498, %v2395, 0
        %v2673 = vsel %vm498, %v2398, 0
        %v2676 = vsel %vm498, %v2401, 0
        %v2679 = vsel %vm508, %v1182, 0
        %2681 = vmatpush.msra.mxu0 0.0
        %2682 = vmatpush.msra.mxu0 0.0
        %2683 = vmatpush.msra.mxu0 0.0
        %2684 = vmatpush.msra.mxu0 0.0
        %2685 = vmatpush.msra.mxu0 0.0
        %2686 = vmatpush.msra.mxu0 0.0
        %2687 = vmatpush.msra.mxu0 0.0
        %2688 = vmatpush.msra.mxu0 0.0
        %2689 = vmatpush.msra.mxu0 0.0
        %2690 = vmatpush.msra.mxu0 0.0
        %2691 = vmatpush.msra.mxu0 0.0
        %2692 = vmatpush.msra.mxu0 0.0
        %2693 = vmatpush.msra.mxu0 0.0
        %2694 = vmatpush.msra.mxu0 %v2679
        %2695 = vmatpush.msra.mxu0 %v1179
        %2696 = vmatpush.msra.mxu0 %v1176
        %2697 = vmatmul.f32.gmra.mxu0 %v2670
        %v2698 = vpop.f32.mrf.mxu0
        %v2699 = vadd.f32 0.0, %v2698
        %2700 = vmatmul.f32.gmra.mxu0 %v2673
        %v2701 = vpop.f32.mrf.mxu0
        %v2702 = vadd.f32 0.0, %v2701
        %2703 = vmatmul.f32.gmra.mxu0 %v2676
        %v2704 = vpop.f32.mrf.mxu0
        %v2705 = vadd.f32 0.0, %v2704
        %2706 = vdwg.mxu0
        %v2708 = vsel %vm498, %v2433, 0
        %v2711 = vsel %vm498, %v2436, 0
        %v2714 = vsel %vm498, %v2439, 0
        %v2717 = vsel %vm508, %v1220, 0
        %2719 = vmatpush.msra.mxu0 0.0
        %2720 = vmatpush.msra.mxu0 0.0
        %2721 = vmatpush.msra.mxu0 0.0
        %2722 = vmatpush.msra.mxu0 0.0
        %2723 = vmatpush.msra.mxu0 0.0
        %2724 = vmatpush.msra.mxu0 0.0
        %2725 = vmatpush.msra.mxu0 0.0
        %2726 = vmatpush.msra.mxu0 0.0
        %2727 = vmatpush.msra.mxu0 0.0
        %2728 = vmatpush.msra.mxu0 0.0
        %2729 = vmatpush.msra.mxu0 0.0
        %2730 = vmatpush.msra.mxu0 0.0
        %2731 = vmatpush.msra.mxu0 0.0
        %2732 = vmatpush.msra.mxu0 %v2717
        %2733 = vmatpush.msra.mxu0 %v1217
        %2734 = vmatpush.msra.mxu0 %v1214
        %2735 = vmatmul.f32.gmra.mxu0 %v2708
        %v2736 = vpop.f32.mrf.mxu0
        %v2737 = vadd.f32 0.0, %v2736
        %2738 = vmatmul.f32.gmra.mxu0 %v2711
        %v2739 = vpop.f32.mrf.mxu0
        %v2740 = vadd.f32 0.0, %v2739
        %2741 = vmatmul.f32.gmra.mxu0 %v2714
        %v2742 = vpop.f32.mrf.mxu0
        %v2743 = vadd.f32 0.0, %v2742
        %2744 = vdwg.mxu0
        %v2746 = vsel %vm498, %v2471, 0
        %v2749 = vsel %vm498, %v2474, 0
        %v2752 = vsel %vm498, %v2477, 0
        %v2755 = vsel %vm508, %v1258, 0
        %2757 = vmatpush.msra.mxu0 0.0
        %2758 = vmatpush.msra.mxu0 0.0
        %2759 = vmatpush.msra.mxu0 0.0
        %2760 = vmatpush.msra.mxu0 0.0
        %2761 = vmatpush.msra.mxu0 0.0
        %2762 = vmatpush.msra.mxu0 0.0
        %2763 = vmatpush.msra.mxu0 0.0
        %2764 = vmatpush.msra.mxu0 0.0
        %2765 = vmatpush.msra.mxu0 0.0
        %2766 = vmatpush.msra.mxu0 0.0
        %2767 = vmatpush.msra.mxu0 0.0
        %2768 = vmatpush.msra.mxu0 0.0
        %2769 = vmatpush.msra.mxu0 0.0
        %2770 = vmatpush.msra.mxu0 %v2755
        %2771 = vmatpush.msra.mxu0 %v1255
        %2772 = vmatpush.msra.mxu0 %v1252
        %2773 = vmatmul.f32.gmra.mxu0 %v2746
        %v2774 = vpop.f32.mrf.mxu0
        %v2775 = vadd.f32 0.0, %v2774
        %2776 = vmatmul.f32.gmra.mxu0 %v2749
        %v2777 = vpop.f32.mrf.mxu0
        %v2778 = vadd.f32 0.0, %v2777
        %2779 = vmatmul.f32.gmra.mxu0 %v2752
        %v2780 = vpop.f32.mrf.mxu0
        %v2781 = vadd.f32 0.0, %v2780
        %2782 = vdwg.mxu0
        %v2784 = vsel %vm498, %v2509, 0
        %v2787 = vsel %vm498, %v2512, 0
        %v2790 = vsel %vm498, %v2515, 0
        %v2793 = vsel %vm508, %v1296, 0
        %2795 = vmatpush.msra.mxu0 0.0
        %2796 = vmatpush.msra.mxu0 0.0
        %2797 = vmatpush.msra.mxu0 0.0
        %2798 = vmatpush.msra.mxu0 0.0
        %2799 = vmatpush.msra.mxu0 0.0
        %2800 = vmatpush.msra.mxu0 0.0
        %2801 = vmatpush.msra.mxu0 0.0
        %2802 = vmatpush.msra.mxu0 0.0
        %2803 = vmatpush.msra.mxu0 0.0
        %2804 = vmatpush.msra.mxu0 0.0
        %2805 = vmatpush.msra.mxu0 0.0
        %2806 = vmatpush.msra.mxu0 0.0
        %2807 = vmatpush.msra.mxu0 0.0
        %2808 = vmatpush.msra.mxu0 %v2793
        %2809 = vmatpush.msra.mxu0 %v1293
        %2810 = vmatpush.msra.mxu0 %v1290
        %2811 = vmatmul.f32.gmra.mxu0 %v2784
        %v2812 = vpop.f32.mrf.mxu0
        %v2813 = vadd.f32 0.0, %v2812
        %2814 = vmatmul.f32.gmra.mxu0 %v2787
        %v2815 = vpop.f32.mrf.mxu0
        %v2816 = vadd.f32 0.0, %v2815
        %2817 = vmatmul.f32.gmra.mxu0 %v2790
        %v2818 = vpop.f32.mrf.mxu0
        %v2819 = vadd.f32 0.0, %v2818
        %2820 = vdwg.mxu0
        %v2822 = vsel %vm498, %v2547, 0
        %v2825 = vsel %vm498, %v2550, 0
        %v2828 = vsel %vm498, %v2553, 0
        %v2831 = vsel %vm508, %v1334, 0
        %2833 = vmatpush.msra.mxu0 0.0
        %2834 = vmatpush.msra.mxu0 0.0
        %2835 = vmatpush.msra.mxu0 0.0
        %2836 = vmatpush.msra.mxu0 0.0
        %2837 = vmatpush.msra.mxu0 0.0
        %2838 = vmatpush.msra.mxu0 0.0
        %2839 = vmatpush.msra.mxu0 0.0
        %2840 = vmatpush.msra.mxu0 0.0
        %2841 = vmatpush.msra.mxu0 0.0
        %2842 = vmatpush.msra.mxu0 0.0
        %2843 = vmatpush.msra.mxu0 0.0
        %2844 = vmatpush.msra.mxu0 0.0
        %2845 = vmatpush.msra.mxu0 0.0
        %2846 = vmatpush.msra.mxu0 %v2831
        %2847 = vmatpush.msra.mxu0 %v1331
        %2848 = vmatpush.msra.mxu0 %v1328
        %2849 = vmatmul.f32.gmra.mxu0 %v2822
        %v2850 = vpop.f32.mrf.mxu0
        %v2851 = vadd.f32 0.0, %v2850
        %2852 = vmatmul.f32.gmra.mxu0 %v2825
        %v2853 = vpop.f32.mrf.mxu0
        %v2854 = vadd.f32 0.0, %v2853
        %2855 = vmatmul.f32.gmra.mxu0 %v2828
        %v2856 = vpop.f32.mrf.mxu0
        %v2857 = vadd.f32 0.0, %v2856
        %2858 = vdwg.mxu0
        %v2860 = vsel %vm498, %v2585, 0
        %v2863 = vsel %vm498, %v2588, 0
        %v2866 = vsel %vm498, %v2591, 0
        %v2869 = vsel %vm508, %v1372, 0
        %2871 = vmatpush.msra.mxu0 0.0
        %2872 = vmatpush.msra.mxu0 0.0
        %2873 = vmatpush.msra.mxu0 0.0
        %2874 = vmatpush.msra.mxu0 0.0
        %2875 = vmatpush.msra.mxu0 0.0
        %2876 = vmatpush.msra.mxu0 0.0
        %2877 = vmatpush.msra.mxu0 0.0
        %2878 = vmatpush.msra.mxu0 0.0
        %2879 = vmatpush.msra.mxu0 0.0
        %2880 = vmatpush.msra.mxu0 0.0
        %2881 = vmatpush.msra.mxu0 0.0
        %2882 = vmatpush.msra.mxu0 0.0
        %2883 = vmatpush.msra.mxu0 0.0
        %2884 = vmatpush.msra.mxu0 %v2869
        %2885 = vmatpush.msra.mxu0 %v1369
        %2886 = vmatpush.msra.mxu0 %v1366
        %2887 = vmatmul.f32.gmra.mxu0 %v2860
        %v2888 = vpop.f32.mrf.mxu0
        %v2889 = vadd.f32 0.0, %v2888
        %2890 = vmatmul.f32.gmra.mxu0 %v2863
        %v2891 = vpop.f32.mrf.mxu0
        %v2892 = vadd.f32 0.0, %v2891
        %2893 = vmatmul.f32.gmra.mxu0 %v2866
        %v2894 = vpop.f32.mrf.mxu0
        %v2895 = vadd.f32 0.0, %v2894
        %2896 = vdwg.mxu0
        %v2898 = vsel %vm498, %v2623, 0
        %v2901 = vsel %vm498, %v2626, 0
        %v2904 = vsel %vm498, %v2629, 0
        %v2907 = vsel %vm508, %v1410, 0
        %2909 = vmatpush.msra.mxu0 0.0
        %2910 = vmatpush.msra.mxu0 0.0
        %2911 = vmatpush.msra.mxu0 0.0
        %2912 = vmatpush.msra.mxu0 0.0
        %2913 = vmatpush.msra.mxu0 0.0
        %2914 = vmatpush.msra.mxu0 0.0
        %2915 = vmatpush.msra.mxu0 0.0
        %2916 = vmatpush.msra.mxu0 0.0
        %2917 = vmatpush.msra.mxu0 0.0
        %2918 = vmatpush.msra.mxu0 0.0
        %2919 = vmatpush.msra.mxu0 0.0
        %2920 = vmatpush.msra.mxu0 0.0
        %2921 = vmatpush.msra.mxu0 0.0
        %2922 = vmatpush.msra.mxu0 %v2907
        %2923 = vmatpush.msra.mxu0 %v1407
        %2924 = vmatpush.msra.mxu0 %v1404
        %2925 = vmatmul.f32.gmra.mxu0 %v2898
        %v2926 = vpop.f32.mrf.mxu0
        %v2927 = vadd.f32 0.0, %v2926
        %2928 = vmatmul.f32.gmra.mxu0 %v2901
        %v2929 = vpop.f32.mrf.mxu0
        %v2930 = vadd.f32 0.0, %v2929
        %2931 = vmatmul.f32.gmra.mxu0 %v2904
        %v2932 = vpop.f32.mrf.mxu0
        %v2933 = vadd.f32 0.0, %v2932
        %2934 = vdwg.mxu0
        %2935 = vst.msk [vmem:[#allocation2] sm:$0xff] %vm498, %v2661
        %2936 = vst.msk [vmem:[#allocation2 + $0x8] sm:$0xff] %vm498, %v2664
        %vm2937 = vcmask 158720
        %2938 = vst.msk [vmem:[#allocation2 + $0x10] sm:$0xf] %vm2937, %v2667
        %2939 = vst.msk [vmem:[#allocation2 + $0x18] sm:$0xff] %vm498, %v2699
        %2940 = vst.msk [vmem:[#allocation2 + $0x20] sm:$0xff] %vm498, %v2702
        %2941 = vst.msk [vmem:[#allocation2 + $0x28] sm:$0xf] %vm2937, %v2705
        %2942 = vst.msk [vmem:[#allocation2 + $0x30] sm:$0xff] %vm498, %v2737
        %2943 = vst.msk [vmem:[#allocation2 + $0x38] sm:$0xff] %vm498, %v2740
        %2944 = vst.msk [vmem:[#allocation2 + $0x40] sm:$0xf] %vm2937, %v2743
        %2945 = vst.msk [vmem:[#allocation2 + $0x48] sm:$0xff] %vm498, %v2775
        %2946 = vst.msk [vmem:[#allocation2 + $0x50] sm:$0xff] %vm498, %v2778
        %2947 = vst.msk [vmem:[#allocation2 + $0x58] sm:$0xf] %vm2937, %v2781
        %2948 = vst.msk [vmem:[#allocation2 + $0x60] sm:$0xff] %vm498, %v2813
        %2949 = vst.msk [vmem:[#allocation2 + $0x68] sm:$0xff] %vm498, %v2816
        %2950 = vst.msk [vmem:[#allocation2 + $0x70] sm:$0xf] %vm2937, %v2819
        %2951 = vst.msk [vmem:[#allocation2 + $0x78] sm:$0xff] %vm498, %v2851
        %2952 = vst.msk [vmem:[#allocation2 + $0x80] sm:$0xff] %vm498, %v2854
        %2953 = vst.msk [vmem:[#allocation2 + $0x88] sm:$0xf] %vm2937, %v2857
        %2954 = vst.msk [vmem:[#allocation2 + $0x90] sm:$0xff] %vm498, %v2889
        %2955 = vst.msk [vmem:[#allocation2 + $0x98] sm:$0xff] %vm498, %v2892
        %2956 = vst.msk [vmem:[#allocation2 + $0xa0] sm:$0xf] %vm2937, %v2895
        %2957 = vst.msk [vmem:[#allocation2 + $0xa8] sm:$0xff] %vm498, %v2927
        %2958 = vst.msk [vmem:[#allocation2 + $0xb0] sm:$0xff] %vm498, %v2930
        %2959 = vst.msk [vmem:[#allocation2 + $0xb8] sm:$0xf] %vm2937, %v2933
        %v2960 = vld [vmem:[#allocation2] sm:$0x1]
        %v2961 = vld [vmem:[#allocation2 + $0x18] sm:$0x1]
        %v2962 = vld [vmem:[#allocation2 + $0x30] sm:$0x1]
        %v2963 = vld [vmem:[#allocation2 + $0x48] sm:$0x1]
        %v2964 = vld [vmem:[#allocation2 + $0x60] sm:$0x1]
        %v2965 = vld [vmem:[#allocation2 + $0x78] sm:$0x1]
        %v2966 = vld [vmem:[#allocation2 + $0x90] sm:$0x1]
        %v2967 = vld [vmem:[#allocation2 + $0xa8] sm:$0x1]
        %v2968 = vld [vmem:[%s3] sm:$0xff]
        %v2969 = vld [vmem:[%s3 + $0x8] sm:$0xff]
        %v2970 = vld [vmem:[%s3 + $0x10] sm:$0xf]
        %v2971 = vld [vmem:[#allocation2 + $0x1] sm:$0x1]
        %v2972 = vld [vmem:[#allocation2 + $0x19] sm:$0x1]
        %v2973 = vld [vmem:[#allocation2 + $0x31] sm:$0x1]
        %v2974 = vld [vmem:[#allocation2 + $0x49] sm:$0x1]
        %v2975 = vld [vmem:[#allocation2 + $0x61] sm:$0x1]
        %v2976 = vld [vmem:[#allocation2 + $0x79] sm:$0x1]
        %v2977 = vld [vmem:[#allocation2 + $0x91] sm:$0x1]
        %v2978 = vld [vmem:[#allocation2 + $0xa9] sm:$0x1]
        %s2979 = scalar_lea.vmem %s3, 24
        %v2980 = vld [vmem:[%s2979] sm:$0xff]
        %v2981 = vld [vmem:[%s2979 + $0x8] sm:$0xff]
        %v2982 = vld [vmem:[%s2979 + $0x10] sm:$0xf]
        %v2991 = vrot.slane %v2972, 7
        %vm2992 = vcmask 1041409
        %v2993 = vsel %vm2992, %v2991, %v2971
        %v2994 = vrot.slane %v2973, 6
        %vm2995 = vcmask 1042434
        %v2996 = vsel %vm2995, %v2994, %v2993
        %v2997 = vrot.slane %v2974, 5
        %vm2998 = vcmask 1043459
        %v2999 = vsel %vm2998, %v2997, %v2996
        %v3000 = vrot.slane %v2975, 4
        %vm3001 = vcmask 1044484
        %v3002 = vsel %vm3001, %v3000, %v2999
        %v3003 = vrot.slane %v2976, 3
        %vm3004 = vcmask 1045509
        %v3005 = vsel %vm3004, %v3003, %v3002
        %v3006 = vrot.slane %v2977, 2
        %vm3007 = vcmask 1046534
        %v3008 = vsel %vm3007, %v3006, %v3005
        %v3009 = vrot.slane %v2978, 1
        %vm3010 = vcmask 1047559
        %v3011 = vsel %vm3010, %v3009, %v3008
        %v3012 = vsel %vm498, %v3011, 0
        %v3015 = vsel %vm508, %v2982, 0
        %3017 = vmatpush.msra.mxu0 0.0
        %3018 = vmatpush.msra.mxu0 0.0
        %3019 = vmatpush.msra.mxu0 0.0
        %3020 = vmatpush.msra.mxu0 0.0
        %3021 = vmatpush.msra.mxu0 0.0
        %3022 = vmatpush.msra.mxu0 0.0
        %3023 = vmatpush.msra.mxu0 0.0
        %3024 = vmatpush.msra.mxu0 0.0
        %3025 = vmatpush.msra.mxu0 0.0
        %3026 = vmatpush.msra.mxu0 0.0
        %3027 = vmatpush.msra.mxu0 0.0
        %3028 = vmatpush.msra.mxu0 0.0
        %3029 = vmatpush.msra.mxu0 0.0
        %3030 = vmatpush.msra.mxu0 %v3015
        %3031 = vmatpush.msra.mxu0 %v2981
        %3032 = vmatpush.msra.mxu0 %v2980
        %3033 = vmatmul.f32.gmra.mxu0 %v3012
        %v3034 = vpop.f32.mrf.mxu0
        %v3035 = vadd.f32 0.0, %v3034
        %3036 = vdwg.mxu0
        %v3045 = vrot.slane %v2961, 7
        %v3046 = vsel %vm2992, %v3045, %v2960
        %v3047 = vrot.slane %v2962, 6
        %v3048 = vsel %vm2995, %v3047, %v3046
        %v3049 = vrot.slane %v2963, 5
        %v3050 = vsel %vm2998, %v3049, %v3048
        %v3051 = vrot.slane %v2964, 4
        %v3052 = vsel %vm3001, %v3051, %v3050
        %v3053 = vrot.slane %v2965, 3
        %v3054 = vsel %vm3004, %v3053, %v3052
        %v3055 = vrot.slane %v2966, 2
        %v3056 = vsel %vm3007, %v3055, %v3054
        %v3057 = vrot.slane %v2967, 1
        %v3058 = vsel %vm3010, %v3057, %v3056
        %v3059 = vsel %vm498, %v3058, 0
        %v3062 = vsel %vm508, %v2970, 0
        %3064 = vmatpush.msra.mxu0 0.0
        %3065 = vmatpush.msra.mxu0 0.0
        %3066 = vmatpush.msra.mxu0 0.0
        %3067 = vmatpush.msra.mxu0 0.0
        %3068 = vmatpush.msra.mxu0 0.0
        %3069 = vmatpush.msra.mxu0 0.0
        %3070 = vmatpush.msra.mxu0 0.0
        %3071 = vmatpush.msra.mxu0 0.0
        %3072 = vmatpush.msra.mxu0 0.0
        %3073 = vmatpush.msra.mxu0 0.0
        %3074 = vmatpush.msra.mxu0 0.0
        %3075 = vmatpush.msra.mxu0 0.0
        %3076 = vmatpush.msra.mxu0 0.0
        %3077 = vmatpush.msra.mxu0 %v3062
        %3078 = vmatpush.msra.mxu0 %v2969
        %3079 = vmatpush.msra.mxu0 %v2968
        %3080 = vmatmul.f32.gmra.mxu0 %v3059
        %v3081 = vpop.f32.mrf.mxu0
        %v3082 = vadd.f32 %v3035, %v3081
        %3083 = vdwg.mxu0
        %v3084 = vld [vmem:[#allocation2 + $0x2] sm:$0x1]
        %v3085 = vld [vmem:[#allocation2 + $0x1a] sm:$0x1]
        %v3086 = vld [vmem:[#allocation2 + $0x32] sm:$0x1]
        %v3087 = vld [vmem:[#allocation2 + $0x4a] sm:$0x1]
        %v3088 = vld [vmem:[#allocation2 + $0x62] sm:$0x1]
        %v3089 = vld [vmem:[#allocation2 + $0x7a] sm:$0x1]
        %v3090 = vld [vmem:[#allocation2 + $0x92] sm:$0x1]
        %v3091 = vld [vmem:[#allocation2 + $0xaa] sm:$0x1]
        %s3092 = scalar_lea.vmem %s3, 48
        %v3093 = vld [vmem:[%s3092] sm:$0xff]
        %v3094 = vld [vmem:[%s3092 + $0x8] sm:$0xff]
        %v3095 = vld [vmem:[%s3092 + $0x10] sm:$0xf]
        %v3104 = vrot.slane %v3085, 7
        %v3105 = vsel %vm2992, %v3104, %v3084
        %v3106 = vrot.slane %v3086, 6
        %v3107 = vsel %vm2995, %v3106, %v3105
        %v3108 = vrot.slane %v3087, 5
        %v3109 = vsel %vm2998, %v3108, %v3107
        %v3110 = vrot.slane %v3088, 4
        %v3111 = vsel %vm3001, %v3110, %v3109
        %v3112 = vrot.slane %v3089, 3
        %v3113 = vsel %vm3004, %v3112, %v3111
        %v3114 = vrot.slane %v3090, 2
        %v3115 = vsel %vm3007, %v3114, %v3113
        %v3116 = vrot.slane %v3091, 1
        %v3117 = vsel %vm3010, %v3116, %v3115
        %v3118 = vsel %vm498, %v3117, 0
        %v3121 = vsel %vm508, %v3095, 0
        %3123 = vmatpush.msra.mxu0 0.0
        %3124 = vmatpush.msra.mxu0 0.0
        %3125 = vmatpush.msra.mxu0 0.0
        %3126 = vmatpush.msra.mxu0 0.0
        %3127 = vmatpush.msra.mxu0 0.0
        %3128 = vmatpush.msra.mxu0 0.0
        %3129 = vmatpush.msra.mxu0 0.0
        %3130 = vmatpush.msra.mxu0 0.0
        %3131 = vmatpush.msra.mxu0 0.0
        %3132 = vmatpush.msra.mxu0 0.0
        %3133 = vmatpush.msra.mxu0 0.0
        %3134 = vmatpush.msra.mxu0 0.0
        %3135 = vmatpush.msra.mxu0 0.0
        %3136 = vmatpush.msra.mxu0 %v3121
        %3137 = vmatpush.msra.mxu0 %v3094
        %3138 = vmatpush.msra.mxu0 %v3093
        %3139 = vmatmul.f32.gmra.mxu0 %v3118
        %v3140 = vpop.f32.mrf.mxu0
        %v3141 = vadd.f32 0.0, %v3140
        %3142 = vdwg.mxu0
        %v3143 = vadd.f32 %v3082, %v3141
        %v3144 = vld [vmem:[#allocation2 + $0x3] sm:$0x1]
        %v3145 = vld [vmem:[#allocation2 + $0x1b] sm:$0x1]
        %v3146 = vld [vmem:[#allocation2 + $0x33] sm:$0x1]
        %v3147 = vld [vmem:[#allocation2 + $0x4b] sm:$0x1]
        %v3148 = vld [vmem:[#allocation2 + $0x63] sm:$0x1]
        %v3149 = vld [vmem:[#allocation2 + $0x7b] sm:$0x1]
        %v3150 = vld [vmem:[#allocation2 + $0x93] sm:$0x1]
        %v3151 = vld [vmem:[#allocation2 + $0xab] sm:$0x1]
        %s3152 = scalar_lea.vmem %s3, 72
        %v3153 = vld [vmem:[%s3152] sm:$0xff]
        %v3154 = vld [vmem:[%s3152 + $0x8] sm:$0xff]
        %v3155 = vld [vmem:[%s3152 + $0x10] sm:$0xf]
        %v3164 = vrot.slane %v3145, 7
        %v3165 = vsel %vm2992, %v3164, %v3144
        %v3166 = vrot.slane %v3146, 6
        %v3167 = vsel %vm2995, %v3166, %v3165
        %v3168 = vrot.slane %v3147, 5
        %v3169 = vsel %vm2998, %v3168, %v3167
        %v3170 = vrot.slane %v3148, 4
        %v3171 = vsel %vm3001, %v3170, %v3169
        %v3172 = vrot.slane %v3149, 3
        %v3173 = vsel %vm3004, %v3172, %v3171
        %v3174 = vrot.slane %v3150, 2
        %v3175 = vsel %vm3007, %v3174, %v3173
        %v3176 = vrot.slane %v3151, 1
        %v3177 = vsel %vm3010, %v3176, %v3175
        %v3178 = vsel %vm498, %v3177, 0
        %v3181 = vsel %vm508, %v3155, 0
        %3183 = vmatpush.msra.mxu0 0.0
        %3184 = vmatpush.msra.mxu0 0.0
        %3185 = vmatpush.msra.mxu0 0.0
        %3186 = vmatpush.msra.mxu0 0.0
        %3187 = vmatpush.msra.mxu0 0.0
        %3188 = vmatpush.msra.mxu0 0.0
        %3189 = vmatpush.msra.mxu0 0.0
        %3190 = vmatpush.msra.mxu0 0.0
        %3191 = vmatpush.msra.mxu0 0.0
        %3192 = vmatpush.msra.mxu0 0.0
        %3193 = vmatpush.msra.mxu0 0.0
        %3194 = vmatpush.msra.mxu0 0.0
        %3195 = vmatpush.msra.mxu0 0.0
        %3196 = vmatpush.msra.mxu0 %v3181
        %3197 = vmatpush.msra.mxu0 %v3154
        %3198 = vmatpush.msra.mxu0 %v3153
        %3199 = vmatmul.f32.gmra.mxu0 %v3178
        %v3200 = vpop.f32.mrf.mxu0
        %v3201 = vadd.f32 0.0, %v3200
        %3202 = vdwg.mxu0
        %v3203 = vadd.f32 %v3143, %v3201
        %v3204 = vld [vmem:[#allocation2 + $0x4] sm:$0x1]
        %v3205 = vld [vmem:[#allocation2 + $0x1c] sm:$0x1]
        %v3206 = vld [vmem:[#allocation2 + $0x34] sm:$0x1]
        %v3207 = vld [vmem:[#allocation2 + $0x4c] sm:$0x1]
        %v3208 = vld [vmem:[#allocation2 + $0x64] sm:$0x1]
        %v3209 = vld [vmem:[#allocation2 + $0x7c] sm:$0x1]
        %v3210 = vld [vmem:[#allocation2 + $0x94] sm:$0x1]
        %v3211 = vld [vmem:[#allocation2 + $0xac] sm:$0x1]
        %s3212 = scalar_lea.vmem %s3, 96
        %v3213 = vld [vmem:[%s3212] sm:$0xff]
        %v3214 = vld [vmem:[%s3212 + $0x8] sm:$0xff]
        %v3215 = vld [vmem:[%s3212 + $0x10] sm:$0xf]
        %v3224 = vrot.slane %v3205, 7
        %v3225 = vsel %vm2992, %v3224, %v3204
        %v3226 = vrot.slane %v3206, 6
        %v3227 = vsel %vm2995, %v3226, %v3225
        %v3228 = vrot.slane %v3207, 5
        %v3229 = vsel %vm2998, %v3228, %v3227
        %v3230 = vrot.slane %v3208, 4
        %v3231 = vsel %vm3001, %v3230, %v3229
        %v3232 = vrot.slane %v3209, 3
        %v3233 = vsel %vm3004, %v3232, %v3231
        %v3234 = vrot.slane %v3210, 2
        %v3235 = vsel %vm3007, %v3234, %v3233
        %v3236 = vrot.slane %v3211, 1
        %v3237 = vsel %vm3010, %v3236, %v3235
        %v3238 = vsel %vm498, %v3237, 0
        %v3241 = vsel %vm508, %v3215, 0
        %3243 = vmatpush.msra.mxu0 0.0
        %3244 = vmatpush.msra.mxu0 0.0
        %3245 = vmatpush.msra.mxu0 0.0
        %3246 = vmatpush.msra.mxu0 0.0
        %3247 = vmatpush.msra.mxu0 0.0
        %3248 = vmatpush.msra.mxu0 0.0
        %3249 = vmatpush.msra.mxu0 0.0
        %3250 = vmatpush.msra.mxu0 0.0
        %3251 = vmatpush.msra.mxu0 0.0
        %3252 = vmatpush.msra.mxu0 0.0
        %3253 = vmatpush.msra.mxu0 0.0
        %3254 = vmatpush.msra.mxu0 0.0
        %3255 = vmatpush.msra.mxu0 0.0
        %3256 = vmatpush.msra.mxu0 %v3241
        %3257 = vmatpush.msra.mxu0 %v3214
        %3258 = vmatpush.msra.mxu0 %v3213
        %3259 = vmatmul.f32.gmra.mxu0 %v3238
        %v3260 = vpop.f32.mrf.mxu0
        %v3261 = vadd.f32 0.0, %v3260
        %3262 = vdwg.mxu0
        %v3263 = vadd.f32 %v3203, %v3261
        %v3264 = vld [vmem:[#allocation2 + $0x5] sm:$0x1]
        %v3265 = vld [vmem:[#allocation2 + $0x1d] sm:$0x1]
        %v3266 = vld [vmem:[#allocation2 + $0x35] sm:$0x1]
        %v3267 = vld [vmem:[#allocation2 + $0x4d] sm:$0x1]
        %v3268 = vld [vmem:[#allocation2 + $0x65] sm:$0x1]
        %v3269 = vld [vmem:[#allocation2 + $0x7d] sm:$0x1]
        %v3270 = vld [vmem:[#allocation2 + $0x95] sm:$0x1]
        %v3271 = vld [vmem:[#allocation2 + $0xad] sm:$0x1]
        %s3272 = scalar_lea.vmem %s3, 120
        %v3273 = vld [vmem:[%s3272] sm:$0xff]
        %v3274 = vld [vmem:[%s3272 + $0x8] sm:$0xff]
        %v3275 = vld [vmem:[%s3272 + $0x10] sm:$0xf]
        %v3284 = vrot.slane %v3265, 7
        %v3285 = vsel %vm2992, %v3284, %v3264
        %v3286 = vrot.slane %v3266, 6
        %v3287 = vsel %vm2995, %v3286, %v3285
        %v3288 = vrot.slane %v3267, 5
        %v3289 = vsel %vm2998, %v3288, %v3287
        %v3290 = vrot.slane %v3268, 4
        %v3291 = vsel %vm3001, %v3290, %v3289
        %v3292 = vrot.slane %v3269, 3
        %v3293 = vsel %vm3004, %v3292, %v3291
        %v3294 = vrot.slane %v3270, 2
        %v3295 = vsel %vm3007, %v3294, %v3293
        %v3296 = vrot.slane %v3271, 1
        %v3297 = vsel %vm3010, %v3296, %v3295
        %v3298 = vsel %vm498, %v3297, 0
        %v3301 = vsel %vm508, %v3275, 0
        %3303 = vmatpush.msra.mxu0 0.0
        %3304 = vmatpush.msra.mxu0 0.0
        %3305 = vmatpush.msra.mxu0 0.0
        %3306 = vmatpush.msra.mxu0 0.0
        %3307 = vmatpush.msra.mxu0 0.0
        %3308 = vmatpush.msra.mxu0 0.0
        %3309 = vmatpush.msra.mxu0 0.0
        %3310 = vmatpush.msra.mxu0 0.0
        %3311 = vmatpush.msra.mxu0 0.0
        %3312 = vmatpush.msra.mxu0 0.0
        %3313 = vmatpush.msra.mxu0 0.0
        %3314 = vmatpush.msra.mxu0 0.0
        %3315 = vmatpush.msra.mxu0 0.0
        %3316 = vmatpush.msra.mxu0 %v3301
        %3317 = vmatpush.msra.mxu0 %v3274
        %3318 = vmatpush.msra.mxu0 %v3273
        %3319 = vmatmul.f32.gmra.mxu0 %v3298
        %v3320 = vpop.f32.mrf.mxu0
        %v3321 = vadd.f32 0.0, %v3320
        %3322 = vdwg.mxu0
        %v3323 = vadd.f32 %v3263, %v3321
        %v3324 = vld [vmem:[#allocation2 + $0x6] sm:$0x1]
        %v3325 = vld [vmem:[#allocation2 + $0x1e] sm:$0x1]
        %v3326 = vld [vmem:[#allocation2 + $0x36] sm:$0x1]
        %v3327 = vld [vmem:[#allocation2 + $0x4e] sm:$0x1]
        %v3328 = vld [vmem:[#allocation2 + $0x66] sm:$0x1]
        %v3329 = vld [vmem:[#allocation2 + $0x7e] sm:$0x1]
        %v3330 = vld [vmem:[#allocation2 + $0x96] sm:$0x1]
        %v3331 = vld [vmem:[#allocation2 + $0xae] sm:$0x1]
        %s3332 = scalar_lea.vmem %s3, 144
        %v3333 = vld [vmem:[%s3332] sm:$0xff]
        %v3334 = vld [vmem:[%s3332 + $0x8] sm:$0xff]
        %v3335 = vld [vmem:[%s3332 + $0x10] sm:$0xf]
        %v3344 = vrot.slane %v3325, 7
        %v3345 = vsel %vm2992, %v3344, %v3324
        %v3346 = vrot.slane %v3326, 6
        %v3347 = vsel %vm2995, %v3346, %v3345
        %v3348 = vrot.slane %v3327, 5
        %v3349 = vsel %vm2998, %v3348, %v3347
        %v3350 = vrot.slane %v3328, 4
        %v3351 = vsel %vm3001, %v3350, %v3349
        %v3352 = vrot.slane %v3329, 3
        %v3353 = vsel %vm3004, %v3352, %v3351
        %v3354 = vrot.slane %v3330, 2
        %v3355 = vsel %vm3007, %v3354, %v3353
        %v3356 = vrot.slane %v3331, 1
        %v3357 = vsel %vm3010, %v3356, %v3355
        %v3358 = vsel %vm498, %v3357, 0
        %v3361 = vsel %vm508, %v3335, 0
        %3363 = vmatpush.msra.mxu0 0.0
        %3364 = vmatpush.msra.mxu0 0.0
        %3365 = vmatpush.msra.mxu0 0.0
        %3366 = vmatpush.msra.mxu0 0.0
        %3367 = vmatpush.msra.mxu0 0.0
        %3368 = vmatpush.msra.mxu0 0.0
        %3369 = vmatpush.msra.mxu0 0.0
        %3370 = vmatpush.msra.mxu0 0.0
        %3371 = vmatpush.msra.mxu0 0.0
        %3372 = vmatpush.msra.mxu0 0.0
        %3373 = vmatpush.msra.mxu0 0.0
        %3374 = vmatpush.msra.mxu0 0.0
        %3375 = vmatpush.msra.mxu0 0.0
        %3376 = vmatpush.msra.mxu0 %v3361
        %3377 = vmatpush.msra.mxu0 %v3334
        %3378 = vmatpush.msra.mxu0 %v3333
        %3379 = vmatmul.f32.gmra.mxu0 %v3358
        %v3380 = vpop.f32.mrf.mxu0
        %v3381 = vadd.f32 0.0, %v3380
        %3382 = vdwg.mxu0
        %v3383 = vadd.f32 %v3323, %v3381
        %v3384 = vld [vmem:[#allocation2 + $0x7] sm:$0x1]
        %v3385 = vld [vmem:[#allocation2 + $0x1f] sm:$0x1]
        %v3386 = vld [vmem:[#allocation2 + $0x37] sm:$0x1]
        %v3387 = vld [vmem:[#allocation2 + $0x4f] sm:$0x1]
        %v3388 = vld [vmem:[#allocation2 + $0x67] sm:$0x1]
        %v3389 = vld [vmem:[#allocation2 + $0x7f] sm:$0x1]
        %v3390 = vld [vmem:[#allocation2 + $0x97] sm:$0x1]
        %v3391 = vld [vmem:[#allocation2 + $0xaf] sm:$0x1]
        %s3392 = scalar_lea.vmem %s3, 168
        %v3393 = vld [vmem:[%s3392] sm:$0xff]
        %v3394 = vld [vmem:[%s3392 + $0x8] sm:$0xff]
        %v3395 = vld [vmem:[%s3392 + $0x10] sm:$0xf]
        %v3404 = vrot.slane %v3385, 7
        %v3405 = vsel %vm2992, %v3404, %v3384
        %v3406 = vrot.slane %v3386, 6
        %v3407 = vsel %vm2995, %v3406, %v3405
        %v3408 = vrot.slane %v3387, 5
        %v3409 = vsel %vm2998, %v3408, %v3407
        %v3410 = vrot.slane %v3388, 4
        %v3411 = vsel %vm3001, %v3410, %v3409
        %v3412 = vrot.slane %v3389, 3
        %v3413 = vsel %vm3004, %v3412, %v3411
        %v3414 = vrot.slane %v3390, 2
        %v3415 = vsel %vm3007, %v3414, %v3413
        %v3416 = vrot.slane %v3391, 1
        %v3417 = vsel %vm3010, %v3416, %v3415
        %v3418 = vsel %vm498, %v3417, 0
        %v3421 = vsel %vm508, %v3395, 0
        %3423 = vmatpush.msra.mxu0 0.0
        %3424 = vmatpush.msra.mxu0 0.0
        %3425 = vmatpush.msra.mxu0 0.0
        %3426 = vmatpush.msra.mxu0 0.0
        %3427 = vmatpush.msra.mxu0 0.0
        %3428 = vmatpush.msra.mxu0 0.0
        %3429 = vmatpush.msra.mxu0 0.0
        %3430 = vmatpush.msra.mxu0 0.0
        %3431 = vmatpush.msra.mxu0 0.0
        %3432 = vmatpush.msra.mxu0 0.0
        %3433 = vmatpush.msra.mxu0 0.0
        %3434 = vmatpush.msra.mxu0 0.0
        %3435 = vmatpush.msra.mxu0 0.0
        %3436 = vmatpush.msra.mxu0 %v3421
        %3437 = vmatpush.msra.mxu0 %v3394
        %3438 = vmatpush.msra.mxu0 %v3393
        %3439 = vmatmul.f32.gmra.mxu0 %v3418
        %v3440 = vpop.f32.mrf.mxu0
        %v3441 = vadd.f32 0.0, %v3440
        %3442 = vdwg.mxu0
        %v3443 = vadd.f32 %v3383, %v3441
        %v3444 = vld [vmem:[#allocation2 + $0x8] sm:$0x1]
        %v3445 = vld [vmem:[#allocation2 + $0x20] sm:$0x1]
        %v3446 = vld [vmem:[#allocation2 + $0x38] sm:$0x1]
        %v3447 = vld [vmem:[#allocation2 + $0x50] sm:$0x1]
        %v3448 = vld [vmem:[#allocation2 + $0x68] sm:$0x1]
        %v3449 = vld [vmem:[#allocation2 + $0x80] sm:$0x1]
        %v3450 = vld [vmem:[#allocation2 + $0x98] sm:$0x1]
        %v3451 = vld [vmem:[#allocation2 + $0xb0] sm:$0x1]
        %s3452 = scalar_lea.vmem %s3, 192
        %v3453 = vld [vmem:[%s3452] sm:$0xff]
        %v3454 = vld [vmem:[%s3452 + $0x8] sm:$0xff]
        %v3455 = vld [vmem:[%s3452 + $0x10] sm:$0xf]
        %v3464 = vrot.slane %v3445, 7
        %v3465 = vsel %vm2992, %v3464, %v3444
        %v3466 = vrot.slane %v3446, 6
        %v3467 = vsel %vm2995, %v3466, %v3465
        %v3468 = vrot.slane %v3447, 5
        %v3469 = vsel %vm2998, %v3468, %v3467
        %v3470 = vrot.slane %v3448, 4
        %v3471 = vsel %vm3001, %v3470, %v3469
        %v3472 = vrot.slane %v3449, 3
        %v3473 = vsel %vm3004, %v3472, %v3471
        %v3474 = vrot.slane %v3450, 2
        %v3475 = vsel %vm3007, %v3474, %v3473
        %v3476 = vrot.slane %v3451, 1
        %v3477 = vsel %vm3010, %v3476, %v3475
        %v3478 = vsel %vm498, %v3477, 0
        %v3481 = vsel %vm508, %v3455, 0
        %3483 = vmatpush.msra.mxu0 0.0
        %3484 = vmatpush.msra.mxu0 0.0
        %3485 = vmatpush.msra.mxu0 0.0
        %3486 = vmatpush.msra.mxu0 0.0
        %3487 = vmatpush.msra.mxu0 0.0
        %3488 = vmatpush.msra.mxu0 0.0
        %3489 = vmatpush.msra.mxu0 0.0
        %3490 = vmatpush.msra.mxu0 0.0
        %3491 = vmatpush.msra.mxu0 0.0
        %3492 = vmatpush.msra.mxu0 0.0
        %3493 = vmatpush.msra.mxu0 0.0
        %3494 = vmatpush.msra.mxu0 0.0
        %3495 = vmatpush.msra.mxu0 0.0
        %3496 = vmatpush.msra.mxu0 %v3481
        %3497 = vmatpush.msra.mxu0 %v3454
        %3498 = vmatpush.msra.mxu0 %v3453
        %3499 = vmatmul.f32.gmra.mxu0 %v3478
        %v3500 = vpop.f32.mrf.mxu0
        %v3501 = vadd.f32 0.0, %v3500
        %3502 = vdwg.mxu0
        %v3503 = vadd.f32 %v3443, %v3501
        %v3504 = vld [vmem:[#allocation2 + $0x9] sm:$0x1]
        %v3505 = vld [vmem:[#allocation2 + $0x21] sm:$0x1]
        %v3506 = vld [vmem:[#allocation2 + $0x39] sm:$0x1]
        %v3507 = vld [vmem:[#allocation2 + $0x51] sm:$0x1]
        %v3508 = vld [vmem:[#allocation2 + $0x69] sm:$0x1]
        %v3509 = vld [vmem:[#allocation2 + $0x81] sm:$0x1]
        %v3510 = vld [vmem:[#allocation2 + $0x99] sm:$0x1]
        %v3511 = vld [vmem:[#allocation2 + $0xb1] sm:$0x1]
        %s3512 = scalar_lea.vmem %s3, 216
        %v3513 = vld [vmem:[%s3512] sm:$0xff]
        %v3514 = vld [vmem:[%s3512 + $0x8] sm:$0xff]
        %v3515 = vld [vmem:[%s3512 + $0x10] sm:$0xf]
        %v3524 = vrot.slane %v3505, 7
        %v3525 = vsel %vm2992, %v3524, %v3504
        %v3526 = vrot.slane %v3506, 6
        %v3527 = vsel %vm2995, %v3526, %v3525
        %v3528 = vrot.slane %v3507, 5
        %v3529 = vsel %vm2998, %v3528, %v3527
        %v3530 = vrot.slane %v3508, 4
        %v3531 = vsel %vm3001, %v3530, %v3529
        %v3532 = vrot.slane %v3509, 3
        %v3533 = vsel %vm3004, %v3532, %v3531
        %v3534 = vrot.slane %v3510, 2
        %v3535 = vsel %vm3007, %v3534, %v3533
        %v3536 = vrot.slane %v3511, 1
        %v3537 = vsel %vm3010, %v3536, %v3535
        %v3538 = vsel %vm498, %v3537, 0
        %v3541 = vsel %vm508, %v3515, 0
        %3543 = vmatpush.msra.mxu0 0.0
        %3544 = vmatpush.msra.mxu0 0.0
        %3545 = vmatpush.msra.mxu0 0.0
        %3546 = vmatpush.msra.mxu0 0.0
        %3547 = vmatpush.msra.mxu0 0.0
        %3548 = vmatpush.msra.mxu0 0.0
        %3549 = vmatpush.msra.mxu0 0.0
        %3550 = vmatpush.msra.mxu0 0.0
        %3551 = vmatpush.msra.mxu0 0.0
        %3552 = vmatpush.msra.mxu0 0.0
        %3553 = vmatpush.msra.mxu0 0.0
        %3554 = vmatpush.msra.mxu0 0.0
        %3555 = vmatpush.msra.mxu0 0.0
        %3556 = vmatpush.msra.mxu0 %v3541
        %3557 = vmatpush.msra.mxu0 %v3514
        %3558 = vmatpush.msra.mxu0 %v3513
        %3559 = vmatmul.f32.gmra.mxu0 %v3538
        %v3560 = vpop.f32.mrf.mxu0
        %v3561 = vadd.f32 0.0, %v3560
        %3562 = vdwg.mxu0
        %v3563 = vadd.f32 %v3503, %v3561
        %v3564 = vld [vmem:[#allocation2 + $0xa] sm:$0x1]
        %v3565 = vld [vmem:[#allocation2 + $0x22] sm:$0x1]
        %v3566 = vld [vmem:[#allocation2 + $0x3a] sm:$0x1]
        %v3567 = vld [vmem:[#allocation2 + $0x52] sm:$0x1]
        %v3568 = vld [vmem:[#allocation2 + $0x6a] sm:$0x1]
        %v3569 = vld [vmem:[#allocation2 + $0x82] sm:$0x1]
        %v3570 = vld [vmem:[#allocation2 + $0x9a] sm:$0x1]
        %v3571 = vld [vmem:[#allocation2 + $0xb2] sm:$0x1]
        %s3572 = scalar_lea.vmem %s3, 240
        %v3573 = vld [vmem:[%s3572] sm:$0xff]
        %v3574 = vld [vmem:[%s3572 + $0x8] sm:$0xff]
        %v3575 = vld [vmem:[%s3572 + $0x10] sm:$0xf]
        %v3584 = vrot.slane %v3565, 7
        %v3585 = vsel %vm2992, %v3584, %v3564
        %v3586 = vrot.slane %v3566, 6
        %v3587 = vsel %vm2995, %v3586, %v3585
        %v3588 = vrot.slane %v3567, 5
        %v3589 = vsel %vm2998, %v3588, %v3587
        %v3590 = vrot.slane %v3568, 4
        %v3591 = vsel %vm3001, %v3590, %v3589
        %v3592 = vrot.slane %v3569, 3
        %v3593 = vsel %vm3004, %v3592, %v3591
        %v3594 = vrot.slane %v3570, 2
        %v3595 = vsel %vm3007, %v3594, %v3593
        %v3596 = vrot.slane %v3571, 1
        %v3597 = vsel %vm3010, %v3596, %v3595
        %v3598 = vsel %vm498, %v3597, 0
        %v3601 = vsel %vm508, %v3575, 0
        %3603 = vmatpush.msra.mxu0 0.0
        %3604 = vmatpush.msra.mxu0 0.0
        %3605 = vmatpush.msra.mxu0 0.0
        %3606 = vmatpush.msra.mxu0 0.0
        %3607 = vmatpush.msra.mxu0 0.0
        %3608 = vmatpush.msra.mxu0 0.0
        %3609 = vmatpush.msra.mxu0 0.0
        %3610 = vmatpush.msra.mxu0 0.0
        %3611 = vmatpush.msra.mxu0 0.0
        %3612 = vmatpush.msra.mxu0 0.0
        %3613 = vmatpush.msra.mxu0 0.0
        %3614 = vmatpush.msra.mxu0 0.0
        %3615 = vmatpush.msra.mxu0 0.0
        %3616 = vmatpush.msra.mxu0 %v3601
        %3617 = vmatpush.msra.mxu0 %v3574
        %3618 = vmatpush.msra.mxu0 %v3573
        %3619 = vmatmul.f32.gmra.mxu0 %v3598
        %v3620 = vpop.f32.mrf.mxu0
        %v3621 = vadd.f32 0.0, %v3620
        %3622 = vdwg.mxu0
        %v3623 = vadd.f32 %v3563, %v3621
        %v3624 = vld [vmem:[#allocation2 + $0xb] sm:$0x1]
        %v3625 = vld [vmem:[#allocation2 + $0x23] sm:$0x1]
        %v3626 = vld [vmem:[#allocation2 + $0x3b] sm:$0x1]
        %v3627 = vld [vmem:[#allocation2 + $0x53] sm:$0x1]
        %v3628 = vld [vmem:[#allocation2 + $0x6b] sm:$0x1]
        %v3629 = vld [vmem:[#allocation2 + $0x83] sm:$0x1]
        %v3630 = vld [vmem:[#allocation2 + $0x9b] sm:$0x1]
        %v3631 = vld [vmem:[#allocation2 + $0xb3] sm:$0x1]
        %s3632 = scalar_lea.vmem %s3, 264
        %v3633 = vld [vmem:[%s3632] sm:$0xff]
        %v3634 = vld [vmem:[%s3632 + $0x8] sm:$0xff]
        %v3635 = vld [vmem:[%s3632 + $0x10] sm:$0xf]
        %v3644 = vrot.slane %v3625, 7
        %v3645 = vsel %vm2992, %v3644, %v3624
        %v3646 = vrot.slane %v3626, 6
        %v3647 = vsel %vm2995, %v3646, %v3645
        %v3648 = vrot.slane %v3627, 5
        %v3649 = vsel %vm2998, %v3648, %v3647
        %v3650 = vrot.slane %v3628, 4
        %v3651 = vsel %vm3001, %v3650, %v3649
        %v3652 = vrot.slane %v3629, 3
        %v3653 = vsel %vm3004, %v3652, %v3651
        %v3654 = vrot.slane %v3630, 2
        %v3655 = vsel %vm3007, %v3654, %v3653
        %v3656 = vrot.slane %v3631, 1
        %v3657 = vsel %vm3010, %v3656, %v3655
        %v3658 = vsel %vm498, %v3657, 0
        %v3661 = vsel %vm508, %v3635, 0
        %3663 = vmatpush.msra.mxu0 0.0
        %3664 = vmatpush.msra.mxu0 0.0
        %3665 = vmatpush.msra.mxu0 0.0
        %3666 = vmatpush.msra.mxu0 0.0
        %3667 = vmatpush.msra.mxu0 0.0
        %3668 = vmatpush.msra.mxu0 0.0
        %3669 = vmatpush.msra.mxu0 0.0
        %3670 = vmatpush.msra.mxu0 0.0
        %3671 = vmatpush.msra.mxu0 0.0
        %3672 = vmatpush.msra.mxu0 0.0
        %3673 = vmatpush.msra.mxu0 0.0
        %3674 = vmatpush.msra.mxu0 0.0
        %3675 = vmatpush.msra.mxu0 0.0
        %3676 = vmatpush.msra.mxu0 %v3661
        %3677 = vmatpush.msra.mxu0 %v3634
        %3678 = vmatpush.msra.mxu0 %v3633
        %3679 = vmatmul.f32.gmra.mxu0 %v3658
        %v3680 = vpop.f32.mrf.mxu0
        %v3681 = vadd.f32 0.0, %v3680
        %3682 = vdwg.mxu0
        %v3683 = vadd.f32 %v3623, %v3681
        %v3684 = vld [vmem:[#allocation2 + $0xc] sm:$0x1]
        %v3685 = vld [vmem:[#allocation2 + $0x24] sm:$0x1]
        %v3686 = vld [vmem:[#allocation2 + $0x3c] sm:$0x1]
        %v3687 = vld [vmem:[#allocation2 + $0x54] sm:$0x1]
        %v3688 = vld [vmem:[#allocation2 + $0x6c] sm:$0x1]
        %v3689 = vld [vmem:[#allocation2 + $0x84] sm:$0x1]
        %v3690 = vld [vmem:[#allocation2 + $0x9c] sm:$0x1]
        %v3691 = vld [vmem:[#allocation2 + $0xb4] sm:$0x1]
        %s3692 = scalar_lea.vmem %s3, 288
        %v3693 = vld [vmem:[%s3692] sm:$0xff]
        %v3694 = vld [vmem:[%s3692 + $0x8] sm:$0xff]
        %v3695 = vld [vmem:[%s3692 + $0x10] sm:$0xf]
        %v3704 = vrot.slane %v3685, 7
        %v3705 = vsel %vm2992, %v3704, %v3684
        %v3706 = vrot.slane %v3686, 6
        %v3707 = vsel %vm2995, %v3706, %v3705
        %v3708 = vrot.slane %v3687, 5
        %v3709 = vsel %vm2998, %v3708, %v3707
        %v3710 = vrot.slane %v3688, 4
        %v3711 = vsel %vm3001, %v3710, %v3709
        %v3712 = vrot.slane %v3689, 3
        %v3713 = vsel %vm3004, %v3712, %v3711
        %v3714 = vrot.slane %v3690, 2
        %v3715 = vsel %vm3007, %v3714, %v3713
        %v3716 = vrot.slane %v3691, 1
        %v3717 = vsel %vm3010, %v3716, %v3715
        %v3718 = vsel %vm498, %v3717, 0
        %v3721 = vsel %vm508, %v3695, 0
        %3723 = vmatpush.msra.mxu0 0.0
        %3724 = vmatpush.msra.mxu0 0.0
        %3725 = vmatpush.msra.mxu0 0.0
        %3726 = vmatpush.msra.mxu0 0.0
        %3727 = vmatpush.msra.mxu0 0.0
        %3728 = vmatpush.msra.mxu0 0.0
        %3729 = vmatpush.msra.mxu0 0.0
        %3730 = vmatpush.msra.mxu0 0.0
        %3731 = vmatpush.msra.mxu0 0.0
        %3732 = vmatpush.msra.mxu0 0.0
        %3733 = vmatpush.msra.mxu0 0.0
        %3734 = vmatpush.msra.mxu0 0.0
        %3735 = vmatpush.msra.mxu0 0.0
        %3736 = vmatpush.msra.mxu0 %v3721
        %3737 = vmatpush.msra.mxu0 %v3694
        %3738 = vmatpush.msra.mxu0 %v3693
        %3739 = vmatmul.f32.gmra.mxu0 %v3718
        %v3740 = vpop.f32.mrf.mxu0
        %v3741 = vadd.f32 0.0, %v3740
        %3742 = vdwg.mxu0
        %v3743 = vadd.f32 %v3683, %v3741
        %v3744 = vld [vmem:[#allocation2 + $0xd] sm:$0x1]
        %v3745 = vld [vmem:[#allocation2 + $0x25] sm:$0x1]
        %v3746 = vld [vmem:[#allocation2 + $0x3d] sm:$0x1]
        %v3747 = vld [vmem:[#allocation2 + $0x55] sm:$0x1]
        %v3748 = vld [vmem:[#allocation2 + $0x6d] sm:$0x1]
        %v3749 = vld [vmem:[#allocation2 + $0x85] sm:$0x1]
        %v3750 = vld [vmem:[#allocation2 + $0x9d] sm:$0x1]
        %v3751 = vld [vmem:[#allocation2 + $0xb5] sm:$0x1]
        %s3752 = scalar_lea.vmem %s3, 312
        %v3753 = vld [vmem:[%s3752] sm:$0xff]
        %v3754 = vld [vmem:[%s3752 + $0x8] sm:$0xff]
        %v3755 = vld [vmem:[%s3752 + $0x10] sm:$0xf]
        %v3764 = vrot.slane %v3745, 7
        %v3765 = vsel %vm2992, %v3764, %v3744
        %v3766 = vrot.slane %v3746, 6
        %v3767 = vsel %vm2995, %v3766, %v3765
        %v3768 = vrot.slane %v3747, 5
        %v3769 = vsel %vm2998, %v3768, %v3767
        %v3770 = vrot.slane %v3748, 4
        %v3771 = vsel %vm3001, %v3770, %v3769
        %v3772 = vrot.slane %v3749, 3
        %v3773 = vsel %vm3004, %v3772, %v3771
        %v3774 = vrot.slane %v3750, 2
        %v3775 = vsel %vm3007, %v3774, %v3773
        %v3776 = vrot.slane %v3751, 1
        %v3777 = vsel %vm3010, %v3776, %v3775
        %v3778 = vsel %vm498, %v3777, 0
        %v3781 = vsel %vm508, %v3755, 0
        %3783 = vmatpush.msra.mxu0 0.0
        %3784 = vmatpush.msra.mxu0 0.0
        %3785 = vmatpush.msra.mxu0 0.0
        %3786 = vmatpush.msra.mxu0 0.0
        %3787 = vmatpush.msra.mxu0 0.0
        %3788 = vmatpush.msra.mxu0 0.0
        %3789 = vmatpush.msra.mxu0 0.0
        %3790 = vmatpush.msra.mxu0 0.0
        %3791 = vmatpush.msra.mxu0 0.0
        %3792 = vmatpush.msra.mxu0 0.0
        %3793 = vmatpush.msra.mxu0 0.0
        %3794 = vmatpush.msra.mxu0 0.0
        %3795 = vmatpush.msra.mxu0 0.0
        %3796 = vmatpush.msra.mxu0 %v3781
        %3797 = vmatpush.msra.mxu0 %v3754
        %3798 = vmatpush.msra.mxu0 %v3753
        %3799 = vmatmul.f32.gmra.mxu0 %v3778
        %v3800 = vpop.f32.mrf.mxu0
        %v3801 = vadd.f32 0.0, %v3800
        %3802 = vdwg.mxu0
        %v3803 = vadd.f32 %v3743, %v3801
        %v3804 = vld [vmem:[#allocation2 + $0xe] sm:$0x1]
        %v3805 = vld [vmem:[#allocation2 + $0x26] sm:$0x1]
        %v3806 = vld [vmem:[#allocation2 + $0x3e] sm:$0x1]
        %v3807 = vld [vmem:[#allocation2 + $0x56] sm:$0x1]
        %v3808 = vld [vmem:[#allocation2 + $0x6e] sm:$0x1]
        %v3809 = vld [vmem:[#allocation2 + $0x86] sm:$0x1]
        %v3810 = vld [vmem:[#allocation2 + $0x9e] sm:$0x1]
        %v3811 = vld [vmem:[#allocation2 + $0xb6] sm:$0x1]
        %s3812 = scalar_lea.vmem %s3, 336
        %v3813 = vld [vmem:[%s3812] sm:$0xff]
        %v3814 = vld [vmem:[%s3812 + $0x8] sm:$0xff]
        %v3815 = vld [vmem:[%s3812 + $0x10] sm:$0xf]
        %v3824 = vrot.slane %v3805, 7
        %v3825 = vsel %vm2992, %v3824, %v3804
        %v3826 = vrot.slane %v3806, 6
        %v3827 = vsel %vm2995, %v3826, %v3825
        %v3828 = vrot.slane %v3807, 5
        %v3829 = vsel %vm2998, %v3828, %v3827
        %v3830 = vrot.slane %v3808, 4
        %v3831 = vsel %vm3001, %v3830, %v3829
        %v3832 = vrot.slane %v3809, 3
        %v3833 = vsel %vm3004, %v3832, %v3831
        %v3834 = vrot.slane %v3810, 2
        %v3835 = vsel %vm3007, %v3834, %v3833
        %v3836 = vrot.slane %v3811, 1
        %v3837 = vsel %vm3010, %v3836, %v3835
        %v3838 = vsel %vm498, %v3837, 0
        %v3841 = vsel %vm508, %v3815, 0
        %3843 = vmatpush.msra.mxu0 0.0
        %3844 = vmatpush.msra.mxu0 0.0
        %3845 = vmatpush.msra.mxu0 0.0
        %3846 = vmatpush.msra.mxu0 0.0
        %3847 = vmatpush.msra.mxu0 0.0
        %3848 = vmatpush.msra.mxu0 0.0
        %3849 = vmatpush.msra.mxu0 0.0
        %3850 = vmatpush.msra.mxu0 0.0
        %3851 = vmatpush.msra.mxu0 0.0
        %3852 = vmatpush.msra.mxu0 0.0
        %3853 = vmatpush.msra.mxu0 0.0
        %3854 = vmatpush.msra.mxu0 0.0
        %3855 = vmatpush.msra.mxu0 0.0
        %3856 = vmatpush.msra.mxu0 %v3841
        %3857 = vmatpush.msra.mxu0 %v3814
        %3858 = vmatpush.msra.mxu0 %v3813
        %3859 = vmatmul.f32.gmra.mxu0 %v3838
        %v3860 = vpop.f32.mrf.mxu0
        %v3861 = vadd.f32 0.0, %v3860
        %3862 = vdwg.mxu0
        %v3863 = vadd.f32 %v3803, %v3861
        %v3864 = vld [vmem:[#allocation2 + $0xf] sm:$0x1]
        %v3865 = vld [vmem:[#allocation2 + $0x27] sm:$0x1]
        %v3866 = vld [vmem:[#allocation2 + $0x3f] sm:$0x1]
        %v3867 = vld [vmem:[#allocation2 + $0x57] sm:$0x1]
        %v3868 = vld [vmem:[#allocation2 + $0x6f] sm:$0x1]
        %v3869 = vld [vmem:[#allocation2 + $0x87] sm:$0x1]
        %v3870 = vld [vmem:[#allocation2 + $0x9f] sm:$0x1]
        %v3871 = vld [vmem:[#allocation2 + $0xb7] sm:$0x1]
        %s3872 = scalar_lea.vmem %s3, 360
        %v3873 = vld [vmem:[%s3872] sm:$0xff]
        %v3874 = vld [vmem:[%s3872 + $0x8] sm:$0xff]
        %v3875 = vld [vmem:[%s3872 + $0x10] sm:$0xf]
        %v3884 = vrot.slane %v3865, 7
        %v3885 = vsel %vm2992, %v3884, %v3864
        %v3886 = vrot.slane %v3866, 6
        %v3887 = vsel %vm2995, %v3886, %v3885
        %v3888 = vrot.slane %v3867, 5
        %v3889 = vsel %vm2998, %v3888, %v3887
        %v3890 = vrot.slane %v3868, 4
        %v3891 = vsel %vm3001, %v3890, %v3889
        %v3892 = vrot.slane %v3869, 3
        %v3893 = vsel %vm3004, %v3892, %v3891
        %v3894 = vrot.slane %v3870, 2
        %v3895 = vsel %vm3007, %v3894, %v3893
        %v3896 = vrot.slane %v3871, 1
        %v3897 = vsel %vm3010, %v3896, %v3895
        %v3898 = vsel %vm498, %v3897, 0
        %v3901 = vsel %vm508, %v3875, 0
        %3903 = vmatpush.msra.mxu0 0.0
        %3904 = vmatpush.msra.mxu0 0.0
        %3905 = vmatpush.msra.mxu0 0.0
        %3906 = vmatpush.msra.mxu0 0.0
        %3907 = vmatpush.msra.mxu0 0.0
        %3908 = vmatpush.msra.mxu0 0.0
        %3909 = vmatpush.msra.mxu0 0.0
        %3910 = vmatpush.msra.mxu0 0.0
        %3911 = vmatpush.msra.mxu0 0.0
        %3912 = vmatpush.msra.mxu0 0.0
        %3913 = vmatpush.msra.mxu0 0.0
        %3914 = vmatpush.msra.mxu0 0.0
        %3915 = vmatpush.msra.mxu0 0.0
        %3916 = vmatpush.msra.mxu0 %v3901
        %3917 = vmatpush.msra.mxu0 %v3874
        %3918 = vmatpush.msra.mxu0 %v3873
        %3919 = vmatmul.f32.gmra.mxu0 %v3898
        %v3920 = vpop.f32.mrf.mxu0
        %v3921 = vadd.f32 0.0, %v3920
        %3922 = vdwg.mxu0
        %v3923 = vadd.f32 %v3863, %v3921
        %v3924 = vld [vmem:[#allocation2 + $0x10] sm:$0x1]
        %v3925 = vld [vmem:[#allocation2 + $0x28] sm:$0x1]
        %v3926 = vld [vmem:[#allocation2 + $0x40] sm:$0x1]
        %v3927 = vld [vmem:[#allocation2 + $0x58] sm:$0x1]
        %v3928 = vld [vmem:[#allocation2 + $0x70] sm:$0x1]
        %v3929 = vld [vmem:[#allocation2 + $0x88] sm:$0x1]
        %v3930 = vld [vmem:[#allocation2 + $0xa0] sm:$0x1]
        %v3931 = vld [vmem:[#allocation2 + $0xb8] sm:$0x1]
        %s3932 = scalar_lea.vmem %s3, 384
        %v3933 = vld [vmem:[%s3932] sm:$0xff]
        %v3934 = vld [vmem:[%s3932 + $0x8] sm:$0xff]
        %v3935 = vld [vmem:[%s3932 + $0x10] sm:$0xf]
        %v3944 = vrot.slane %v3925, 7
        %v3945 = vsel %vm2992, %v3944, %v3924
        %v3946 = vrot.slane %v3926, 6
        %v3947 = vsel %vm2995, %v3946, %v3945
        %v3948 = vrot.slane %v3927, 5
        %v3949 = vsel %vm2998, %v3948, %v3947
        %v3950 = vrot.slane %v3928, 4
        %v3951 = vsel %vm3001, %v3950, %v3949
        %v3952 = vrot.slane %v3929, 3
        %v3953 = vsel %vm3004, %v3952, %v3951
        %v3954 = vrot.slane %v3930, 2
        %v3955 = vsel %vm3007, %v3954, %v3953
        %v3956 = vrot.slane %v3931, 1
        %v3957 = vsel %vm3010, %v3956, %v3955
        %v3958 = vsel %vm498, %v3957, 0
        %v3961 = vsel %vm508, %v3935, 0
        %3963 = vmatpush.msra.mxu0 0.0
        %3964 = vmatpush.msra.mxu0 0.0
        %3965 = vmatpush.msra.mxu0 0.0
        %3966 = vmatpush.msra.mxu0 0.0
        %3967 = vmatpush.msra.mxu0 0.0
        %3968 = vmatpush.msra.mxu0 0.0
        %3969 = vmatpush.msra.mxu0 0.0
        %3970 = vmatpush.msra.mxu0 0.0
        %3971 = vmatpush.msra.mxu0 0.0
        %3972 = vmatpush.msra.mxu0 0.0
        %3973 = vmatpush.msra.mxu0 0.0
        %3974 = vmatpush.msra.mxu0 0.0
        %3975 = vmatpush.msra.mxu0 0.0
        %3976 = vmatpush.msra.mxu0 %v3961
        %3977 = vmatpush.msra.mxu0 %v3934
        %3978 = vmatpush.msra.mxu0 %v3933
        %3979 = vmatmul.f32.gmra.mxu0 %v3958
        %v3980 = vpop.f32.mrf.mxu0
        %v3981 = vadd.f32 0.0, %v3980
        %3982 = vdwg.mxu0
        %v3983 = vadd.f32 %v3923, %v3981
        %v3984 = vld [vmem:[#allocation2 + $0x11] sm:$0x1]
        %v3985 = vld [vmem:[#allocation2 + $0x29] sm:$0x1]
        %v3986 = vld [vmem:[#allocation2 + $0x41] sm:$0x1]
        %v3987 = vld [vmem:[#allocation2 + $0x59] sm:$0x1]
        %v3988 = vld [vmem:[#allocation2 + $0x71] sm:$0x1]
        %v3989 = vld [vmem:[#allocation2 + $0x89] sm:$0x1]
        %v3990 = vld [vmem:[#allocation2 + $0xa1] sm:$0x1]
        %v3991 = vld [vmem:[#allocation2 + $0xb9] sm:$0x1]
        %s3992 = scalar_lea.vmem %s3, 408
        %v3993 = vld [vmem:[%s3992] sm:$0xff]
        %v3994 = vld [vmem:[%s3992 + $0x8] sm:$0xff]
        %v3995 = vld [vmem:[%s3992 + $0x10] sm:$0xf]
        %v4004 = vrot.slane %v3985, 7
        %v4005 = vsel %vm2992, %v4004, %v3984
        %v4006 = vrot.slane %v3986, 6
        %v4007 = vsel %vm2995, %v4006, %v4005
        %v4008 = vrot.slane %v3987, 5
        %v4009 = vsel %vm2998, %v4008, %v4007
        %v4010 = vrot.slane %v3988, 4
        %v4011 = vsel %vm3001, %v4010, %v4009
        %v4012 = vrot.slane %v3989, 3
        %v4013 = vsel %vm3004, %v4012, %v4011
        %v4014 = vrot.slane %v3990, 2
        %v4015 = vsel %vm3007, %v4014, %v4013
        %v4016 = vrot.slane %v3991, 1
        %v4017 = vsel %vm3010, %v4016, %v4015
        %v4018 = vsel %vm498, %v4017, 0
        %v4021 = vsel %vm508, %v3995, 0
        %4023 = vmatpush.msra.mxu0 0.0
        %4024 = vmatpush.msra.mxu0 0.0
        %4025 = vmatpush.msra.mxu0 0.0
        %4026 = vmatpush.msra.mxu0 0.0
        %4027 = vmatpush.msra.mxu0 0.0
        %4028 = vmatpush.msra.mxu0 0.0
        %4029 = vmatpush.msra.mxu0 0.0
        %4030 = vmatpush.msra.mxu0 0.0
        %4031 = vmatpush.msra.mxu0 0.0
        %4032 = vmatpush.msra.mxu0 0.0
        %4033 = vmatpush.msra.mxu0 0.0
        %4034 = vmatpush.msra.mxu0 0.0
        %4035 = vmatpush.msra.mxu0 0.0
        %4036 = vmatpush.msra.mxu0 %v4021
        %4037 = vmatpush.msra.mxu0 %v3994
        %4038 = vmatpush.msra.mxu0 %v3993
        %4039 = vmatmul.f32.gmra.mxu0 %v4018
        %v4040 = vpop.f32.mrf.mxu0
        %v4041 = vadd.f32 0.0, %v4040
        %4042 = vdwg.mxu0
        %v4043 = vadd.f32 %v3983, %v4041
        %v4044 = vld [vmem:[#allocation2 + $0x12] sm:$0x1]
        %v4045 = vld [vmem:[#allocation2 + $0x2a] sm:$0x1]
        %v4046 = vld [vmem:[#allocation2 + $0x42] sm:$0x1]
        %v4047 = vld [vmem:[#allocation2 + $0x5a] sm:$0x1]
        %v4048 = vld [vmem:[#allocation2 + $0x72] sm:$0x1]
        %v4049 = vld [vmem:[#allocation2 + $0x8a] sm:$0x1]
        %v4050 = vld [vmem:[#allocation2 + $0xa2] sm:$0x1]
        %v4051 = vld [vmem:[#allocation2 + $0xba] sm:$0x1]
        %s4052 = scalar_lea.vmem %s3, 432
        %v4053 = vld [vmem:[%s4052] sm:$0xff]
        %v4054 = vld [vmem:[%s4052 + $0x8] sm:$0xff]
        %v4055 = vld [vmem:[%s4052 + $0x10] sm:$0xf]
        %v4064 = vrot.slane %v4045, 7
        %v4065 = vsel %vm2992, %v4064, %v4044
        %v4066 = vrot.slane %v4046, 6
        %v4067 = vsel %vm2995, %v4066, %v4065
        %v4068 = vrot.slane %v4047, 5
        %v4069 = vsel %vm2998, %v4068, %v4067
        %v4070 = vrot.slane %v4048, 4
        %v4071 = vsel %vm3001, %v4070, %v4069
        %v4072 = vrot.slane %v4049, 3
        %v4073 = vsel %vm3004, %v4072, %v4071
        %v4074 = vrot.slane %v4050, 2
        %v4075 = vsel %vm3007, %v4074, %v4073
        %v4076 = vrot.slane %v4051, 1
        %v4077 = vsel %vm3010, %v4076, %v4075
        %v4078 = vsel %vm498, %v4077, 0
        %v4081 = vsel %vm508, %v4055, 0
        %4083 = vmatpush.msra.mxu0 0.0
        %4084 = vmatpush.msra.mxu0 0.0
        %4085 = vmatpush.msra.mxu0 0.0
        %4086 = vmatpush.msra.mxu0 0.0
        %4087 = vmatpush.msra.mxu0 0.0
        %4088 = vmatpush.msra.mxu0 0.0
        %4089 = vmatpush.msra.mxu0 0.0
        %4090 = vmatpush.msra.mxu0 0.0
        %4091 = vmatpush.msra.mxu0 0.0
        %4092 = vmatpush.msra.mxu0 0.0
        %4093 = vmatpush.msra.mxu0 0.0
        %4094 = vmatpush.msra.mxu0 0.0
        %4095 = vmatpush.msra.mxu0 0.0
        %4096 = vmatpush.msra.mxu0 %v4081
        %4097 = vmatpush.msra.mxu0 %v4054
        %4098 = vmatpush.msra.mxu0 %v4053
        %4099 = vmatmul.f32.gmra.mxu0 %v4078
        %v4100 = vpop.f32.mrf.mxu0
        %v4101 = vadd.f32 0.0, %v4100
        %4102 = vdwg.mxu0
        %v4103 = vadd.f32 %v4043, %v4101
        %v4104 = vld [vmem:[#allocation2 + $0x13] sm:$0x1]
        %v4105 = vld [vmem:[#allocation2 + $0x2b] sm:$0x1]
        %v4106 = vld [vmem:[#allocation2 + $0x43] sm:$0x1]
        %v4107 = vld [vmem:[#allocation2 + $0x5b] sm:$0x1]
        %v4108 = vld [vmem:[#allocation2 + $0x73] sm:$0x1]
        %v4109 = vld [vmem:[#allocation2 + $0x8b] sm:$0x1]
        %v4110 = vld [vmem:[#allocation2 + $0xa3] sm:$0x1]
        %v4111 = vld [vmem:[#allocation2 + $0xbb] sm:$0x1]
        %s4112 = scalar_lea.vmem %s3, 456
        %v4113 = vld [vmem:[%s4112] sm:$0xff]
        %v4114 = vld [vmem:[%s4112 + $0x8] sm:$0xff]
        %v4115 = vld [vmem:[%s4112 + $0x10] sm:$0xf]
        %v4124 = vrot.slane %v4105, 7
        %v4125 = vsel %vm2992, %v4124, %v4104
        %v4126 = vrot.slane %v4106, 6
        %v4127 = vsel %vm2995, %v4126, %v4125
        %v4128 = vrot.slane %v4107, 5
        %v4129 = vsel %vm2998, %v4128, %v4127
        %v4130 = vrot.slane %v4108, 4
        %v4131 = vsel %vm3001, %v4130, %v4129
        %v4132 = vrot.slane %v4109, 3
        %v4133 = vsel %vm3004, %v4132, %v4131
        %v4134 = vrot.slane %v4110, 2
        %v4135 = vsel %vm3007, %v4134, %v4133
        %v4136 = vrot.slane %v4111, 1
        %v4137 = vsel %vm3010, %v4136, %v4135
        %v4138 = vsel %vm498, %v4137, 0
        %v4141 = vsel %vm508, %v4115, 0
        %4143 = vmatpush.msra.mxu0 0.0
        %4144 = vmatpush.msra.mxu0 0.0
        %4145 = vmatpush.msra.mxu0 0.0
        %4146 = vmatpush.msra.mxu0 0.0
        %4147 = vmatpush.msra.mxu0 0.0
        %4148 = vmatpush.msra.mxu0 0.0
        %4149 = vmatpush.msra.mxu0 0.0
        %4150 = vmatpush.msra.mxu0 0.0
        %4151 = vmatpush.msra.mxu0 0.0
        %4152 = vmatpush.msra.mxu0 0.0
        %4153 = vmatpush.msra.mxu0 0.0
        %4154 = vmatpush.msra.mxu0 0.0
        %4155 = vmatpush.msra.mxu0 0.0
        %4156 = vmatpush.msra.mxu0 %v4141
        %4157 = vmatpush.msra.mxu0 %v4114
        %4158 = vmatpush.msra.mxu0 %v4113
        %4159 = vmatmul.f32.gmra.mxu0 %v4138
        %v4160 = vpop.f32.mrf.mxu0
        %v4161 = vadd.f32 0.0, %v4160
        %4162 = vdwg.mxu0
        %v4163 = vadd.f32 %v4103, %v4161
        %vm4164 = vcmask 80896
        %4165 = vst.msk [vmem:[%s188] sm:$0xff] %vm4164, %v4163
        %s4166 = sand.u32 %s115, 1
        %s4167 = scalar_lea.sflag [#allocation4], %s4166
        %s4168 = sand.u32 %s115, 1
        %s4169 = smul.addr %s4168, 8
        %s4170 = scalar_lea.vmem [#allocation3], %s4169
        // Predicated region
        $region37: #{tpu_custom_call.1} parent=35 // pred_check
          %p4171 = pneg %p125
        $region38: #{tpu_custom_call.1} parent=35 // pred_check_branch
          %4173 = sbr.rel (%p4171) target = $region40
        $region39: #{tpu_custom_call.1} parent=35 // pred_region
          %4175 = vsyncadd %s4167, 0
          %s4176 = smul.addr %s18, 8
          %s4177 = scalar_lea.hbm %s4, %s4176
          %s4179 = sshll.u32 %s4170, 4
          %s4180 = int_to_ptr.vmem [resolvable:$true] %s4179
          %s4181 = sshll.u32 %s4177, 4
          %s4182 = int_to_ptr.hbm [resolvable:$true] %s4181
          %4184 = dma.vmem_to_hbm [thread:$0]  %s4180, 128, %s4182, %s4167
        $region40: #{tpu_custom_call.1} parent=35 // pred_fallthru
          _
      $region36: #{tpu_custom_call.1} parent=5 // pred_fallthru
        _
      %p4185 = scmp.le.s32.totalorder 2, %s13
      // Predicated region
      $region41: #{tpu_custom_call.1} parent=5 // pred_check
        %p4186 = pneg %p4185
      $region42: #{tpu_custom_call.1} parent=5 // pred_check_branch
        %4188 = sbr.rel (%p4186) target = $region44
      $region43: #{tpu_custom_call.1} parent=5 // pred_region
        %s4189 = ssub.s32 %s13, 2
        // Predicated region
        $region45: #{tpu_custom_call.1} parent=43 // pred_check
          %p4190 = pneg %p131
        $region46: #{tpu_custom_call.1} parent=43 // pred_check_branch
          %4192 = sbr.rel (%p4190) target = $region48
        $region47: #{tpu_custom_call.1} parent=43 // pred_region
          %s4193 = sand.u32 %s116, 1
          %s4194 = scalar_lea.sflag [#allocation4], %s4193
          %s4195 = sand.u32 %s116, 1
          %s4196 = smul.addr %s4195, 8
          %s4197 = scalar_lea.vmem [#allocation3], %s4196
          %4199 = dma.done %s4194, 128
        $region48: #{tpu_custom_call.1} parent=43 // pred_fallthru
          _
      $region44: #{tpu_custom_call.1} parent=5 // pred_fallthru
        _
    $region6: #{tpu_custom_call.1} parent=1 // loop_footer
      %s17 = sadd.s32 1, %s13
    $region7: #{tpu_custom_call.1} parent=1 // loop_footer_branch
      %12 = sbr.rel target = $region3
    $region8: #{tpu_custom_call.1} parent=1 // loop_exit
      _
    %4200 = vsyncpa [#allocation4], 1
    %s4201 = scalar_lea.sflag [#allocation4], 1
    %4202 = vsyncpa %s4201, 1

</llo_original>
